<compile_context>
chip_gen: v5e
topology: v5e:2x2
jax: 0.10.0
libtpu: 0.0.40
codegen_flags: <defaults>
</compile_context>

<pallas_src>
import functools

import numpy as np
import jax
import jax.numpy as jnp
from jax.experimental import pallas as pl
from jax.experimental.pallas import tpu as pltpu

H, W = 28, 28
KH, KW = 5, 5
OH, OW = H - KH + 1, W - KW + 1      # 24, 24
PH, PW = OH // 2, OW // 2            # 12, 12
NC = 3                               # conv out channels
NFEAT = NC * PH * PW                 # 432
NOUT = 10
NOUT_PAD = 128                       # lane-dense padded logit width
NPIX = H * W                         # 784
CPAD = 512                           # lane-aligned per-corner column group (>= 432)
CTOT = 4 * CPAD                      # 2048 conv-output columns (4 pool corners)
BLOCK_B = 512                        # images per grid step (multiple of 8)


def cnn_kernel(x_ref, m_ref, bvec_ref, wfc_ref, bfc_ref, out_ref):
    f32 = jnp.float32

    # conv2d(1->3, 5x5, valid) for all channels / all 4 pool corners in one
    # bf16 MXU pass with f32 accumulation.  Padded columns of M are 0.
    conv = jnp.dot(x_ref[...], m_ref[...], preferred_element_type=f32)  # (BB, 2048) f32

    # 2x2 stride-2 max pool == max over the 4 corner groups (128-aligned lane
    # slices, pure VPU).  Per-channel bias is constant across corners, so add
    # it after the max (4x fewer VALU adds), then relu.  Padded lanes stay 0.
    pooled = jnp.maximum(jnp.maximum(conv[:, 0 * CPAD:1 * CPAD],
                                     conv[:, 1 * CPAD:2 * CPAD]),
                         jnp.maximum(conv[:, 2 * CPAD:3 * CPAD],
                                     conv[:, 3 * CPAD:4 * CPAD]))        # (BB, 512)
    feats = jnp.maximum(pooled + bvec_ref[...], 0.0)

    # fc(432->10) padded to 128 lanes (zero-padded rows/cols contribute 0),
    # relu, then log_softmax with padded lanes masked to -inf.
    y = jnp.dot(feats.astype(jnp.bfloat16), wfc_ref[...],
                preferred_element_type=f32) + bfc_ref[...]               # (BB, 128)
    y = jnp.maximum(y, 0.0)
    lane = jax.lax.broadcasted_iota(jnp.int32, y.shape, 1)
    y = jnp.where(lane < NOUT, y, -jnp.inf)
    m = jnp.max(y, axis=-1, keepdims=True)
    lse = jnp.log(jnp.sum(jnp.exp(y - m), axis=-1, keepdims=True)) + m
    out_ref[...] = jnp.where(lane < NOUT, y - lse, 0.0)


def _build_conv_matrix(wconv, bconv):
    """Fold conv(1->3, 5x5, valid) + the pool-corner layout into one matrix.

    Pure numpy (host side, run once).  Returns M (784, 2048) f32 and the
    per-corner bias row bvec (1, 512) f32 such that
      (x_flat @ M)[:, cr*512 + oc*144 + ph*12 + pw]
          == conv2d_nobias(x)[oc, 2*ph + cr//2, 2*pw + cr%2]
    and all padded columns (feature index >= 432 inside a corner group) are 0.
    """
    wconv = np.asarray(wconv, np.float32).reshape(NC, KH, KW)
    bconv = np.asarray(bconv, np.float32)
    oc, ph, pw, cr, kh, kw = np.meshgrid(
        np.arange(NC), np.arange(PH), np.arange(PW), np.arange(4),
        np.arange(KH), np.arange(KW), indexing="ij")
    oh = 2 * ph + cr // 2
    ow = 2 * pw + cr % 2
    rows = ((oh + kh) * W + (ow + kw)).reshape(-1)                  # input pixel h*28+w
    cols = (cr * CPAD + oc * (PH * PW) + ph * PW + pw).reshape(-1)  # output column
    vals = wconv[oc.reshape(-1), kh.reshape(-1), kw.reshape(-1)]

    M = np.zeros((NPIX, CTOT), np.float32)
    M[rows, cols] = vals        # (row, col) pairs are unique

    feat = np.arange(CPAD)
    oc_col = np.minimum(feat // (PH * PW), NC - 1)
    bvec = np.where(feat < NFEAT, bconv[oc_col], 0.0).astype(np.float32).reshape(1, CPAD)
    return M, bvec


def prepare_params(wconv, bconv, wfc, bfc):
    """Build the folded / padded parameter arrays ONCE (cache and reuse)."""
    M, bvec = _build_conv_matrix(wconv, bconv)
    wfc_pad = np.zeros((CPAD, NOUT_PAD), np.float32)
    wfc_pad[:NFEAT, :NOUT] = np.asarray(wfc, np.float32).T
    bfc_pad = np.zeros((1, NOUT_PAD), np.float32)
    bfc_pad[0, :NOUT] = np.asarray(bfc, np.float32)
    return (jnp.asarray(M, jnp.bfloat16),          # (784, 2048)  bf16 MXU weights
            jnp.asarray(bvec, jnp.float32),        # (1, 512)
            jnp.asarray(wfc_pad, jnp.bfloat16),    # (512, 128)
            jnp.asarray(bfc_pad, jnp.float32))     # (1, 128)


def _cdiv(a, b):
    return -(-a // b)


def _rup(a, b):
    return _cdiv(a, b) * b


@functools.partial(jax.jit, static_argnames=("block_b",))
def our_cnn_forward(x, params, block_b=BLOCK_B):
    """x: (B, 1, 28, 28) f32 NCHW; params from prepare_params.  Returns (B, 10) f32."""
    M, bvec, wfc_pad, bfc_pad = params
    B = x.shape[0]
    x_flat = x.reshape(B, NPIX).astype(jnp.bfloat16)

    # Batch blocking: bb images per grid step.  Prefer >= 2 blocks so the
    # "parallel" grid axis can be sharded across both v7x TensorCores.
    b8 = _rup(B, 8)
    nblocks = 1 if b8 <= 8 else max(2, _cdiv(b8, block_b))
    bb = _rup(_cdiv(b8, nblocks), 8)
    b_pad = bb * nblocks
    if b_pad != B:
        x_flat = jnp.pad(x_flat, ((0, b_pad - B), (0, 0)))

    const = lambda b: (0, 0)
    grid_spec = pltpu.PrefetchScalarGridSpec(
        num_scalar_prefetch=0,
        grid=(nblocks,),
        in_specs=[
            pl.BlockSpec((bb, NPIX), lambda b: (b, 0)),       # images (BB, 784) bf16
            pl.BlockSpec((NPIX, CTOT), const),                # folded conv weights bf16
            pl.BlockSpec((1, CPAD), const),                   # per-corner conv bias
            pl.BlockSpec((CPAD, NOUT_PAD), const),            # fc weight (zero-padded)
            pl.BlockSpec((1, NOUT_PAD), const),               # fc bias (zero-padded)
        ],
        out_specs=pl.BlockSpec((bb, NOUT_PAD), lambda b: (b, 0)),
    )
    out = pl.pallas_call(
        cnn_kernel,
        out_shape=jax.ShapeDtypeStruct((b_pad, NOUT_PAD), jnp.float32),
        grid_spec=grid_spec,
        compiler_params=pltpu.CompilerParams(
            dimension_semantics=("parallel",),
            # ~15 MiB actually used at bb=512 with bf16 weights; 48 MiB is
            # comfortable on v5e/v6e (128 MiB physical) and within the safe
            # ceiling for v7x (64 MiB physical).
            vmem_limit_bytes=48 * 1024 * 1024),
    )(x_flat, M, bvec, wfc_pad, bfc_pad)
    return out[:B, :NOUT]


def ref_forward(x, wconv, bconv, wfc, bfc):
    """Plain-JAX f32 reference matching the PyTorch forward."""
    B = x.shape[0]
    conv = jax.lax.conv_general_dilated(
        x, wconv, window_strides=(1, 1), padding="VALID",
        dimension_numbers=("NCHW", "OIHW", "NCHW"))
    conv = conv + bconv[None, :, None, None]
    p = conv.reshape(B, NC, PH, 2, PW, 2).max(axis=(3, 5))
    p = jax.nn.relu(p)
    f = p.reshape(B, NFEAT)
    y = jax.nn.relu(f @ wfc.T + bfc)
    return jax.nn.log_softmax(y, axis=-1)


if __name__ == "__main__":
    key = jax.random.PRNGKey(0)
    kx, kw1, kb1, kw2, kb2 = jax.random.split(key, 5)

    B = 2
    x = jax.random.normal(kx, (B, 1, H, W), dtype=jnp.float32)

    # Deterministic parameter init (PyTorch-style uniform fan-in bounds).
    b_conv = 1.0 / np.sqrt(KH * KW * 1)
    wconv = jax.random.uniform(kw1, (NC, 1, KH, KW), minval=-b_conv, maxval=b_conv,
                               dtype=jnp.float32)
    bconv = jax.random.uniform(kb1, (NC,), minval=-b_conv, maxval=b_conv,
                               dtype=jnp.float32)
    b_fc = 1.0 / np.sqrt(NFEAT)
    wfc = jax.random.uniform(kw2, (NOUT, NFEAT), minval=-b_fc, maxval=b_fc,
                             dtype=jnp.float32)
    bfc = jax.random.uniform(kb2, (NOUT,), minval=-b_fc, maxval=b_fc,
                             dtype=jnp.float32)

    params = prepare_params(wconv, bconv, wfc, bfc)   # built once, reused per call

    out = jax.block_until_ready(our_cnn_forward(x, params))
    ref = jax.block_until_ready(ref_forward(x, wconv, bconv, wfc, bfc))

    assert out.shape == (B, NOUT)
    # bf16 MXU inputs (f32 accumulation): tolerance relaxed vs the f32 kernel.
    assert jnp.allclose(out, ref, atol=2e-2, rtol=2e-2), (out, ref)
    print("KERNEL_OK")
</pallas_src>

<mosaic_0001>
module attributes {stable_mosaic.version = 11 : i64} {
  func.func @cnn_kernel(%arg0: i32, %arg1: memref<8x784xbf16, #tpu.memory_space<vmem>>, %arg2: memref<784x2048xbf16, #tpu.memory_space<vmem>>, %arg3: memref<1x512xf32, #tpu.memory_space<vmem>>, %arg4: memref<512x128xbf16, #tpu.memory_space<vmem>>, %arg5: memref<1x128xf32, #tpu.memory_space<vmem>>, %arg6: memref<8x128xf32, #tpu.memory_space<vmem>>) attributes {dimension_semantics = [#tpu.dimension_semantics<parallel>], iteration_bounds = array<i64: 1>, scalar_prefetch = 0 : i64, scratch_operands = 0 : i64, tpu.core_type = #tpu.core_type<tc>, window_params = [{transform_indices = @transform_0, window_bounds = array<i64: 8, 784>}, {pipeline_mode = #tpu.pipeline_mode<synchronous>, transform_indices = @transform_1, window_bounds = array<i64: 784, 2048>}, {pipeline_mode = #tpu.pipeline_mode<synchronous>, transform_indices = @transform_2, window_bounds = array<i64: 1, 512>}, {pipeline_mode = #tpu.pipeline_mode<synchronous>, transform_indices = @transform_3, window_bounds = array<i64: 512, 128>}, {pipeline_mode = #tpu.pipeline_mode<synchronous>, transform_indices = @transform_4, window_bounds = array<i64: 1, 128>}, {transform_indices = @transform_5, window_bounds = array<i64: 8, 128>}]} {
    %c0 = arith.constant 0 : index
    %c0_0 = arith.constant 0 : index
    %0 = vector.load %arg1[%c0, %c0_0] : memref<8x784xbf16, #tpu.memory_space<vmem>>, vector<8x784xbf16>
    %c0_1 = arith.constant 0 : index
    %c0_2 = arith.constant 0 : index
    %1 = vector.load %arg2[%c0_1, %c0_2] : memref<784x2048xbf16, #tpu.memory_space<vmem>>, vector<784x2048xbf16>
    %cst = arith.constant dense<0.000000e+00> : vector<8x2048xf32>
    %2 = tpu.matmul %0, %1, %cst {dimension_numbers = #tpu.dot_dimension_numbers<[1], [0], [0], [1], [0, 0, 1, 1], [], []>} : vector<8x784xbf16>, vector<784x2048xbf16>, vector<8x2048xf32> -> vector<8x2048xf32>
    %3 = vector.extract_strided_slice %2 {offsets = [0, 0], sizes = [8, 512], strides = [1, 1]} : vector<8x2048xf32> to vector<8x512xf32>
    %4 = vector.extract_strided_slice %2 {offsets = [0, 512], sizes = [8, 512], strides = [1, 1]} : vector<8x2048xf32> to vector<8x512xf32>
    %5 = arith.maximumf %3, %4 : vector<8x512xf32>
    %6 = vector.extract_strided_slice %2 {offsets = [0, 1024], sizes = [8, 512], strides = [1, 1]} : vector<8x2048xf32> to vector<8x512xf32>
    %7 = vector.extract_strided_slice %2 {offsets = [0, 1536], sizes = [8, 512], strides = [1, 1]} : vector<8x2048xf32> to vector<8x512xf32>
    %8 = arith.maximumf %6, %7 : vector<8x512xf32>
    %9 = arith.maximumf %5, %8 : vector<8x512xf32>
    %c0_3 = arith.constant 0 : index
    %c0_4 = arith.constant 0 : index
    %10 = vector.load %arg3[%c0_3, %c0_4] : memref<1x512xf32, #tpu.memory_space<vmem>>, vector<1x512xf32>
    %11 = vector.broadcast %10 : vector<1x512xf32> to vector<8x512xf32>
    %12 = arith.addf %9, %11 : vector<8x512xf32>
    %cst_5 = arith.constant 0.000000e+00 : f32
    %13 = vector.broadcast %cst_5 : f32 to vector<8x512xf32>
    %14 = arith.maximumf %12, %13 : vector<8x512xf32>
    %15 = arith.truncf %14 : vector<8x512xf32> to vector<8x512xbf16>
    %c0_6 = arith.constant 0 : index
    %c0_7 = arith.constant 0 : index
    %16 = vector.load %arg4[%c0_6, %c0_7] : memref<512x128xbf16, #tpu.memory_space<vmem>>, vector<512x128xbf16>
    %cst_8 = arith.constant dense<0.000000e+00> : vector<8x128xf32>
    %17 = tpu.matmul %15, %16, %cst_8 {dimension_numbers = #tpu.dot_dimension_numbers<[1], [0], [0], [1], [0, 0, 1, 1], [], []>} : vector<8x512xbf16>, vector<512x128xbf16>, vector<8x128xf32> -> vector<8x128xf32>
    %c0_9 = arith.constant 0 : index
    %c0_10 = arith.constant 0 : index
    %18 = vector.load %arg5[%c0_9, %c0_10] : memref<1x128xf32, #tpu.memory_space<vmem>>, vector<1x128xf32>
    %19 = vector.broadcast %18 : vector<1x128xf32> to vector<8x128xf32>
    %20 = arith.addf %17, %19 : vector<8x128xf32>
    %cst_11 = arith.constant 0.000000e+00 : f32
    %21 = vector.broadcast %cst_11 : f32 to vector<8x128xf32>
    %22 = arith.maximumf %20, %21 : vector<8x128xf32>
    %23 = tpu.iota {dimensions = array<i32: 1>} : vector<8x128xi32>
    %c10_i32 = arith.constant 10 : i32
    %24 = vector.broadcast %c10_i32 : i32 to vector<8x128xi32>
    %25 = arith.cmpi slt, %23, %24 : vector<8x128xi32>
    %cst_12 = arith.constant 0xFF800000 : f32
    %26 = vector.broadcast %cst_12 : f32 to vector<8x128xf32>
    %27 = arith.select %25, %22, %26 : vector<8x128xi1>, vector<8x128xf32>
    %cst_13 = arith.constant dense<0xFF800000> : vector<8xf32>
    %28 = vector.multi_reduction <maximumf>, %27, %cst_13 [1] : vector<8x128xf32> to vector<8xf32>
    %29 = vector.shape_cast %28 : vector<8xf32> to vector<8x1xf32>
    %30 = vector.broadcast %29 : vector<8x1xf32> to vector<8x128xf32>
    %31 = arith.subf %27, %30 : vector<8x128xf32>
    %32 = math.exp %31 : vector<8x128xf32>
    %cst_14 = arith.constant dense<0.000000e+00> : vector<8xf32>
    %33 = vector.multi_reduction <add>, %32, %cst_14 [1] : vector<8x128xf32> to vector<8xf32>
    %34 = vector.shape_cast %33 : vector<8xf32> to vector<8x1xf32>
    %35 = math.log %34 : vector<8x1xf32>
    %36 = arith.addf %35, %29 : vector<8x1xf32>
    %c10_i32_15 = arith.constant 10 : i32
    %37 = vector.broadcast %c10_i32_15 : i32 to vector<8x128xi32>
    %38 = arith.cmpi slt, %23, %37 : vector<8x128xi32>
    %39 = vector.broadcast %36 : vector<8x1xf32> to vector<8x128xf32>
    %40 = arith.subf %27, %39 : vector<8x128xf32>
    %cst_16 = arith.constant 0.000000e+00 : f32
    %41 = vector.broadcast %cst_16 : f32 to vector<8x128xf32>
    %42 = arith.select %38, %40, %41 : vector<8x128xi1>, vector<8x128xf32>
    %c0_17 = arith.constant 0 : index
    %c0_18 = arith.constant 0 : index
    %43 = vector.load %arg6[%c0_17, %c0_18] : memref<8x128xf32, #tpu.memory_space<vmem>>, vector<8x128xf32>
    tpu.vector_store %arg6[%c0_17, %c0_18], %42 {strides = array<i32>} : memref<8x128xf32, #tpu.memory_space<vmem>>, vector<8x128xf32>,
    return
  }
  func.func @transform_0(%arg0: i32) -> (i32, i32) {
    %c0_i32 = arith.constant 0 : i32
    %c0_i32_0 = arith.constant 0 : i32
    return %arg0, %c0_i32 : i32, i32
  }
  func.func @transform_1(%arg0: i32) -> (i32, i32) {
    %c0_i32 = arith.constant 0 : i32
    %c0_i32_0 = arith.constant 0 : i32
    %c0_i32_1 = arith.constant 0 : i32
    return %c0_i32, %c0_i32_0 : i32, i32
  }
  func.func @transform_2(%arg0: i32) -> (i32, i32) {
    %c0_i32 = arith.constant 0 : i32
    %c0_i32_0 = arith.constant 0 : i32
    %c0_i32_1 = arith.constant 0 : i32
    return %c0_i32, %c0_i32_0 : i32, i32
  }
  func.func @transform_3(%arg0: i32) -> (i32, i32) {
    %c0_i32 = arith.constant 0 : i32
    %c0_i32_0 = arith.constant 0 : i32
    %c0_i32_1 = arith.constant 0 : i32
    return %c0_i32, %c0_i32_0 : i32, i32
  }
  func.func @transform_4(%arg0: i32) -> (i32, i32) {
    %c0_i32 = arith.constant 0 : i32
    %c0_i32_0 = arith.constant 0 : i32
    %c0_i32_1 = arith.constant 0 : i32
    return %c0_i32, %c0_i32_0 : i32, i32
  }
  func.func @transform_5(%arg0: i32) -> (i32, i32) {
    %c0_i32 = arith.constant 0 : i32
    %c0_i32_0 = arith.constant 0 : i32
    return %arg0, %c0_i32 : i32, i32
  }
}

</mosaic_0001>

<llo_original>
// kernel: our_cnn_forward.1
$region0: #{our_cnn_forward.1}
  #allocation0 [shape = 'u32[]', space=smem, size = 0x4, offset = 0x4, fixed_abs, tag = 'smem constant byte address 0x4 - core index']
  #allocation1 [shape = 'u32[72,128]{1,0:T(1,128)}', space=vmem, size = 0x9000, scoped, tag = 'internal scratch']
  %s0 = inlined_call_operand.vmem [shape: bf16[8,784], index: 0, kind: input, shape index: {}]
  %s1 = inlined_call_operand.hbm [shape: bf16[784,2048], index: 1, kind: input, shape index: {}]
  %s2 = inlined_call_operand.hbm [shape: f32[1,512], index: 2, kind: input, shape index: {}]
  %s3 = inlined_call_operand.hbm [shape: bf16[512,128], index: 3, kind: input, shape index: {}]
  %s4 = inlined_call_operand.hbm [shape: f32[1,128], index: 4, kind: input, shape index: {}]
  %s5 = inlined_call_operand.vmem [shape: f32[8,128], index: 5, kind: output, shape index: {}]
  %s6 = sld [smem:[#allocation0]]
  $region46: #{our_cnn_forward.1} parent=0
    _
  %s8 = ssub.s32 1, %s6
  %s9 = scalar_select 0, %s8, %s6
  $region1: #{our_cnn_forward.1} parent=0
    #allocation2 [shape = 'u8[3211264]{0}', space=vmem, size = 0x310000, scoped, tag = 'input window, operand 1, single buffered']
    #allocation3 [shape = 's32[1]{0}', space=sflag, size = 0x4, scoped, tag = 'scoped memory for our_cnn_forward.1']
    #allocation4 [shape = 'u8[2048]{0}', space=vmem, size = 0x800, scoped, tag = 'input window, operand 2, single buffered']
    #allocation5 [shape = 's32[1]{0}', space=sflag, size = 0x4, scoped, tag = 'scoped memory for our_cnn_forward.1']
    #allocation6 [shape = 'u8[131072]{0}', space=vmem, size = 0x20000, scoped, tag = 'input window, operand 3, single buffered']
    #allocation7 [shape = 'u8[512]{0}', space=vmem, size = 0x400, scoped, tag = 'input window, operand 4, single buffered']
    #allocation8 [shape = 's32[1]{0}', space=sflag, size = 0x4, scoped, tag = 'scoped memory for our_cnn_forward.1']
    %10 = vsyncpa [#allocation3], 0
    %11 = vsyncpa [#allocation5], 0
    %12 = vsyncpa [#allocation8], 0
    // Predicated region
    $region2: #{our_cnn_forward.1} parent=1 // pred_check
      _
    $region3: #{our_cnn_forward.1} parent=1 // pred_check_branch
      %14 = sbr.rel (0) target = $region5
    $region4: #{our_cnn_forward.1} parent=1 // pred_region
      _
    $region5: #{our_cnn_forward.1} parent=1 // pred_fallthru
      _
    // Predicated region
    $region6: #{our_cnn_forward.1} parent=1 // pred_check
      _
    $region7: #{our_cnn_forward.1} parent=1 // pred_check_branch
      %16 = sbr.rel (0) target = $region9
    $region8: #{our_cnn_forward.1} parent=1 // pred_region
      %18 = vsyncadd [#allocation3], 0
      %s19 = sshll.u32 %s1, 4
      %s20 = int_to_ptr.hbm [resolvable:$true] %s19
      %s21 = sshll.u32 [#allocation2], 4
      %s22 = int_to_ptr.vmem [resolvable:$true] %s21
      %27 = dma.hbm_to_vmem [thread:$0]  %s20, 100352, %s22, [#allocation3], 1024, 1024, 64
    $region9: #{our_cnn_forward.1} parent=1 // pred_fallthru
      _
    // Predicated region
    $region10: #{our_cnn_forward.1} parent=1 // pred_check
      _
    $region11: #{our_cnn_forward.1} parent=1 // pred_check_branch
      %29 = sbr.rel (0) target = $region13
    $region12: #{our_cnn_forward.1} parent=1 // pred_region
      %31 = vsyncadd [#allocation5], 0
      %s33 = sshll.u32 %s2, 4
      %s34 = int_to_ptr.hbm [resolvable:$true] %s33
      %s35 = sshll.u32 [#allocation4], 4
      %s36 = int_to_ptr.vmem [resolvable:$true] %s35
      %38 = dma.hbm_to_vmem [thread:$0]  %s34, 64, %s36, [#allocation5]
    $region13: #{our_cnn_forward.1} parent=1 // pred_fallthru
      _
    // Predicated region
    $region14: #{our_cnn_forward.1} parent=1 // pred_check
      _
    $region15: #{our_cnn_forward.1} parent=1 // pred_check_branch
      %40 = sbr.rel (0) target = $region17
    $region16: #{our_cnn_forward.1} parent=1 // pred_region
      %42 = vsyncadd [#allocation5], 0
      %s43 = sshll.u32 %s3, 4
      %s44 = int_to_ptr.hbm [resolvable:$true] %s43
      %s45 = sshll.u32 [#allocation6], 4
      %s46 = int_to_ptr.vmem [resolvable:$true] %s45
      %51 = dma.hbm_to_vmem [thread:$0]  %s44, 4096, %s46, [#allocation5], 64, 64, 4
    $region17: #{our_cnn_forward.1} parent=1 // pred_fallthru
      _
    // Predicated region
    $region18: #{our_cnn_forward.1} parent=1 // pred_check
      _
    $region19: #{our_cnn_forward.1} parent=1 // pred_check_branch
      %53 = sbr.rel (0) target = $region21
    $region20: #{our_cnn_forward.1} parent=1 // pred_region
      %55 = vsyncadd [#allocation8], 0
      %s57 = sshll.u32 %s4, 4
      %s58 = int_to_ptr.hbm [resolvable:$true] %s57
      %s59 = sshll.u32 [#allocation7], 4
      %s60 = int_to_ptr.vmem [resolvable:$true] %s59
      %62 = dma.hbm_to_vmem [thread:$0]  %s58, 16, %s60, [#allocation8]
    $region21: #{our_cnn_forward.1} parent=1 // pred_fallthru
      _
    // Predicated region
    $region22: #{our_cnn_forward.1} parent=1 // pred_check
      _
    $region23: #{our_cnn_forward.1} parent=1 // pred_check_branch
      %64 = sbr.rel (0) target = $region25
    $region24: #{our_cnn_forward.1} parent=1 // pred_region
      %66 = dma.done [#allocation3], 100352
    $region25: #{our_cnn_forward.1} parent=1 // pred_fallthru
      _
    // Predicated region
    $region26: #{our_cnn_forward.1} parent=1 // pred_check
      _
    $region27: #{our_cnn_forward.1} parent=1 // pred_check_branch
      %68 = sbr.rel (0) target = $region29
    $region28: #{our_cnn_forward.1} parent=1 // pred_region
      %70 = dma.done [#allocation5], 64
    $region29: #{our_cnn_forward.1} parent=1 // pred_fallthru
      _
    // Predicated region
    $region30: #{our_cnn_forward.1} parent=1 // pred_check
      _
    $region31: #{our_cnn_forward.1} parent=1 // pred_check_branch
      %72 = sbr.rel (0) target = $region33
    $region32: #{our_cnn_forward.1} parent=1 // pred_region
      %74 = dma.done [#allocation5], 4096
    $region33: #{our_cnn_forward.1} parent=1 // pred_fallthru
      _
    // Predicated region
    $region34: #{our_cnn_forward.1} parent=1 // pred_check
      _
    $region35: #{our_cnn_forward.1} parent=1 // pred_check_branch
      %76 = sbr.rel (0) target = $region37
    $region36: #{our_cnn_forward.1} parent=1 // pred_region
      %78 = dma.done [#allocation8], 16
    $region37: #{our_cnn_forward.1} parent=1 // pred_fallthru
      _
    %v80 = vld [vmem:[%s0] sm:$0xff]
    %v81 = vld [vmem:[%s0 + $0x8] sm:$0xff]
    %v82 = vld [vmem:[%s0 + $0x10] sm:$0xff]
    %v83 = vld [vmem:[%s0 + $0x18] sm:$0xf]
    %v84 = vld [vmem:[#allocation2] sm:$0xff]
    %v85 = vld [vmem:[#allocation2 + $0x8] sm:$0xff]
    %v86 = vld [vmem:[#allocation2 + $0x10] sm:$0xff]
    %v87 = vld [vmem:[#allocation2 + $0x18] sm:$0xff]
    %v88 = vld [vmem:[#allocation2 + $0x20] sm:$0xff]
    %v89 = vld [vmem:[#allocation2 + $0x28] sm:$0xff]
    %v90 = vld [vmem:[#allocation2 + $0x30] sm:$0xff]
    %v91 = vld [vmem:[#allocation2 + $0x38] sm:$0xff]
    %v92 = vld [vmem:[#allocation2 + $0x40] sm:$0xff]
    %v93 = vld [vmem:[#allocation2 + $0x48] sm:$0xff]
    %v94 = vld [vmem:[#allocation2 + $0x50] sm:$0xff]
    %v95 = vld [vmem:[#allocation2 + $0x58] sm:$0xff]
    %v96 = vld [vmem:[#allocation2 + $0x60] sm:$0xff]
    %v97 = vld [vmem:[#allocation2 + $0x68] sm:$0xff]
    %v98 = vld [vmem:[#allocation2 + $0x70] sm:$0xff]
    %v99 = vld [vmem:[#allocation2 + $0x78] sm:$0xff]
    %v100 = vld [vmem:[#allocation2 + $0x80] sm:$0xff]
    %v101 = vld [vmem:[#allocation2 + $0x88] sm:$0xff]
    %v102 = vld [vmem:[#allocation2 + $0x90] sm:$0xff]
    %v103 = vld [vmem:[#allocation2 + $0x98] sm:$0xff]
    %v104 = vld [vmem:[#allocation2 + $0xa0] sm:$0xff]
    %v105 = vld [vmem:[#allocation2 + $0xa8] sm:$0xff]
    %v106 = vld [vmem:[#allocation2 + $0xb0] sm:$0xff]
    %v107 = vld [vmem:[#allocation2 + $0xb8] sm:$0xff]
    %v108 = vld [vmem:[#allocation2 + $0xc0] sm:$0xff]
    %v109 = vld [vmem:[#allocation2 + $0xc8] sm:$0xff]
    %v110 = vld [vmem:[#allocation2 + $0xd0] sm:$0xff]
    %v111 = vld [vmem:[#allocation2 + $0xd8] sm:$0xff]
    %v112 = vld [vmem:[#allocation2 + $0xe0] sm:$0xff]
    %v113 = vld [vmem:[#allocation2 + $0xe8] sm:$0xff]
    %v114 = vld [vmem:[#allocation2 + $0xf0] sm:$0xff]
    %v115 = vld [vmem:[#allocation2 + $0xf8] sm:$0xff]
    %v116 = vld [vmem:[#allocation2 + $0x100] sm:$0xff]
    %v117 = vld [vmem:[#allocation2 + $0x108] sm:$0xff]
    %v118 = vld [vmem:[#allocation2 + $0x110] sm:$0xff]
    %v119 = vld [vmem:[#allocation2 + $0x118] sm:$0xff]
    %v120 = vld [vmem:[#allocation2 + $0x120] sm:$0xff]
    %v121 = vld [vmem:[#allocation2 + $0x128] sm:$0xff]
    %v122 = vld [vmem:[#allocation2 + $0x130] sm:$0xff]
    %v123 = vld [vmem:[#allocation2 + $0x138] sm:$0xff]
    %v124 = vld [vmem:[#allocation2 + $0x140] sm:$0xff]
    %v125 = vld [vmem:[#allocation2 + $0x148] sm:$0xff]
    %v126 = vld [vmem:[#allocation2 + $0x150] sm:$0xff]
    %v127 = vld [vmem:[#allocation2 + $0x158] sm:$0xff]
    %v128 = vld [vmem:[#allocation2 + $0x160] sm:$0xff]
    %v129 = vld [vmem:[#allocation2 + $0x168] sm:$0xff]
    %v130 = vld [vmem:[#allocation2 + $0x170] sm:$0xff]
    %v131 = vld [vmem:[#allocation2 + $0x178] sm:$0xff]
    %v132 = vld [vmem:[#allocation2 + $0x180] sm:$0xff]
    %v133 = vld [vmem:[#allocation2 + $0x188] sm:$0xff]
    %v134 = vld [vmem:[#allocation2 + $0x190] sm:$0xff]
    %v135 = vld [vmem:[#allocation2 + $0x198] sm:$0xff]
    %v136 = vld [vmem:[#allocation2 + $0x1a0] sm:$0xff]
    %v137 = vld [vmem:[#allocation2 + $0x1a8] sm:$0xff]
    %v138 = vld [vmem:[#allocation2 + $0x1b0] sm:$0xff]
    %v139 = vld [vmem:[#allocation2 + $0x1b8] sm:$0xff]
    %v140 = vld [vmem:[#allocation2 + $0x1c0] sm:$0xff]
    %v141 = vld [vmem:[#allocation2 + $0x1c8] sm:$0xff]
    %v142 = vld [vmem:[#allocation2 + $0x1d0] sm:$0xff]
    %v143 = vld [vmem:[#allocation2 + $0x1d8] sm:$0xff]
    %v144 = vld [vmem:[#allocation2 + $0x1e0] sm:$0xff]
    %v145 = vld [vmem:[#allocation2 + $0x1e8] sm:$0xff]
    %v146 = vld [vmem:[#allocation2 + $0x1f0] sm:$0xff]
    %v147 = vld [vmem:[#allocation2 + $0x1f8] sm:$0xff]
    %v148 = vld [vmem:[#allocation2 + $0x200] sm:$0xff]
    %v149 = vld [vmem:[#allocation2 + $0x208] sm:$0xff]
    %v150 = vld [vmem:[#allocation2 + $0x210] sm:$0xff]
    %v151 = vld [vmem:[#allocation2 + $0x218] sm:$0xff]
    %v152 = vld [vmem:[#allocation2 + $0x220] sm:$0xff]
    %v153 = vld [vmem:[#allocation2 + $0x228] sm:$0xff]
    %v154 = vld [vmem:[#allocation2 + $0x230] sm:$0xff]
    %v155 = vld [vmem:[#allocation2 + $0x238] sm:$0xff]
    %v156 = vld [vmem:[#allocation2 + $0x240] sm:$0xff]
    %v157 = vld [vmem:[#allocation2 + $0x248] sm:$0xff]
    %v158 = vld [vmem:[#allocation2 + $0x250] sm:$0xff]
    %v159 = vld [vmem:[#allocation2 + $0x258] sm:$0xff]
    %v160 = vld [vmem:[#allocation2 + $0x260] sm:$0xff]
    %v161 = vld [vmem:[#allocation2 + $0x268] sm:$0xff]
    %v162 = vld [vmem:[#allocation2 + $0x270] sm:$0xff]
    %v163 = vld [vmem:[#allocation2 + $0x278] sm:$0xff]
    %v164 = vld [vmem:[#allocation2 + $0x280] sm:$0xff]
    %v165 = vld [vmem:[#allocation2 + $0x288] sm:$0xff]
    %v166 = vld [vmem:[#allocation2 + $0x290] sm:$0xff]
    %v167 = vld [vmem:[#allocation2 + $0x298] sm:$0xff]
    %v168 = vld [vmem:[#allocation2 + $0x2a0] sm:$0xff]
    %v169 = vld [vmem:[#allocation2 + $0x2a8] sm:$0xff]
    %v170 = vld [vmem:[#allocation2 + $0x2b0] sm:$0xff]
    %v171 = vld [vmem:[#allocation2 + $0x2b8] sm:$0xff]
    %v172 = vld [vmem:[#allocation2 + $0x2c0] sm:$0xff]
    %v173 = vld [vmem:[#allocation2 + $0x2c8] sm:$0xff]
    %v174 = vld [vmem:[#allocation2 + $0x2d0] sm:$0xff]
    %v175 = vld [vmem:[#allocation2 + $0x2d8] sm:$0xff]
    %v176 = vld [vmem:[#allocation2 + $0x2e0] sm:$0xff]
    %v177 = vld [vmem:[#allocation2 + $0x2e8] sm:$0xff]
    %v178 = vld [vmem:[#allocation2 + $0x2f0] sm:$0xff]
    %v179 = vld [vmem:[#allocation2 + $0x2f8] sm:$0xff]
    %v180 = vld [vmem:[#allocation2 + $0x300] sm:$0xff]
    %v181 = vld [vmem:[#allocation2 + $0x308] sm:$0xff]
    %v182 = vld [vmem:[#allocation2 + $0x310] sm:$0xff]
    %v183 = vld [vmem:[#allocation2 + $0x318] sm:$0xff]
    %v184 = vld [vmem:[#allocation2 + $0x320] sm:$0xff]
    %v185 = vld [vmem:[#allocation2 + $0x328] sm:$0xff]
    %v186 = vld [vmem:[#allocation2 + $0x330] sm:$0xff]
    %v187 = vld [vmem:[#allocation2 + $0x338] sm:$0xff]
    %v188 = vld [vmem:[#allocation2 + $0x340] sm:$0xff]
    %v189 = vld [vmem:[#allocation2 + $0x348] sm:$0xff]
    %v190 = vld [vmem:[#allocation2 + $0x350] sm:$0xff]
    %v191 = vld [vmem:[#allocation2 + $0x358] sm:$0xff]
    %v192 = vld [vmem:[#allocation2 + $0x360] sm:$0xff]
    %v193 = vld [vmem:[#allocation2 + $0x368] sm:$0xff]
    %v194 = vld [vmem:[#allocation2 + $0x370] sm:$0xff]
    %v195 = vld [vmem:[#allocation2 + $0x378] sm:$0xff]
    %v196 = vld [vmem:[#allocation2 + $0x380] sm:$0xff]
    %v197 = vld [vmem:[#allocation2 + $0x388] sm:$0xff]
    %v198 = vld [vmem:[#allocation2 + $0x390] sm:$0xff]
    %v199 = vld [vmem:[#allocation2 + $0x398] sm:$0xff]
    %v200 = vld [vmem:[#allocation2 + $0x3a0] sm:$0xff]
    %v201 = vld [vmem:[#allocation2 + $0x3a8] sm:$0xff]
    %v202 = vld [vmem:[#allocation2 + $0x3b0] sm:$0xff]
    %v203 = vld [vmem:[#allocation2 + $0x3b8] sm:$0xff]
    %v204 = vld [vmem:[#allocation2 + $0x3c0] sm:$0xff]
    %v205 = vld [vmem:[#allocation2 + $0x3c8] sm:$0xff]
    %v206 = vld [vmem:[#allocation2 + $0x3d0] sm:$0xff]
    %v207 = vld [vmem:[#allocation2 + $0x3d8] sm:$0xff]
    %v208 = vld [vmem:[#allocation2 + $0x3e0] sm:$0xff]
    %v209 = vld [vmem:[#allocation2 + $0x3e8] sm:$0xff]
    %v210 = vld [vmem:[#allocation2 + $0x3f0] sm:$0xff]
    %v211 = vld [vmem:[#allocation2 + $0x3f8] sm:$0xff]
    %v212 = vld [vmem:[#allocation2 + $0x400] sm:$0xff]
    %v213 = vld [vmem:[#allocation2 + $0x408] sm:$0xff]
    %v214 = vld [vmem:[#allocation2 + $0x410] sm:$0xff]
    %v215 = vld [vmem:[#allocation2 + $0x418] sm:$0xff]
    %v216 = vld [vmem:[#allocation2 + $0x420] sm:$0xff]
    %v217 = vld [vmem:[#allocation2 + $0x428] sm:$0xff]
    %v218 = vld [vmem:[#allocation2 + $0x430] sm:$0xff]
    %v219 = vld [vmem:[#allocation2 + $0x438] sm:$0xff]
    %v220 = vld [vmem:[#allocation2 + $0x440] sm:$0xff]
    %v221 = vld [vmem:[#allocation2 + $0x448] sm:$0xff]
    %v222 = vld [vmem:[#allocation2 + $0x450] sm:$0xff]
    %v223 = vld [vmem:[#allocation2 + $0x458] sm:$0xff]
    %v224 = vld [vmem:[#allocation2 + $0x460] sm:$0xff]
    %v225 = vld [vmem:[#allocation2 + $0x468] sm:$0xff]
    %v226 = vld [vmem:[#allocation2 + $0x470] sm:$0xff]
    %v227 = vld [vmem:[#allocation2 + $0x478] sm:$0xff]
    %v228 = vld [vmem:[#allocation2 + $0x480] sm:$0xff]
    %v229 = vld [vmem:[#allocation2 + $0x488] sm:$0xff]
    %v230 = vld [vmem:[#allocation2 + $0x490] sm:$0xff]
    %v231 = vld [vmem:[#allocation2 + $0x498] sm:$0xff]
    %v232 = vld [vmem:[#allocation2 + $0x4a0] sm:$0xff]
    %v233 = vld [vmem:[#allocation2 + $0x4a8] sm:$0xff]
    %v234 = vld [vmem:[#allocation2 + $0x4b0] sm:$0xff]
    %v235 = vld [vmem:[#allocation2 + $0x4b8] sm:$0xff]
    %v236 = vld [vmem:[#allocation2 + $0x4c0] sm:$0xff]
    %v237 = vld [vmem:[#allocation2 + $0x4c8] sm:$0xff]
    %v238 = vld [vmem:[#allocation2 + $0x4d0] sm:$0xff]
    %v239 = vld [vmem:[#allocation2 + $0x4d8] sm:$0xff]
    %v240 = vld [vmem:[#allocation2 + $0x4e0] sm:$0xff]
    %v241 = vld [vmem:[#allocation2 + $0x4e8] sm:$0xff]
    %v242 = vld [vmem:[#allocation2 + $0x4f0] sm:$0xff]
    %v243 = vld [vmem:[#allocation2 + $0x4f8] sm:$0xff]
    %v244 = vld [vmem:[#allocation2 + $0x500] sm:$0xff]
    %v245 = vld [vmem:[#allocation2 + $0x508] sm:$0xff]
    %v246 = vld [vmem:[#allocation2 + $0x510] sm:$0xff]
    %v247 = vld [vmem:[#allocation2 + $0x518] sm:$0xff]
    %v248 = vld [vmem:[#allocation2 + $0x520] sm:$0xff]
    %v249 = vld [vmem:[#allocation2 + $0x528] sm:$0xff]
    %v250 = vld [vmem:[#allocation2 + $0x530] sm:$0xff]
    %v251 = vld [vmem:[#allocation2 + $0x538] sm:$0xff]
    %v252 = vld [vmem:[#allocation2 + $0x540] sm:$0xff]
    %v253 = vld [vmem:[#allocation2 + $0x548] sm:$0xff]
    %v254 = vld [vmem:[#allocation2 + $0x550] sm:$0xff]
    %v255 = vld [vmem:[#allocation2 + $0x558] sm:$0xff]
    %v256 = vld [vmem:[#allocation2 + $0x560] sm:$0xff]
    %v257 = vld [vmem:[#allocation2 + $0x568] sm:$0xff]
    %v258 = vld [vmem:[#allocation2 + $0x570] sm:$0xff]
    %v259 = vld [vmem:[#allocation2 + $0x578] sm:$0xff]
    %v260 = vld [vmem:[#allocation2 + $0x580] sm:$0xff]
    %v261 = vld [vmem:[#allocation2 + $0x588] sm:$0xff]
    %v262 = vld [vmem:[#allocation2 + $0x590] sm:$0xff]
    %v263 = vld [vmem:[#allocation2 + $0x598] sm:$0xff]
    %v264 = vld [vmem:[#allocation2 + $0x5a0] sm:$0xff]
    %v265 = vld [vmem:[#allocation2 + $0x5a8] sm:$0xff]
    %v266 = vld [vmem:[#allocation2 + $0x5b0] sm:$0xff]
    %v267 = vld [vmem:[#allocation2 + $0x5b8] sm:$0xff]
    %v268 = vld [vmem:[#allocation2 + $0x5c0] sm:$0xff]
    %v269 = vld [vmem:[#allocation2 + $0x5c8] sm:$0xff]
    %v270 = vld [vmem:[#allocation2 + $0x5d0] sm:$0xff]
    %v271 = vld [vmem:[#allocation2 + $0x5d8] sm:$0xff]
    %v272 = vld [vmem:[#allocation2 + $0x5e0] sm:$0xff]
    %v273 = vld [vmem:[#allocation2 + $0x5e8] sm:$0xff]
    %v274 = vld [vmem:[#allocation2 + $0x5f0] sm:$0xff]
    %v275 = vld [vmem:[#allocation2 + $0x5f8] sm:$0xff]
    %v276 = vld [vmem:[#allocation2 + $0x600] sm:$0xff]
    %v277 = vld [vmem:[#allocation2 + $0x608] sm:$0xff]
    %v278 = vld [vmem:[#allocation2 + $0x610] sm:$0xff]
    %v279 = vld [vmem:[#allocation2 + $0x618] sm:$0xff]
    %v280 = vld [vmem:[#allocation2 + $0x620] sm:$0xff]
    %v281 = vld [vmem:[#allocation2 + $0x628] sm:$0xff]
    %v282 = vld [vmem:[#allocation2 + $0x630] sm:$0xff]
    %v283 = vld [vmem:[#allocation2 + $0x638] sm:$0xff]
    %v284 = vld [vmem:[#allocation2 + $0x640] sm:$0xff]
    %v285 = vld [vmem:[#allocation2 + $0x648] sm:$0xff]
    %v286 = vld [vmem:[#allocation2 + $0x650] sm:$0xff]
    %v287 = vld [vmem:[#allocation2 + $0x658] sm:$0xff]
    %v288 = vld [vmem:[#allocation2 + $0x660] sm:$0xff]
    %v289 = vld [vmem:[#allocation2 + $0x668] sm:$0xff]
    %v290 = vld [vmem:[#allocation2 + $0x670] sm:$0xff]
    %v291 = vld [vmem:[#allocation2 + $0x678] sm:$0xff]
    %v292 = vld [vmem:[#allocation2 + $0x680] sm:$0xff]
    %v293 = vld [vmem:[#allocation2 + $0x688] sm:$0xff]
    %v294 = vld [vmem:[#allocation2 + $0x690] sm:$0xff]
    %v295 = vld [vmem:[#allocation2 + $0x698] sm:$0xff]
    %v296 = vld [vmem:[#allocation2 + $0x6a0] sm:$0xff]
    %v297 = vld [vmem:[#allocation2 + $0x6a8] sm:$0xff]
    %v298 = vld [vmem:[#allocation2 + $0x6b0] sm:$0xff]
    %v299 = vld [vmem:[#allocation2 + $0x6b8] sm:$0xff]
    %v300 = vld [vmem:[#allocation2 + $0x6c0] sm:$0xff]
    %v301 = vld [vmem:[#allocation2 + $0x6c8] sm:$0xff]
    %v302 = vld [vmem:[#allocation2 + $0x6d0] sm:$0xff]
    %v303 = vld [vmem:[#allocation2 + $0x6d8] sm:$0xff]
    %v304 = vld [vmem:[#allocation2 + $0x6e0] sm:$0xff]
    %v305 = vld [vmem:[#allocation2 + $0x6e8] sm:$0xff]
    %v306 = vld [vmem:[#allocation2 + $0x6f0] sm:$0xff]
    %v307 = vld [vmem:[#allocation2 + $0x6f8] sm:$0xff]
    %v308 = vld [vmem:[#allocation2 + $0x700] sm:$0xff]
    %v309 = vld [vmem:[#allocation2 + $0x708] sm:$0xff]
    %v310 = vld [vmem:[#allocation2 + $0x710] sm:$0xff]
    %v311 = vld [vmem:[#allocation2 + $0x718] sm:$0xff]
    %v312 = vld [vmem:[#allocation2 + $0x720] sm:$0xff]
    %v313 = vld [vmem:[#allocation2 + $0x728] sm:$0xff]
    %v314 = vld [vmem:[#allocation2 + $0x730] sm:$0xff]
    %v315 = vld [vmem:[#allocation2 + $0x738] sm:$0xff]
    %v316 = vld [vmem:[#allocation2 + $0x740] sm:$0xff]
    %v317 = vld [vmem:[#allocation2 + $0x748] sm:$0xff]
    %v318 = vld [vmem:[#allocation2 + $0x750] sm:$0xff]
    %v319 = vld [vmem:[#allocation2 + $0x758] sm:$0xff]
    %v320 = vld [vmem:[#allocation2 + $0x760] sm:$0xff]
    %v321 = vld [vmem:[#allocation2 + $0x768] sm:$0xff]
    %v322 = vld [vmem:[#allocation2 + $0x770] sm:$0xff]
    %v323 = vld [vmem:[#allocation2 + $0x778] sm:$0xff]
    %v324 = vld [vmem:[#allocation2 + $0x780] sm:$0xff]
    %v325 = vld [vmem:[#allocation2 + $0x788] sm:$0xff]
    %v326 = vld [vmem:[#allocation2 + $0x790] sm:$0xff]
    %v327 = vld [vmem:[#allocation2 + $0x798] sm:$0xff]
    %v328 = vld [vmem:[#allocation2 + $0x7a0] sm:$0xff]
    %v329 = vld [vmem:[#allocation2 + $0x7a8] sm:$0xff]
    %v330 = vld [vmem:[#allocation2 + $0x7b0] sm:$0xff]
    %v331 = vld [vmem:[#allocation2 + $0x7b8] sm:$0xff]
    %v332 = vld [vmem:[#allocation2 + $0x7c0] sm:$0xff]
    %v333 = vld [vmem:[#allocation2 + $0x7c8] sm:$0xff]
    %v334 = vld [vmem:[#allocation2 + $0x7d0] sm:$0xff]
    %v335 = vld [vmem:[#allocation2 + $0x7d8] sm:$0xff]
    %v336 = vld [vmem:[#allocation2 + $0x7e0] sm:$0xff]
    %v337 = vld [vmem:[#allocation2 + $0x7e8] sm:$0xff]
    %v338 = vld [vmem:[#allocation2 + $0x7f0] sm:$0xff]
    %v339 = vld [vmem:[#allocation2 + $0x7f8] sm:$0xff]
    %v340 = vld [vmem:[#allocation2 + $0x800] sm:$0xff]
    %v341 = vld [vmem:[#allocation2 + $0x808] sm:$0xff]
    %v342 = vld [vmem:[#allocation2 + $0x810] sm:$0xff]
    %v343 = vld [vmem:[#allocation2 + $0x818] sm:$0xff]
    %v344 = vld [vmem:[#allocation2 + $0x820] sm:$0xff]
    %v345 = vld [vmem:[#allocation2 + $0x828] sm:$0xff]
    %v346 = vld [vmem:[#allocation2 + $0x830] sm:$0xff]
    %v347 = vld [vmem:[#allocation2 + $0x838] sm:$0xff]
    %v348 = vld [vmem:[#allocation2 + $0x840] sm:$0xff]
    %v349 = vld [vmem:[#allocation2 + $0x848] sm:$0xff]
    %v350 = vld [vmem:[#allocation2 + $0x850] sm:$0xff]
    %v351 = vld [vmem:[#allocation2 + $0x858] sm:$0xff]
    %v352 = vld [vmem:[#allocation2 + $0x860] sm:$0xff]
    %v353 = vld [vmem:[#allocation2 + $0x868] sm:$0xff]
    %v354 = vld [vmem:[#allocation2 + $0x870] sm:$0xff]
    %v355 = vld [vmem:[#allocation2 + $0x878] sm:$0xff]
    %v356 = vld [vmem:[#allocation2 + $0x880] sm:$0xff]
    %v357 = vld [vmem:[#allocation2 + $0x888] sm:$0xff]
    %v358 = vld [vmem:[#allocation2 + $0x890] sm:$0xff]
    %v359 = vld [vmem:[#allocation2 + $0x898] sm:$0xff]
    %v360 = vld [vmem:[#allocation2 + $0x8a0] sm:$0xff]
    %v361 = vld [vmem:[#allocation2 + $0x8a8] sm:$0xff]
    %v362 = vld [vmem:[#allocation2 + $0x8b0] sm:$0xff]
    %v363 = vld [vmem:[#allocation2 + $0x8b8] sm:$0xff]
    %v364 = vld [vmem:[#allocation2 + $0x8c0] sm:$0xff]
    %v365 = vld [vmem:[#allocation2 + $0x8c8] sm:$0xff]
    %v366 = vld [vmem:[#allocation2 + $0x8d0] sm:$0xff]
    %v367 = vld [vmem:[#allocation2 + $0x8d8] sm:$0xff]
    %v368 = vld [vmem:[#allocation2 + $0x8e0] sm:$0xff]
    %v369 = vld [vmem:[#allocation2 + $0x8e8] sm:$0xff]
    %v370 = vld [vmem:[#allocation2 + $0x8f0] sm:$0xff]
    %v371 = vld [vmem:[#allocation2 + $0x8f8] sm:$0xff]
    %v372 = vld [vmem:[#allocation2 + $0x900] sm:$0xff]
    %v373 = vld [vmem:[#allocation2 + $0x908] sm:$0xff]
    %v374 = vld [vmem:[#allocation2 + $0x910] sm:$0xff]
    %v375 = vld [vmem:[#allocation2 + $0x918] sm:$0xff]
    %v376 = vld [vmem:[#allocation2 + $0x920] sm:$0xff]
    %v377 = vld [vmem:[#allocation2 + $0x928] sm:$0xff]
    %v378 = vld [vmem:[#allocation2 + $0x930] sm:$0xff]
    %v379 = vld [vmem:[#allocation2 + $0x938] sm:$0xff]
    %v380 = vld [vmem:[#allocation2 + $0x940] sm:$0xff]
    %v381 = vld [vmem:[#allocation2 + $0x948] sm:$0xff]
    %v382 = vld [vmem:[#allocation2 + $0x950] sm:$0xff]
    %v383 = vld [vmem:[#allocation2 + $0x958] sm:$0xff]
    %v384 = vld [vmem:[#allocation2 + $0x960] sm:$0xff]
    %v385 = vld [vmem:[#allocation2 + $0x968] sm:$0xff]
    %v386 = vld [vmem:[#allocation2 + $0x970] sm:$0xff]
    %v387 = vld [vmem:[#allocation2 + $0x978] sm:$0xff]
    %v388 = vld [vmem:[#allocation2 + $0x980] sm:$0xff]
    %v389 = vld [vmem:[#allocation2 + $0x988] sm:$0xff]
    %v390 = vld [vmem:[#allocation2 + $0x990] sm:$0xff]
    %v391 = vld [vmem:[#allocation2 + $0x998] sm:$0xff]
    %v392 = vld [vmem:[#allocation2 + $0x9a0] sm:$0xff]
    %v393 = vld [vmem:[#allocation2 + $0x9a8] sm:$0xff]
    %v394 = vld [vmem:[#allocation2 + $0x9b0] sm:$0xff]
    %v395 = vld [vmem:[#allocation2 + $0x9b8] sm:$0xff]
    %v396 = vld [vmem:[#allocation2 + $0x9c0] sm:$0xff]
    %v397 = vld [vmem:[#allocation2 + $0x9c8] sm:$0xff]
    %v398 = vld [vmem:[#allocation2 + $0x9d0] sm:$0xff]
    %v399 = vld [vmem:[#allocation2 + $0x9d8] sm:$0xff]
    %v400 = vld [vmem:[#allocation2 + $0x9e0] sm:$0xff]
    %v401 = vld [vmem:[#allocation2 + $0x9e8] sm:$0xff]
    %v402 = vld [vmem:[#allocation2 + $0x9f0] sm:$0xff]
    %v403 = vld [vmem:[#allocation2 + $0x9f8] sm:$0xff]
    %v404 = vld [vmem:[#allocation2 + $0xa00] sm:$0xff]
    %v405 = vld [vmem:[#allocation2 + $0xa08] sm:$0xff]
    %v406 = vld [vmem:[#allocation2 + $0xa10] sm:$0xff]
    %v407 = vld [vmem:[#allocation2 + $0xa18] sm:$0xff]
    %v408 = vld [vmem:[#allocation2 + $0xa20] sm:$0xff]
    %v409 = vld [vmem:[#allocation2 + $0xa28] sm:$0xff]
    %v410 = vld [vmem:[#allocation2 + $0xa30] sm:$0xff]
    %v411 = vld [vmem:[#allocation2 + $0xa38] sm:$0xff]
    %v412 = vld [vmem:[#allocation2 + $0xa40] sm:$0xff]
    %v413 = vld [vmem:[#allocation2 + $0xa48] sm:$0xff]
    %v414 = vld [vmem:[#allocation2 + $0xa50] sm:$0xff]
    %v415 = vld [vmem:[#allocation2 + $0xa58] sm:$0xff]
    %v416 = vld [vmem:[#allocation2 + $0xa60] sm:$0xff]
    %v417 = vld [vmem:[#allocation2 + $0xa68] sm:$0xff]
    %v418 = vld [vmem:[#allocation2 + $0xa70] sm:$0xff]
    %v419 = vld [vmem:[#allocation2 + $0xa78] sm:$0xff]
    %v420 = vld [vmem:[#allocation2 + $0xa80] sm:$0xff]
    %v421 = vld [vmem:[#allocation2 + $0xa88] sm:$0xff]
    %v422 = vld [vmem:[#allocation2 + $0xa90] sm:$0xff]
    %v423 = vld [vmem:[#allocation2 + $0xa98] sm:$0xff]
    %v424 = vld [vmem:[#allocation2 + $0xaa0] sm:$0xff]
    %v425 = vld [vmem:[#allocation2 + $0xaa8] sm:$0xff]
    %v426 = vld [vmem:[#allocation2 + $0xab0] sm:$0xff]
    %v427 = vld [vmem:[#allocation2 + $0xab8] sm:$0xff]
    %v428 = vld [vmem:[#allocation2 + $0xac0] sm:$0xff]
    %v429 = vld [vmem:[#allocation2 + $0xac8] sm:$0xff]
    %v430 = vld [vmem:[#allocation2 + $0xad0] sm:$0xff]
    %v431 = vld [vmem:[#allocation2 + $0xad8] sm:$0xff]
    %v432 = vld [vmem:[#allocation2 + $0xae0] sm:$0xff]
    %v433 = vld [vmem:[#allocation2 + $0xae8] sm:$0xff]
    %v434 = vld [vmem:[#allocation2 + $0xaf0] sm:$0xff]
    %v435 = vld [vmem:[#allocation2 + $0xaf8] sm:$0xff]
    %v436 = vld [vmem:[#allocation2 + $0xb00] sm:$0xff]
    %v437 = vld [vmem:[#allocation2 + $0xb08] sm:$0xff]
    %v438 = vld [vmem:[#allocation2 + $0xb10] sm:$0xff]
    %v439 = vld [vmem:[#allocation2 + $0xb18] sm:$0xff]
    %v440 = vld [vmem:[#allocation2 + $0xb20] sm:$0xff]
    %v441 = vld [vmem:[#allocation2 + $0xb28] sm:$0xff]
    %v442 = vld [vmem:[#allocation2 + $0xb30] sm:$0xff]
    %v443 = vld [vmem:[#allocation2 + $0xb38] sm:$0xff]
    %v444 = vld [vmem:[#allocation2 + $0xb40] sm:$0xff]
    %v445 = vld [vmem:[#allocation2 + $0xb48] sm:$0xff]
    %v446 = vld [vmem:[#allocation2 + $0xb50] sm:$0xff]
    %v447 = vld [vmem:[#allocation2 + $0xb58] sm:$0xff]
    %v448 = vld [vmem:[#allocation2 + $0xb60] sm:$0xff]
    %v449 = vld [vmem:[#allocation2 + $0xb68] sm:$0xff]
    %v450 = vld [vmem:[#allocation2 + $0xb70] sm:$0xff]
    %v451 = vld [vmem:[#allocation2 + $0xb78] sm:$0xff]
    %v452 = vld [vmem:[#allocation2 + $0xb80] sm:$0xff]
    %v453 = vld [vmem:[#allocation2 + $0xb88] sm:$0xff]
    %v454 = vld [vmem:[#allocation2 + $0xb90] sm:$0xff]
    %v455 = vld [vmem:[#allocation2 + $0xb98] sm:$0xff]
    %v456 = vld [vmem:[#allocation2 + $0xba0] sm:$0xff]
    %v457 = vld [vmem:[#allocation2 + $0xba8] sm:$0xff]
    %v458 = vld [vmem:[#allocation2 + $0xbb0] sm:$0xff]
    %v459 = vld [vmem:[#allocation2 + $0xbb8] sm:$0xff]
    %v460 = vld [vmem:[#allocation2 + $0xbc0] sm:$0xff]
    %v461 = vld [vmem:[#allocation2 + $0xbc8] sm:$0xff]
    %v462 = vld [vmem:[#allocation2 + $0xbd0] sm:$0xff]
    %v463 = vld [vmem:[#allocation2 + $0xbd8] sm:$0xff]
    %v464 = vld [vmem:[#allocation2 + $0xbe0] sm:$0xff]
    %v465 = vld [vmem:[#allocation2 + $0xbe8] sm:$0xff]
    %v466 = vld [vmem:[#allocation2 + $0xbf0] sm:$0xff]
    %v467 = vld [vmem:[#allocation2 + $0xbf8] sm:$0xff]
    %v468 = vld [vmem:[#allocation2 + $0xc00] sm:$0xff]
    %v469 = vld [vmem:[#allocation2 + $0xc08] sm:$0xff]
    %v470 = vld [vmem:[#allocation2 + $0xc10] sm:$0xff]
    %v471 = vld [vmem:[#allocation2 + $0xc18] sm:$0xff]
    %v472 = vld [vmem:[#allocation2 + $0xc20] sm:$0xff]
    %v473 = vld [vmem:[#allocation2 + $0xc28] sm:$0xff]
    %v474 = vld [vmem:[#allocation2 + $0xc30] sm:$0xff]
    %v475 = vld [vmem:[#allocation2 + $0xc38] sm:$0xff]
    %v476 = vld [vmem:[#allocation2 + $0xc40] sm:$0xff]
    %v477 = vld [vmem:[#allocation2 + $0xc48] sm:$0xff]
    %v478 = vld [vmem:[#allocation2 + $0xc50] sm:$0xff]
    %v479 = vld [vmem:[#allocation2 + $0xc58] sm:$0xff]
    %v480 = vld [vmem:[#allocation2 + $0xc60] sm:$0xff]
    %v481 = vld [vmem:[#allocation2 + $0xc68] sm:$0xff]
    %v482 = vld [vmem:[#allocation2 + $0xc70] sm:$0xff]
    %v483 = vld [vmem:[#allocation2 + $0xc78] sm:$0xff]
    %v484 = vld [vmem:[#allocation2 + $0xc80] sm:$0xff]
    %v485 = vld [vmem:[#allocation2 + $0xc88] sm:$0xff]
    %v486 = vld [vmem:[#allocation2 + $0xc90] sm:$0xff]
    %v487 = vld [vmem:[#allocation2 + $0xc98] sm:$0xff]
    %v488 = vld [vmem:[#allocation2 + $0xca0] sm:$0xff]
    %v489 = vld [vmem:[#allocation2 + $0xca8] sm:$0xff]
    %v490 = vld [vmem:[#allocation2 + $0xcb0] sm:$0xff]
    %v491 = vld [vmem:[#allocation2 + $0xcb8] sm:$0xff]
    %v492 = vld [vmem:[#allocation2 + $0xcc0] sm:$0xff]
    %v493 = vld [vmem:[#allocation2 + $0xcc8] sm:$0xff]
    %v494 = vld [vmem:[#allocation2 + $0xcd0] sm:$0xff]
    %v495 = vld [vmem:[#allocation2 + $0xcd8] sm:$0xff]
    %v496 = vld [vmem:[#allocation2 + $0xce0] sm:$0xff]
    %v497 = vld [vmem:[#allocation2 + $0xce8] sm:$0xff]
    %v498 = vld [vmem:[#allocation2 + $0xcf0] sm:$0xff]
    %v499 = vld [vmem:[#allocation2 + $0xcf8] sm:$0xff]
    %v500 = vld [vmem:[#allocation2 + $0xd00] sm:$0xff]
    %v501 = vld [vmem:[#allocation2 + $0xd08] sm:$0xff]
    %v502 = vld [vmem:[#allocation2 + $0xd10] sm:$0xff]
    %v503 = vld [vmem:[#allocation2 + $0xd18] sm:$0xff]
    %v504 = vld [vmem:[#allocation2 + $0xd20] sm:$0xff]
    %v505 = vld [vmem:[#allocation2 + $0xd28] sm:$0xff]
    %v506 = vld [vmem:[#allocation2 + $0xd30] sm:$0xff]
    %v507 = vld [vmem:[#allocation2 + $0xd38] sm:$0xff]
    %v508 = vld [vmem:[#allocation2 + $0xd40] sm:$0xff]
    %v509 = vld [vmem:[#allocation2 + $0xd48] sm:$0xff]
    %v510 = vld [vmem:[#allocation2 + $0xd50] sm:$0xff]
    %v511 = vld [vmem:[#allocation2 + $0xd58] sm:$0xff]
    %v512 = vld [vmem:[#allocation2 + $0xd60] sm:$0xff]
    %v513 = vld [vmem:[#allocation2 + $0xd68] sm:$0xff]
    %v514 = vld [vmem:[#allocation2 + $0xd70] sm:$0xff]
    %v515 = vld [vmem:[#allocation2 + $0xd78] sm:$0xff]
    %v516 = vld [vmem:[#allocation2 + $0xd80] sm:$0xff]
    %v517 = vld [vmem:[#allocation2 + $0xd88] sm:$0xff]
    %v518 = vld [vmem:[#allocation2 + $0xd90] sm:$0xff]
    %v519 = vld [vmem:[#allocation2 + $0xd98] sm:$0xff]
    %v520 = vld [vmem:[#allocation2 + $0xda0] sm:$0xff]
    %v521 = vld [vmem:[#allocation2 + $0xda8] sm:$0xff]
    %v522 = vld [vmem:[#allocation2 + $0xdb0] sm:$0xff]
    %v523 = vld [vmem:[#allocation2 + $0xdb8] sm:$0xff]
    %v524 = vld [vmem:[#allocation2 + $0xdc0] sm:$0xff]
    %v525 = vld [vmem:[#allocation2 + $0xdc8] sm:$0xff]
    %v526 = vld [vmem:[#allocation2 + $0xdd0] sm:$0xff]
    %v527 = vld [vmem:[#allocation2 + $0xdd8] sm:$0xff]
    %v528 = vld [vmem:[#allocation2 + $0xde0] sm:$0xff]
    %v529 = vld [vmem:[#allocation2 + $0xde8] sm:$0xff]
    %v530 = vld [vmem:[#allocation2 + $0xdf0] sm:$0xff]
    %v531 = vld [vmem:[#allocation2 + $0xdf8] sm:$0xff]
    %v532 = vld [vmem:[#allocation2 + $0xe00] sm:$0xff]
    %v533 = vld [vmem:[#allocation2 + $0xe08] sm:$0xff]
    %v534 = vld [vmem:[#allocation2 + $0xe10] sm:$0xff]
    %v535 = vld [vmem:[#allocation2 + $0xe18] sm:$0xff]
    %v536 = vld [vmem:[#allocation2 + $0xe20] sm:$0xff]
    %v537 = vld [vmem:[#allocation2 + $0xe28] sm:$0xff]
    %v538 = vld [vmem:[#allocation2 + $0xe30] sm:$0xff]
    %v539 = vld [vmem:[#allocation2 + $0xe38] sm:$0xff]
    %v540 = vld [vmem:[#allocation2 + $0xe40] sm:$0xff]
    %v541 = vld [vmem:[#allocation2 + $0xe48] sm:$0xff]
    %v542 = vld [vmem:[#allocation2 + $0xe50] sm:$0xff]
    %v543 = vld [vmem:[#allocation2 + $0xe58] sm:$0xff]
    %v544 = vld [vmem:[#allocation2 + $0xe60] sm:$0xff]
    %v545 = vld [vmem:[#allocation2 + $0xe68] sm:$0xff]
    %v546 = vld [vmem:[#allocation2 + $0xe70] sm:$0xff]
    %v547 = vld [vmem:[#allocation2 + $0xe78] sm:$0xff]
    %v548 = vld [vmem:[#allocation2 + $0xe80] sm:$0xff]
    %v549 = vld [vmem:[#allocation2 + $0xe88] sm:$0xff]
    %v550 = vld [vmem:[#allocation2 + $0xe90] sm:$0xff]
    %v551 = vld [vmem:[#allocation2 + $0xe98] sm:$0xff]
    %v552 = vld [vmem:[#allocation2 + $0xea0] sm:$0xff]
    %v553 = vld [vmem:[#allocation2 + $0xea8] sm:$0xff]
    %v554 = vld [vmem:[#allocation2 + $0xeb0] sm:$0xff]
    %v555 = vld [vmem:[#allocation2 + $0xeb8] sm:$0xff]
    %v556 = vld [vmem:[#allocation2 + $0xec0] sm:$0xff]
    %v557 = vld [vmem:[#allocation2 + $0xec8] sm:$0xff]
    %v558 = vld [vmem:[#allocation2 + $0xed0] sm:$0xff]
    %v559 = vld [vmem:[#allocation2 + $0xed8] sm:$0xff]
    %v560 = vld [vmem:[#allocation2 + $0xee0] sm:$0xff]
    %v561 = vld [vmem:[#allocation2 + $0xee8] sm:$0xff]
    %v562 = vld [vmem:[#allocation2 + $0xef0] sm:$0xff]
    %v563 = vld [vmem:[#allocation2 + $0xef8] sm:$0xff]
    %v564 = vld [vmem:[#allocation2 + $0xf00] sm:$0xff]
    %v565 = vld [vmem:[#allocation2 + $0xf08] sm:$0xff]
    %v566 = vld [vmem:[#allocation2 + $0xf10] sm:$0xff]
    %v567 = vld [vmem:[#allocation2 + $0xf18] sm:$0xff]
    %v568 = vld [vmem:[#allocation2 + $0xf20] sm:$0xff]
    %v569 = vld [vmem:[#allocation2 + $0xf28] sm:$0xff]
    %v570 = vld [vmem:[#allocation2 + $0xf30] sm:$0xff]
    %v571 = vld [vmem:[#allocation2 + $0xf38] sm:$0xff]
    %v572 = vld [vmem:[#allocation2 + $0xf40] sm:$0xff]
    %v573 = vld [vmem:[#allocation2 + $0xf48] sm:$0xff]
    %v574 = vld [vmem:[#allocation2 + $0xf50] sm:$0xff]
    %v575 = vld [vmem:[#allocation2 + $0xf58] sm:$0xff]
    %v576 = vld [vmem:[#allocation2 + $0xf60] sm:$0xff]
    %v577 = vld [vmem:[#allocation2 + $0xf68] sm:$0xff]
    %v578 = vld [vmem:[#allocation2 + $0xf70] sm:$0xff]
    %v579 = vld [vmem:[#allocation2 + $0xf78] sm:$0xff]
    %v580 = vld [vmem:[#allocation2 + $0xf80] sm:$0xff]
    %v581 = vld [vmem:[#allocation2 + $0xf88] sm:$0xff]
    %v582 = vld [vmem:[#allocation2 + $0xf90] sm:$0xff]
    %v583 = vld [vmem:[#allocation2 + $0xf98] sm:$0xff]
    %v584 = vld [vmem:[#allocation2 + $0xfa0] sm:$0xff]
    %v585 = vld [vmem:[#allocation2 + $0xfa8] sm:$0xff]
    %v586 = vld [vmem:[#allocation2 + $0xfb0] sm:$0xff]
    %v587 = vld [vmem:[#allocation2 + $0xfb8] sm:$0xff]
    %v588 = vld [vmem:[#allocation2 + $0xfc0] sm:$0xff]
    %v589 = vld [vmem:[#allocation2 + $0xfc8] sm:$0xff]
    %v590 = vld [vmem:[#allocation2 + $0xfd0] sm:$0xff]
    %v591 = vld [vmem:[#allocation2 + $0xfd8] sm:$0xff]
    %v592 = vld [vmem:[#allocation2 + $0xfe0] sm:$0xff]
    %v593 = vld [vmem:[#allocation2 + $0xfe8] sm:$0xff]
    %v594 = vld [vmem:[#allocation2 + $0xff0] sm:$0xff]
    %v595 = vld [vmem:[#allocation2 + $0xff8] sm:$0xff]
    %v596 = vld [vmem:[#allocation2 + $0x1000] sm:$0xff]
    %v597 = vld [vmem:[#allocation2 + $0x1008] sm:$0xff]
    %v598 = vld [vmem:[#allocation2 + $0x1010] sm:$0xff]
    %v599 = vld [vmem:[#allocation2 + $0x1018] sm:$0xff]
    %v600 = vld [vmem:[#allocation2 + $0x1020] sm:$0xff]
    %v601 = vld [vmem:[#allocation2 + $0x1028] sm:$0xff]
    %v602 = vld [vmem:[#allocation2 + $0x1030] sm:$0xff]
    %v603 = vld [vmem:[#allocation2 + $0x1038] sm:$0xff]
    %v604 = vld [vmem:[#allocation2 + $0x1040] sm:$0xff]
    %v605 = vld [vmem:[#allocation2 + $0x1048] sm:$0xff]
    %v606 = vld [vmem:[#allocation2 + $0x1050] sm:$0xff]
    %v607 = vld [vmem:[#allocation2 + $0x1058] sm:$0xff]
    %v608 = vld [vmem:[#allocation2 + $0x1060] sm:$0xff]
    %v609 = vld [vmem:[#allocation2 + $0x1068] sm:$0xff]
    %v610 = vld [vmem:[#allocation2 + $0x1070] sm:$0xff]
    %v611 = vld [vmem:[#allocation2 + $0x1078] sm:$0xff]
    %v612 = vld [vmem:[#allocation2 + $0x1080] sm:$0xff]
    %v613 = vld [vmem:[#allocation2 + $0x1088] sm:$0xff]
    %v614 = vld [vmem:[#allocation2 + $0x1090] sm:$0xff]
    %v615 = vld [vmem:[#allocation2 + $0x1098] sm:$0xff]
    %v616 = vld [vmem:[#allocation2 + $0x10a0] sm:$0xff]
    %v617 = vld [vmem:[#allocation2 + $0x10a8] sm:$0xff]
    %v618 = vld [vmem:[#allocation2 + $0x10b0] sm:$0xff]
    %v619 = vld [vmem:[#allocation2 + $0x10b8] sm:$0xff]
    %v620 = vld [vmem:[#allocation2 + $0x10c0] sm:$0xff]
    %v621 = vld [vmem:[#allocation2 + $0x10c8] sm:$0xff]
    %v622 = vld [vmem:[#allocation2 + $0x10d0] sm:$0xff]
    %v623 = vld [vmem:[#allocation2 + $0x10d8] sm:$0xff]
    %v624 = vld [vmem:[#allocation2 + $0x10e0] sm:$0xff]
    %v625 = vld [vmem:[#allocation2 + $0x10e8] sm:$0xff]
    %v626 = vld [vmem:[#allocation2 + $0x10f0] sm:$0xff]
    %v627 = vld [vmem:[#allocation2 + $0x10f8] sm:$0xff]
    %v628 = vld [vmem:[#allocation2 + $0x1100] sm:$0xff]
    %v629 = vld [vmem:[#allocation2 + $0x1108] sm:$0xff]
    %v630 = vld [vmem:[#allocation2 + $0x1110] sm:$0xff]
    %v631 = vld [vmem:[#allocation2 + $0x1118] sm:$0xff]
    %v632 = vld [vmem:[#allocation2 + $0x1120] sm:$0xff]
    %v633 = vld [vmem:[#allocation2 + $0x1128] sm:$0xff]
    %v634 = vld [vmem:[#allocation2 + $0x1130] sm:$0xff]
    %v635 = vld [vmem:[#allocation2 + $0x1138] sm:$0xff]
    %v636 = vld [vmem:[#allocation2 + $0x1140] sm:$0xff]
    %v637 = vld [vmem:[#allocation2 + $0x1148] sm:$0xff]
    %v638 = vld [vmem:[#allocation2 + $0x1150] sm:$0xff]
    %v639 = vld [vmem:[#allocation2 + $0x1158] sm:$0xff]
    %v640 = vld [vmem:[#allocation2 + $0x1160] sm:$0xff]
    %v641 = vld [vmem:[#allocation2 + $0x1168] sm:$0xff]
    %v642 = vld [vmem:[#allocation2 + $0x1170] sm:$0xff]
    %v643 = vld [vmem:[#allocation2 + $0x1178] sm:$0xff]
    %v644 = vld [vmem:[#allocation2 + $0x1180] sm:$0xff]
    %v645 = vld [vmem:[#allocation2 + $0x1188] sm:$0xff]
    %v646 = vld [vmem:[#allocation2 + $0x1190] sm:$0xff]
    %v647 = vld [vmem:[#allocation2 + $0x1198] sm:$0xff]
    %v648 = vld [vmem:[#allocation2 + $0x11a0] sm:$0xff]
    %v649 = vld [vmem:[#allocation2 + $0x11a8] sm:$0xff]
    %v650 = vld [vmem:[#allocation2 + $0x11b0] sm:$0xff]
    %v651 = vld [vmem:[#allocation2 + $0x11b8] sm:$0xff]
    %v652 = vld [vmem:[#allocation2 + $0x11c0] sm:$0xff]
    %v653 = vld [vmem:[#allocation2 + $0x11c8] sm:$0xff]
    %v654 = vld [vmem:[#allocation2 + $0x11d0] sm:$0xff]
    %v655 = vld [vmem:[#allocation2 + $0x11d8] sm:$0xff]
    %v656 = vld [vmem:[#allocation2 + $0x11e0] sm:$0xff]
    %v657 = vld [vmem:[#allocation2 + $0x11e8] sm:$0xff]
    %v658 = vld [vmem:[#allocation2 + $0x11f0] sm:$0xff]
    %v659 = vld [vmem:[#allocation2 + $0x11f8] sm:$0xff]
    %v660 = vld [vmem:[#allocation2 + $0x1200] sm:$0xff]
    %v661 = vld [vmem:[#allocation2 + $0x1208] sm:$0xff]
    %v662 = vld [vmem:[#allocation2 + $0x1210] sm:$0xff]
    %v663 = vld [vmem:[#allocation2 + $0x1218] sm:$0xff]
    %v664 = vld [vmem:[#allocation2 + $0x1220] sm:$0xff]
    %v665 = vld [vmem:[#allocation2 + $0x1228] sm:$0xff]
    %v666 = vld [vmem:[#allocation2 + $0x1230] sm:$0xff]
    %v667 = vld [vmem:[#allocation2 + $0x1238] sm:$0xff]
    %v668 = vld [vmem:[#allocation2 + $0x1240] sm:$0xff]
    %v669 = vld [vmem:[#allocation2 + $0x1248] sm:$0xff]
    %v670 = vld [vmem:[#allocation2 + $0x1250] sm:$0xff]
    %v671 = vld [vmem:[#allocation2 + $0x1258] sm:$0xff]
    %v672 = vld [vmem:[#allocation2 + $0x1260] sm:$0xff]
    %v673 = vld [vmem:[#allocation2 + $0x1268] sm:$0xff]
    %v674 = vld [vmem:[#allocation2 + $0x1270] sm:$0xff]
    %v675 = vld [vmem:[#allocation2 + $0x1278] sm:$0xff]
    %v676 = vld [vmem:[#allocation2 + $0x1280] sm:$0xff]
    %v677 = vld [vmem:[#allocation2 + $0x1288] sm:$0xff]
    %v678 = vld [vmem:[#allocation2 + $0x1290] sm:$0xff]
    %v679 = vld [vmem:[#allocation2 + $0x1298] sm:$0xff]
    %v680 = vld [vmem:[#allocation2 + $0x12a0] sm:$0xff]
    %v681 = vld [vmem:[#allocation2 + $0x12a8] sm:$0xff]
    %v682 = vld [vmem:[#allocation2 + $0x12b0] sm:$0xff]
    %v683 = vld [vmem:[#allocation2 + $0x12b8] sm:$0xff]
    %v684 = vld [vmem:[#allocation2 + $0x12c0] sm:$0xff]
    %v685 = vld [vmem:[#allocation2 + $0x12c8] sm:$0xff]
    %v686 = vld [vmem:[#allocation2 + $0x12d0] sm:$0xff]
    %v687 = vld [vmem:[#allocation2 + $0x12d8] sm:$0xff]
    %v688 = vld [vmem:[#allocation2 + $0x12e0] sm:$0xff]
    %v689 = vld [vmem:[#allocation2 + $0x12e8] sm:$0xff]
    %v690 = vld [vmem:[#allocation2 + $0x12f0] sm:$0xff]
    %v691 = vld [vmem:[#allocation2 + $0x12f8] sm:$0xff]
    %v692 = vld [vmem:[#allocation2 + $0x1300] sm:$0xff]
    %v693 = vld [vmem:[#allocation2 + $0x1308] sm:$0xff]
    %v694 = vld [vmem:[#allocation2 + $0x1310] sm:$0xff]
    %v695 = vld [vmem:[#allocation2 + $0x1318] sm:$0xff]
    %v696 = vld [vmem:[#allocation2 + $0x1320] sm:$0xff]
    %v697 = vld [vmem:[#allocation2 + $0x1328] sm:$0xff]
    %v698 = vld [vmem:[#allocation2 + $0x1330] sm:$0xff]
    %v699 = vld [vmem:[#allocation2 + $0x1338] sm:$0xff]
    %v700 = vld [vmem:[#allocation2 + $0x1340] sm:$0xff]
    %v701 = vld [vmem:[#allocation2 + $0x1348] sm:$0xff]
    %v702 = vld [vmem:[#allocation2 + $0x1350] sm:$0xff]
    %v703 = vld [vmem:[#allocation2 + $0x1358] sm:$0xff]
    %v704 = vld [vmem:[#allocation2 + $0x1360] sm:$0xff]
    %v705 = vld [vmem:[#allocation2 + $0x1368] sm:$0xff]
    %v706 = vld [vmem:[#allocation2 + $0x1370] sm:$0xff]
    %v707 = vld [vmem:[#allocation2 + $0x1378] sm:$0xff]
    %v708 = vld [vmem:[#allocation2 + $0x1380] sm:$0xff]
    %v709 = vld [vmem:[#allocation2 + $0x1388] sm:$0xff]
    %v710 = vld [vmem:[#allocation2 + $0x1390] sm:$0xff]
    %v711 = vld [vmem:[#allocation2 + $0x1398] sm:$0xff]
    %v712 = vld [vmem:[#allocation2 + $0x13a0] sm:$0xff]
    %v713 = vld [vmem:[#allocation2 + $0x13a8] sm:$0xff]
    %v714 = vld [vmem:[#allocation2 + $0x13b0] sm:$0xff]
    %v715 = vld [vmem:[#allocation2 + $0x13b8] sm:$0xff]
    %v716 = vld [vmem:[#allocation2 + $0x13c0] sm:$0xff]
    %v717 = vld [vmem:[#allocation2 + $0x13c8] sm:$0xff]
    %v718 = vld [vmem:[#allocation2 + $0x13d0] sm:$0xff]
    %v719 = vld [vmem:[#allocation2 + $0x13d8] sm:$0xff]
    %v720 = vld [vmem:[#allocation2 + $0x13e0] sm:$0xff]
    %v721 = vld [vmem:[#allocation2 + $0x13e8] sm:$0xff]
    %v722 = vld [vmem:[#allocation2 + $0x13f0] sm:$0xff]
    %v723 = vld [vmem:[#allocation2 + $0x13f8] sm:$0xff]
    %v724 = vld [vmem:[#allocation2 + $0x1400] sm:$0xff]
    %v725 = vld [vmem:[#allocation2 + $0x1408] sm:$0xff]
    %v726 = vld [vmem:[#allocation2 + $0x1410] sm:$0xff]
    %v727 = vld [vmem:[#allocation2 + $0x1418] sm:$0xff]
    %v728 = vld [vmem:[#allocation2 + $0x1420] sm:$0xff]
    %v729 = vld [vmem:[#allocation2 + $0x1428] sm:$0xff]
    %v730 = vld [vmem:[#allocation2 + $0x1430] sm:$0xff]
    %v731 = vld [vmem:[#allocation2 + $0x1438] sm:$0xff]
    %v732 = vld [vmem:[#allocation2 + $0x1440] sm:$0xff]
    %v733 = vld [vmem:[#allocation2 + $0x1448] sm:$0xff]
    %v734 = vld [vmem:[#allocation2 + $0x1450] sm:$0xff]
    %v735 = vld [vmem:[#allocation2 + $0x1458] sm:$0xff]
    %v736 = vld [vmem:[#allocation2 + $0x1460] sm:$0xff]
    %v737 = vld [vmem:[#allocation2 + $0x1468] sm:$0xff]
    %v738 = vld [vmem:[#allocation2 + $0x1470] sm:$0xff]
    %v739 = vld [vmem:[#allocation2 + $0x1478] sm:$0xff]
    %v740 = vld [vmem:[#allocation2 + $0x1480] sm:$0xff]
    %v741 = vld [vmem:[#allocation2 + $0x1488] sm:$0xff]
    %v742 = vld [vmem:[#allocation2 + $0x1490] sm:$0xff]
    %v743 = vld [vmem:[#allocation2 + $0x1498] sm:$0xff]
    %v744 = vld [vmem:[#allocation2 + $0x14a0] sm:$0xff]
    %v745 = vld [vmem:[#allocation2 + $0x14a8] sm:$0xff]
    %v746 = vld [vmem:[#allocation2 + $0x14b0] sm:$0xff]
    %v747 = vld [vmem:[#allocation2 + $0x14b8] sm:$0xff]
    %v748 = vld [vmem:[#allocation2 + $0x14c0] sm:$0xff]
    %v749 = vld [vmem:[#allocation2 + $0x14c8] sm:$0xff]
    %v750 = vld [vmem:[#allocation2 + $0x14d0] sm:$0xff]
    %v751 = vld [vmem:[#allocation2 + $0x14d8] sm:$0xff]
    %v752 = vld [vmem:[#allocation2 + $0x14e0] sm:$0xff]
    %v753 = vld [vmem:[#allocation2 + $0x14e8] sm:$0xff]
    %v754 = vld [vmem:[#allocation2 + $0x14f0] sm:$0xff]
    %v755 = vld [vmem:[#allocation2 + $0x14f8] sm:$0xff]
    %v756 = vld [vmem:[#allocation2 + $0x1500] sm:$0xff]
    %v757 = vld [vmem:[#allocation2 + $0x1508] sm:$0xff]
    %v758 = vld [vmem:[#allocation2 + $0x1510] sm:$0xff]
    %v759 = vld [vmem:[#allocation2 + $0x1518] sm:$0xff]
    %v760 = vld [vmem:[#allocation2 + $0x1520] sm:$0xff]
    %v761 = vld [vmem:[#allocation2 + $0x1528] sm:$0xff]
    %v762 = vld [vmem:[#allocation2 + $0x1530] sm:$0xff]
    %v763 = vld [vmem:[#allocation2 + $0x1538] sm:$0xff]
    %v764 = vld [vmem:[#allocation2 + $0x1540] sm:$0xff]
    %v765 = vld [vmem:[#allocation2 + $0x1548] sm:$0xff]
    %v766 = vld [vmem:[#allocation2 + $0x1550] sm:$0xff]
    %v767 = vld [vmem:[#allocation2 + $0x1558] sm:$0xff]
    %v768 = vld [vmem:[#allocation2 + $0x1560] sm:$0xff]
    %v769 = vld [vmem:[#allocation2 + $0x1568] sm:$0xff]
    %v770 = vld [vmem:[#allocation2 + $0x1570] sm:$0xff]
    %v771 = vld [vmem:[#allocation2 + $0x1578] sm:$0xff]
    %v772 = vld [vmem:[#allocation2 + $0x1580] sm:$0xff]
    %v773 = vld [vmem:[#allocation2 + $0x1588] sm:$0xff]
    %v774 = vld [vmem:[#allocation2 + $0x1590] sm:$0xff]
    %v775 = vld [vmem:[#allocation2 + $0x1598] sm:$0xff]
    %v776 = vld [vmem:[#allocation2 + $0x15a0] sm:$0xff]
    %v777 = vld [vmem:[#allocation2 + $0x15a8] sm:$0xff]
    %v778 = vld [vmem:[#allocation2 + $0x15b0] sm:$0xff]
    %v779 = vld [vmem:[#allocation2 + $0x15b8] sm:$0xff]
    %v780 = vld [vmem:[#allocation2 + $0x15c0] sm:$0xff]
    %v781 = vld [vmem:[#allocation2 + $0x15c8] sm:$0xff]
    %v782 = vld [vmem:[#allocation2 + $0x15d0] sm:$0xff]
    %v783 = vld [vmem:[#allocation2 + $0x15d8] sm:$0xff]
    %v784 = vld [vmem:[#allocation2 + $0x15e0] sm:$0xff]
    %v785 = vld [vmem:[#allocation2 + $0x15e8] sm:$0xff]
    %v786 = vld [vmem:[#allocation2 + $0x15f0] sm:$0xff]
    %v787 = vld [vmem:[#allocation2 + $0x15f8] sm:$0xff]
    %v788 = vld [vmem:[#allocation2 + $0x1600] sm:$0xff]
    %v789 = vld [vmem:[#allocation2 + $0x1608] sm:$0xff]
    %v790 = vld [vmem:[#allocation2 + $0x1610] sm:$0xff]
    %v791 = vld [vmem:[#allocation2 + $0x1618] sm:$0xff]
    %v792 = vld [vmem:[#allocation2 + $0x1620] sm:$0xff]
    %v793 = vld [vmem:[#allocation2 + $0x1628] sm:$0xff]
    %v794 = vld [vmem:[#allocation2 + $0x1630] sm:$0xff]
    %v795 = vld [vmem:[#allocation2 + $0x1638] sm:$0xff]
    %v796 = vld [vmem:[#allocation2 + $0x1640] sm:$0xff]
    %v797 = vld [vmem:[#allocation2 + $0x1648] sm:$0xff]
    %v798 = vld [vmem:[#allocation2 + $0x1650] sm:$0xff]
    %v799 = vld [vmem:[#allocation2 + $0x1658] sm:$0xff]
    %v800 = vld [vmem:[#allocation2 + $0x1660] sm:$0xff]
    %v801 = vld [vmem:[#allocation2 + $0x1668] sm:$0xff]
    %v802 = vld [vmem:[#allocation2 + $0x1670] sm:$0xff]
    %v803 = vld [vmem:[#allocation2 + $0x1678] sm:$0xff]
    %v804 = vld [vmem:[#allocation2 + $0x1680] sm:$0xff]
    %v805 = vld [vmem:[#allocation2 + $0x1688] sm:$0xff]
    %v806 = vld [vmem:[#allocation2 + $0x1690] sm:$0xff]
    %v807 = vld [vmem:[#allocation2 + $0x1698] sm:$0xff]
    %v808 = vld [vmem:[#allocation2 + $0x16a0] sm:$0xff]
    %v809 = vld [vmem:[#allocation2 + $0x16a8] sm:$0xff]
    %v810 = vld [vmem:[#allocation2 + $0x16b0] sm:$0xff]
    %v811 = vld [vmem:[#allocation2 + $0x16b8] sm:$0xff]
    %v812 = vld [vmem:[#allocation2 + $0x16c0] sm:$0xff]
    %v813 = vld [vmem:[#allocation2 + $0x16c8] sm:$0xff]
    %v814 = vld [vmem:[#allocation2 + $0x16d0] sm:$0xff]
    %v815 = vld [vmem:[#allocation2 + $0x16d8] sm:$0xff]
    %v816 = vld [vmem:[#allocation2 + $0x16e0] sm:$0xff]
    %v817 = vld [vmem:[#allocation2 + $0x16e8] sm:$0xff]
    %v818 = vld [vmem:[#allocation2 + $0x16f0] sm:$0xff]
    %v819 = vld [vmem:[#allocation2 + $0x16f8] sm:$0xff]
    %v820 = vld [vmem:[#allocation2 + $0x1700] sm:$0xff]
    %v821 = vld [vmem:[#allocation2 + $0x1708] sm:$0xff]
    %v822 = vld [vmem:[#allocation2 + $0x1710] sm:$0xff]
    %v823 = vld [vmem:[#allocation2 + $0x1718] sm:$0xff]
    %v824 = vld [vmem:[#allocation2 + $0x1720] sm:$0xff]
    %v825 = vld [vmem:[#allocation2 + $0x1728] sm:$0xff]
    %v826 = vld [vmem:[#allocation2 + $0x1730] sm:$0xff]
    %v827 = vld [vmem:[#allocation2 + $0x1738] sm:$0xff]
    %v828 = vld [vmem:[#allocation2 + $0x1740] sm:$0xff]
    %v829 = vld [vmem:[#allocation2 + $0x1748] sm:$0xff]
    %v830 = vld [vmem:[#allocation2 + $0x1750] sm:$0xff]
    %v831 = vld [vmem:[#allocation2 + $0x1758] sm:$0xff]
    %v832 = vld [vmem:[#allocation2 + $0x1760] sm:$0xff]
    %v833 = vld [vmem:[#allocation2 + $0x1768] sm:$0xff]
    %v834 = vld [vmem:[#allocation2 + $0x1770] sm:$0xff]
    %v835 = vld [vmem:[#allocation2 + $0x1778] sm:$0xff]
    %v836 = vld [vmem:[#allocation2 + $0x1780] sm:$0xff]
    %v837 = vld [vmem:[#allocation2 + $0x1788] sm:$0xff]
    %v838 = vld [vmem:[#allocation2 + $0x1790] sm:$0xff]
    %v839 = vld [vmem:[#allocation2 + $0x1798] sm:$0xff]
    %v840 = vld [vmem:[#allocation2 + $0x17a0] sm:$0xff]
    %v841 = vld [vmem:[#allocation2 + $0x17a8] sm:$0xff]
    %v842 = vld [vmem:[#allocation2 + $0x17b0] sm:$0xff]
    %v843 = vld [vmem:[#allocation2 + $0x17b8] sm:$0xff]
    %v844 = vld [vmem:[#allocation2 + $0x17c0] sm:$0xff]
    %v845 = vld [vmem:[#allocation2 + $0x17c8] sm:$0xff]
    %v846 = vld [vmem:[#allocation2 + $0x17d0] sm:$0xff]
    %v847 = vld [vmem:[#allocation2 + $0x17d8] sm:$0xff]
    %v848 = vld [vmem:[#allocation2 + $0x17e0] sm:$0xff]
    %v849 = vld [vmem:[#allocation2 + $0x17e8] sm:$0xff]
    %v850 = vld [vmem:[#allocation2 + $0x17f0] sm:$0xff]
    %v851 = vld [vmem:[#allocation2 + $0x17f8] sm:$0xff]
    %v852 = vld [vmem:[#allocation2 + $0x1800] sm:$0xff]
    %v853 = vld [vmem:[#allocation2 + $0x1808] sm:$0xff]
    %v854 = vld [vmem:[#allocation2 + $0x1810] sm:$0xff]
    %v855 = vld [vmem:[#allocation2 + $0x1818] sm:$0xff]
    %v856 = vld [vmem:[#allocation2 + $0x1820] sm:$0xff]
    %v857 = vld [vmem:[#allocation2 + $0x1828] sm:$0xff]
    %v858 = vld [vmem:[#allocation2 + $0x1830] sm:$0xff]
    %v859 = vld [vmem:[#allocation2 + $0x1838] sm:$0xff]
    %v860 = vld [vmem:[#allocation2 + $0x1840] sm:$0xff]
    %v861 = vld [vmem:[#allocation2 + $0x1848] sm:$0xff]
    %v862 = vld [vmem:[#allocation2 + $0x1850] sm:$0xff]
    %v863 = vld [vmem:[#allocation2 + $0x1858] sm:$0xff]
    %v864 = vld [vmem:[#allocation2 + $0x1860] sm:$0xff]
    %v865 = vld [vmem:[#allocation2 + $0x1868] sm:$0xff]
    %v866 = vld [vmem:[#allocation2 + $0x1870] sm:$0xff]
    %v867 = vld [vmem:[#allocation2 + $0x1878] sm:$0xff]
    %v872 = vunpack.c.l.b16 %v80
    %v873 = vunpack.c.h.b16 %v80
    %v874 = vunpack.c.l.b16 %v81
    %v875 = vunpack.c.h.b16 %v81
    %v876 = vunpack.c.l.b16 %v82
    %v877 = vunpack.c.h.b16 %v82
    %v878 = vunpack.c.l.b16 %v83
    %v879 = vpack.c.b16 %v872, %v872
    %v880 = vpack.c.b16 %v873, %v873
    %v881 = vpack.c.b16 %v874, %v874
    %v882 = vpack.c.b16 %v875, %v875
    %v883 = vpack.c.b16 %v876, %v876
    %v884 = vpack.c.b16 %v877, %v877
    %v885 = vpack.c.b16 %v878, %v878
    %v1676 = vunpack.c.l.b16 %v84
    %v1677 = vunpack.c.h.b16 %v84
    %v1678 = vunpack.c.l.b16 %v85
    %v1679 = vunpack.c.h.b16 %v85
    %v1680 = vunpack.c.l.b16 %v86
    %v1681 = vunpack.c.h.b16 %v86
    %v1682 = vunpack.c.l.b16 %v87
    %v1683 = vunpack.c.h.b16 %v87
    %v1684 = vunpack.c.l.b16 %v88
    %v1685 = vunpack.c.h.b16 %v88
    %v1686 = vunpack.c.l.b16 %v89
    %v1687 = vunpack.c.h.b16 %v89
    %v1688 = vunpack.c.l.b16 %v90
    %v1689 = vunpack.c.h.b16 %v90
    %v1690 = vunpack.c.l.b16 %v91
    %v1691 = vunpack.c.h.b16 %v91
    %v1692 = vunpack.c.l.b16 %v92
    %v1693 = vunpack.c.h.b16 %v92
    %v1694 = vunpack.c.l.b16 %v93
    %v1695 = vunpack.c.h.b16 %v93
    %v1696 = vunpack.c.l.b16 %v94
    %v1697 = vunpack.c.h.b16 %v94
    %v1698 = vunpack.c.l.b16 %v95
    %v1699 = vunpack.c.h.b16 %v95
    %v1700 = vunpack.c.l.b16 %v96
    %v1701 = vunpack.c.h.b16 %v96
    %v1702 = vunpack.c.l.b16 %v97
    %v1703 = vunpack.c.h.b16 %v97
    %v1704 = vunpack.c.l.b16 %v98
    %v1705 = vunpack.c.h.b16 %v98
    %v1706 = vunpack.c.l.b16 %v99
    %v1707 = vunpack.c.h.b16 %v99
    %v1708 = vunpack.c.l.b16 %v100
    %v1709 = vunpack.c.h.b16 %v100
    %v1710 = vunpack.c.l.b16 %v101
    %v1711 = vunpack.c.h.b16 %v101
    %v1712 = vunpack.c.l.b16 %v102
    %v1713 = vunpack.c.h.b16 %v102
    %v1714 = vunpack.c.l.b16 %v103
    %v1715 = vunpack.c.h.b16 %v103
    %v1716 = vunpack.c.l.b16 %v104
    %v1717 = vunpack.c.h.b16 %v104
    %v1718 = vunpack.c.l.b16 %v105
    %v1719 = vunpack.c.h.b16 %v105
    %v1720 = vunpack.c.l.b16 %v106
    %v1721 = vunpack.c.h.b16 %v106
    %v1722 = vunpack.c.l.b16 %v107
    %v1723 = vunpack.c.h.b16 %v107
    %v1724 = vunpack.c.l.b16 %v108
    %v1725 = vunpack.c.h.b16 %v108
    %v1726 = vunpack.c.l.b16 %v109
    %v1727 = vunpack.c.h.b16 %v109
    %v1728 = vunpack.c.l.b16 %v110
    %v1729 = vunpack.c.h.b16 %v110
    %v1730 = vunpack.c.l.b16 %v111
    %v1731 = vunpack.c.h.b16 %v111
    %v1732 = vunpack.c.l.b16 %v112
    %v1733 = vunpack.c.h.b16 %v112
    %v1734 = vunpack.c.l.b16 %v113
    %v1735 = vunpack.c.h.b16 %v113
    %v1736 = vunpack.c.l.b16 %v114
    %v1737 = vunpack.c.h.b16 %v114
    %v1738 = vunpack.c.l.b16 %v115
    %v1739 = vunpack.c.h.b16 %v115
    %v1740 = vunpack.c.l.b16 %v116
    %v1741 = vunpack.c.h.b16 %v116
    %v1742 = vunpack.c.l.b16 %v117
    %v1743 = vunpack.c.h.b16 %v117
    %v1744 = vunpack.c.l.b16 %v118
    %v1745 = vunpack.c.h.b16 %v118
    %v1746 = vunpack.c.l.b16 %v119
    %v1747 = vunpack.c.h.b16 %v119
    %v1748 = vunpack.c.l.b16 %v120
    %v1749 = vunpack.c.h.b16 %v120
    %v1750 = vunpack.c.l.b16 %v121
    %v1751 = vunpack.c.h.b16 %v121
    %v1752 = vunpack.c.l.b16 %v122
    %v1753 = vunpack.c.h.b16 %v122
    %v1754 = vunpack.c.l.b16 %v123
    %v1755 = vunpack.c.h.b16 %v123
    %v1756 = vunpack.c.l.b16 %v124
    %v1757 = vunpack.c.h.b16 %v124
    %v1758 = vunpack.c.l.b16 %v125
    %v1759 = vunpack.c.h.b16 %v125
    %v1760 = vunpack.c.l.b16 %v126
    %v1761 = vunpack.c.h.b16 %v126
    %v1762 = vunpack.c.l.b16 %v127
    %v1763 = vunpack.c.h.b16 %v127
    %v1764 = vunpack.c.l.b16 %v128
    %v1765 = vunpack.c.h.b16 %v128
    %v1766 = vunpack.c.l.b16 %v129
    %v1767 = vunpack.c.h.b16 %v129
    %v1768 = vunpack.c.l.b16 %v130
    %v1769 = vunpack.c.h.b16 %v130
    %v1770 = vunpack.c.l.b16 %v131
    %v1771 = vunpack.c.h.b16 %v131
    %v1772 = vunpack.c.l.b16 %v132
    %v1773 = vunpack.c.h.b16 %v132
    %v1774 = vunpack.c.l.b16 %v133
    %v1775 = vunpack.c.h.b16 %v133
    %v1776 = vunpack.c.l.b16 %v134
    %v1777 = vunpack.c.h.b16 %v134
    %v1778 = vunpack.c.l.b16 %v135
    %v1779 = vunpack.c.h.b16 %v135
    %v1780 = vunpack.c.l.b16 %v136
    %v1781 = vunpack.c.h.b16 %v136
    %v1782 = vunpack.c.l.b16 %v137
    %v1783 = vunpack.c.h.b16 %v137
    %v1784 = vunpack.c.l.b16 %v138
    %v1785 = vunpack.c.h.b16 %v138
    %v1786 = vunpack.c.l.b16 %v139
    %v1787 = vunpack.c.h.b16 %v139
    %v1788 = vunpack.c.l.b16 %v140
    %v1789 = vunpack.c.h.b16 %v140
    %v1790 = vunpack.c.l.b16 %v141
    %v1791 = vunpack.c.h.b16 %v141
    %v1792 = vunpack.c.l.b16 %v142
    %v1793 = vunpack.c.h.b16 %v142
    %v1794 = vunpack.c.l.b16 %v143
    %v1795 = vunpack.c.h.b16 %v143
    %v1796 = vunpack.c.l.b16 %v144
    %v1797 = vunpack.c.h.b16 %v144
    %v1798 = vunpack.c.l.b16 %v145
    %v1799 = vunpack.c.h.b16 %v145
    %v1800 = vunpack.c.l.b16 %v146
    %v1801 = vunpack.c.h.b16 %v146
    %v1802 = vunpack.c.l.b16 %v147
    %v1803 = vunpack.c.h.b16 %v147
    %v1804 = vunpack.c.l.b16 %v148
    %v1805 = vunpack.c.h.b16 %v148
    %v1806 = vunpack.c.l.b16 %v149
    %v1807 = vunpack.c.h.b16 %v149
    %v1808 = vunpack.c.l.b16 %v150
    %v1809 = vunpack.c.h.b16 %v150
    %v1810 = vunpack.c.l.b16 %v151
    %v1811 = vunpack.c.h.b16 %v151
    %v1812 = vunpack.c.l.b16 %v152
    %v1813 = vunpack.c.h.b16 %v152
    %v1814 = vunpack.c.l.b16 %v153
    %v1815 = vunpack.c.h.b16 %v153
    %v1816 = vunpack.c.l.b16 %v154
    %v1817 = vunpack.c.h.b16 %v154
    %v1818 = vunpack.c.l.b16 %v155
    %v1819 = vunpack.c.h.b16 %v155
    %v1820 = vunpack.c.l.b16 %v156
    %v1821 = vunpack.c.h.b16 %v156
    %v1822 = vunpack.c.l.b16 %v157
    %v1823 = vunpack.c.h.b16 %v157
    %v1824 = vunpack.c.l.b16 %v158
    %v1825 = vunpack.c.h.b16 %v158
    %v1826 = vunpack.c.l.b16 %v159
    %v1827 = vunpack.c.h.b16 %v159
    %v1828 = vunpack.c.l.b16 %v160
    %v1829 = vunpack.c.h.b16 %v160
    %v1830 = vunpack.c.l.b16 %v161
    %v1831 = vunpack.c.h.b16 %v161
    %v1832 = vunpack.c.l.b16 %v162
    %v1833 = vunpack.c.h.b16 %v162
    %v1834 = vunpack.c.l.b16 %v163
    %v1835 = vunpack.c.h.b16 %v163
    %v1836 = vunpack.c.l.b16 %v164
    %v1837 = vunpack.c.h.b16 %v164
    %v1838 = vunpack.c.l.b16 %v165
    %v1839 = vunpack.c.h.b16 %v165
    %v1840 = vunpack.c.l.b16 %v166
    %v1841 = vunpack.c.h.b16 %v166
    %v1842 = vunpack.c.l.b16 %v167
    %v1843 = vunpack.c.h.b16 %v167
    %v1844 = vunpack.c.l.b16 %v168
    %v1845 = vunpack.c.h.b16 %v168
    %v1846 = vunpack.c.l.b16 %v169
    %v1847 = vunpack.c.h.b16 %v169
    %v1848 = vunpack.c.l.b16 %v170
    %v1849 = vunpack.c.h.b16 %v170
    %v1850 = vunpack.c.l.b16 %v171
    %v1851 = vunpack.c.h.b16 %v171
    %v1852 = vunpack.c.l.b16 %v172
    %v1853 = vunpack.c.h.b16 %v172
    %v1854 = vunpack.c.l.b16 %v173
    %v1855 = vunpack.c.h.b16 %v173
    %v1856 = vunpack.c.l.b16 %v174
    %v1857 = vunpack.c.h.b16 %v174
    %v1858 = vunpack.c.l.b16 %v175
    %v1859 = vunpack.c.h.b16 %v175
    %v1860 = vunpack.c.l.b16 %v176
    %v1861 = vunpack.c.h.b16 %v176
    %v1862 = vunpack.c.l.b16 %v177
    %v1863 = vunpack.c.h.b16 %v177
    %v1864 = vunpack.c.l.b16 %v178
    %v1865 = vunpack.c.h.b16 %v178
    %v1866 = vunpack.c.l.b16 %v179
    %v1867 = vunpack.c.h.b16 %v179
    %v1868 = vunpack.c.l.b16 %v180
    %v1869 = vunpack.c.h.b16 %v180
    %v1870 = vunpack.c.l.b16 %v181
    %v1871 = vunpack.c.h.b16 %v181
    %v1872 = vunpack.c.l.b16 %v182
    %v1873 = vunpack.c.h.b16 %v182
    %v1874 = vunpack.c.l.b16 %v183
    %v1875 = vunpack.c.h.b16 %v183
    %v1876 = vunpack.c.l.b16 %v184
    %v1877 = vunpack.c.h.b16 %v184
    %v1878 = vunpack.c.l.b16 %v185
    %v1879 = vunpack.c.h.b16 %v185
    %v1880 = vunpack.c.l.b16 %v186
    %v1881 = vunpack.c.h.b16 %v186
    %v1882 = vunpack.c.l.b16 %v187
    %v1883 = vunpack.c.h.b16 %v187
    %v1884 = vunpack.c.l.b16 %v188
    %v1885 = vunpack.c.h.b16 %v188
    %v1886 = vunpack.c.l.b16 %v189
    %v1887 = vunpack.c.h.b16 %v189
    %v1888 = vunpack.c.l.b16 %v190
    %v1889 = vunpack.c.h.b16 %v190
    %v1890 = vunpack.c.l.b16 %v191
    %v1891 = vunpack.c.h.b16 %v191
    %v1892 = vunpack.c.l.b16 %v192
    %v1893 = vunpack.c.h.b16 %v192
    %v1894 = vunpack.c.l.b16 %v193
    %v1895 = vunpack.c.h.b16 %v193
    %v1896 = vunpack.c.l.b16 %v194
    %v1897 = vunpack.c.h.b16 %v194
    %v1898 = vunpack.c.l.b16 %v195
    %v1899 = vunpack.c.h.b16 %v195
    %v1900 = vunpack.c.l.b16 %v196
    %v1901 = vunpack.c.h.b16 %v196
    %v1902 = vunpack.c.l.b16 %v197
    %v1903 = vunpack.c.h.b16 %v197
    %v1904 = vunpack.c.l.b16 %v198
    %v1905 = vunpack.c.h.b16 %v198
    %v1906 = vunpack.c.l.b16 %v199
    %v1907 = vunpack.c.h.b16 %v199
    %v1908 = vunpack.c.l.b16 %v200
    %v1909 = vunpack.c.h.b16 %v200
    %v1910 = vunpack.c.l.b16 %v201
    %v1911 = vunpack.c.h.b16 %v201
    %v1912 = vunpack.c.l.b16 %v202
    %v1913 = vunpack.c.h.b16 %v202
    %v1914 = vunpack.c.l.b16 %v203
    %v1915 = vunpack.c.h.b16 %v203
    %v1916 = vunpack.c.l.b16 %v204
    %v1917 = vunpack.c.h.b16 %v204
    %v1918 = vunpack.c.l.b16 %v205
    %v1919 = vunpack.c.h.b16 %v205
    %v1920 = vunpack.c.l.b16 %v206
    %v1921 = vunpack.c.h.b16 %v206
    %v1922 = vunpack.c.l.b16 %v207
    %v1923 = vunpack.c.h.b16 %v207
    %v1924 = vunpack.c.l.b16 %v208
    %v1925 = vunpack.c.h.b16 %v208
    %v1926 = vunpack.c.l.b16 %v209
    %v1927 = vunpack.c.h.b16 %v209
    %v1928 = vunpack.c.l.b16 %v210
    %v1929 = vunpack.c.h.b16 %v210
    %v1930 = vunpack.c.l.b16 %v211
    %v1931 = vunpack.c.h.b16 %v211
    %v1932 = vunpack.c.l.b16 %v212
    %v1933 = vunpack.c.h.b16 %v212
    %v1934 = vunpack.c.l.b16 %v213
    %v1935 = vunpack.c.h.b16 %v213
    %v1936 = vunpack.c.l.b16 %v214
    %v1937 = vunpack.c.h.b16 %v214
    %v1938 = vunpack.c.l.b16 %v215
    %v1939 = vunpack.c.h.b16 %v215
    %v1940 = vunpack.c.l.b16 %v216
    %v1941 = vunpack.c.h.b16 %v216
    %v1942 = vunpack.c.l.b16 %v217
    %v1943 = vunpack.c.h.b16 %v217
    %v1944 = vunpack.c.l.b16 %v218
    %v1945 = vunpack.c.h.b16 %v218
    %v1946 = vunpack.c.l.b16 %v219
    %v1947 = vunpack.c.h.b16 %v219
    %v1948 = vunpack.c.l.b16 %v220
    %v1949 = vunpack.c.h.b16 %v220
    %v1950 = vunpack.c.l.b16 %v221
    %v1951 = vunpack.c.h.b16 %v221
    %v1952 = vunpack.c.l.b16 %v222
    %v1953 = vunpack.c.h.b16 %v222
    %v1954 = vunpack.c.l.b16 %v223
    %v1955 = vunpack.c.h.b16 %v223
    %v1956 = vunpack.c.l.b16 %v224
    %v1957 = vunpack.c.h.b16 %v224
    %v1958 = vunpack.c.l.b16 %v225
    %v1959 = vunpack.c.h.b16 %v225
    %v1960 = vunpack.c.l.b16 %v226
    %v1961 = vunpack.c.h.b16 %v226
    %v1962 = vunpack.c.l.b16 %v227
    %v1963 = vunpack.c.h.b16 %v227
    %v1964 = vunpack.c.l.b16 %v228
    %v1965 = vunpack.c.h.b16 %v228
    %v1966 = vunpack.c.l.b16 %v229
    %v1967 = vunpack.c.h.b16 %v229
    %v1968 = vunpack.c.l.b16 %v230
    %v1969 = vunpack.c.h.b16 %v230
    %v1970 = vunpack.c.l.b16 %v231
    %v1971 = vunpack.c.h.b16 %v231
    %v1972 = vunpack.c.l.b16 %v232
    %v1973 = vunpack.c.h.b16 %v232
    %v1974 = vunpack.c.l.b16 %v233
    %v1975 = vunpack.c.h.b16 %v233
    %v1976 = vunpack.c.l.b16 %v234
    %v1977 = vunpack.c.h.b16 %v234
    %v1978 = vunpack.c.l.b16 %v235
    %v1979 = vunpack.c.h.b16 %v235
    %v1980 = vunpack.c.l.b16 %v236
    %v1981 = vunpack.c.h.b16 %v236
    %v1982 = vunpack.c.l.b16 %v237
    %v1983 = vunpack.c.h.b16 %v237
    %v1984 = vunpack.c.l.b16 %v238
    %v1985 = vunpack.c.h.b16 %v238
    %v1986 = vunpack.c.l.b16 %v239
    %v1987 = vunpack.c.h.b16 %v239
    %v1988 = vunpack.c.l.b16 %v240
    %v1989 = vunpack.c.h.b16 %v240
    %v1990 = vunpack.c.l.b16 %v241
    %v1991 = vunpack.c.h.b16 %v241
    %v1992 = vunpack.c.l.b16 %v242
    %v1993 = vunpack.c.h.b16 %v242
    %v1994 = vunpack.c.l.b16 %v243
    %v1995 = vunpack.c.h.b16 %v243
    %v1996 = vunpack.c.l.b16 %v244
    %v1997 = vunpack.c.h.b16 %v244
    %v1998 = vunpack.c.l.b16 %v245
    %v1999 = vunpack.c.h.b16 %v245
    %v2000 = vunpack.c.l.b16 %v246
    %v2001 = vunpack.c.h.b16 %v246
    %v2002 = vunpack.c.l.b16 %v247
    %v2003 = vunpack.c.h.b16 %v247
    %v2004 = vunpack.c.l.b16 %v248
    %v2005 = vunpack.c.h.b16 %v248
    %v2006 = vunpack.c.l.b16 %v249
    %v2007 = vunpack.c.h.b16 %v249
    %v2008 = vunpack.c.l.b16 %v250
    %v2009 = vunpack.c.h.b16 %v250
    %v2010 = vunpack.c.l.b16 %v251
    %v2011 = vunpack.c.h.b16 %v251
    %v2012 = vunpack.c.l.b16 %v252
    %v2013 = vunpack.c.h.b16 %v252
    %v2014 = vunpack.c.l.b16 %v253
    %v2015 = vunpack.c.h.b16 %v253
    %v2016 = vunpack.c.l.b16 %v254
    %v2017 = vunpack.c.h.b16 %v254
    %v2018 = vunpack.c.l.b16 %v255
    %v2019 = vunpack.c.h.b16 %v255
    %v2020 = vunpack.c.l.b16 %v256
    %v2021 = vunpack.c.h.b16 %v256
    %v2022 = vunpack.c.l.b16 %v257
    %v2023 = vunpack.c.h.b16 %v257
    %v2024 = vunpack.c.l.b16 %v258
    %v2025 = vunpack.c.h.b16 %v258
    %v2026 = vunpack.c.l.b16 %v259
    %v2027 = vunpack.c.h.b16 %v259
    %v2028 = vunpack.c.l.b16 %v260
    %v2029 = vunpack.c.h.b16 %v260
    %v2030 = vunpack.c.l.b16 %v261
    %v2031 = vunpack.c.h.b16 %v261
    %v2032 = vunpack.c.l.b16 %v262
    %v2033 = vunpack.c.h.b16 %v262
    %v2034 = vunpack.c.l.b16 %v263
    %v2035 = vunpack.c.h.b16 %v263
    %v2036 = vunpack.c.l.b16 %v264
    %v2037 = vunpack.c.h.b16 %v264
    %v2038 = vunpack.c.l.b16 %v265
    %v2039 = vunpack.c.h.b16 %v265
    %v2040 = vunpack.c.l.b16 %v266
    %v2041 = vunpack.c.h.b16 %v266
    %v2042 = vunpack.c.l.b16 %v267
    %v2043 = vunpack.c.h.b16 %v267
    %v2044 = vunpack.c.l.b16 %v268
    %v2045 = vunpack.c.h.b16 %v268
    %v2046 = vunpack.c.l.b16 %v269
    %v2047 = vunpack.c.h.b16 %v269
    %v2048 = vunpack.c.l.b16 %v270
    %v2049 = vunpack.c.h.b16 %v270
    %v2050 = vunpack.c.l.b16 %v271
    %v2051 = vunpack.c.h.b16 %v271
    %v2052 = vunpack.c.l.b16 %v272
    %v2053 = vunpack.c.h.b16 %v272
    %v2054 = vunpack.c.l.b16 %v273
    %v2055 = vunpack.c.h.b16 %v273
    %v2056 = vunpack.c.l.b16 %v274
    %v2057 = vunpack.c.h.b16 %v274
    %v2058 = vunpack.c.l.b16 %v275
    %v2059 = vunpack.c.h.b16 %v275
    %v2060 = vunpack.c.l.b16 %v276
    %v2061 = vunpack.c.h.b16 %v276
    %v2062 = vunpack.c.l.b16 %v277
    %v2063 = vunpack.c.h.b16 %v277
    %v2064 = vunpack.c.l.b16 %v278
    %v2065 = vunpack.c.h.b16 %v278
    %v2066 = vunpack.c.l.b16 %v279
    %v2067 = vunpack.c.h.b16 %v279
    %v2068 = vunpack.c.l.b16 %v280
    %v2069 = vunpack.c.h.b16 %v280
    %v2070 = vunpack.c.l.b16 %v281
    %v2071 = vunpack.c.h.b16 %v281
    %v2072 = vunpack.c.l.b16 %v282
    %v2073 = vunpack.c.h.b16 %v282
    %v2074 = vunpack.c.l.b16 %v283
    %v2075 = vunpack.c.h.b16 %v283
    %v2076 = vunpack.c.l.b16 %v284
    %v2077 = vunpack.c.h.b16 %v284
    %v2078 = vunpack.c.l.b16 %v285
    %v2079 = vunpack.c.h.b16 %v285
    %v2080 = vunpack.c.l.b16 %v286
    %v2081 = vunpack.c.h.b16 %v286
    %v2082 = vunpack.c.l.b16 %v287
    %v2083 = vunpack.c.h.b16 %v287
    %v2084 = vunpack.c.l.b16 %v288
    %v2085 = vunpack.c.h.b16 %v288
    %v2086 = vunpack.c.l.b16 %v289
    %v2087 = vunpack.c.h.b16 %v289
    %v2088 = vunpack.c.l.b16 %v290
    %v2089 = vunpack.c.h.b16 %v290
    %v2090 = vunpack.c.l.b16 %v291
    %v2091 = vunpack.c.h.b16 %v291
    %v2092 = vunpack.c.l.b16 %v292
    %v2093 = vunpack.c.h.b16 %v292
    %v2094 = vunpack.c.l.b16 %v293
    %v2095 = vunpack.c.h.b16 %v293
    %v2096 = vunpack.c.l.b16 %v294
    %v2097 = vunpack.c.h.b16 %v294
    %v2098 = vunpack.c.l.b16 %v295
    %v2099 = vunpack.c.h.b16 %v295
    %v2100 = vunpack.c.l.b16 %v296
    %v2101 = vunpack.c.h.b16 %v296
    %v2102 = vunpack.c.l.b16 %v297
    %v2103 = vunpack.c.h.b16 %v297
    %v2104 = vunpack.c.l.b16 %v298
    %v2105 = vunpack.c.h.b16 %v298
    %v2106 = vunpack.c.l.b16 %v299
    %v2107 = vunpack.c.h.b16 %v299
    %v2108 = vunpack.c.l.b16 %v300
    %v2109 = vunpack.c.h.b16 %v300
    %v2110 = vunpack.c.l.b16 %v301
    %v2111 = vunpack.c.h.b16 %v301
    %v2112 = vunpack.c.l.b16 %v302
    %v2113 = vunpack.c.h.b16 %v302
    %v2114 = vunpack.c.l.b16 %v303
    %v2115 = vunpack.c.h.b16 %v303
    %v2116 = vunpack.c.l.b16 %v304
    %v2117 = vunpack.c.h.b16 %v304
    %v2118 = vunpack.c.l.b16 %v305
    %v2119 = vunpack.c.h.b16 %v305
    %v2120 = vunpack.c.l.b16 %v306
    %v2121 = vunpack.c.h.b16 %v306
    %v2122 = vunpack.c.l.b16 %v307
    %v2123 = vunpack.c.h.b16 %v307
    %v2124 = vunpack.c.l.b16 %v308
    %v2125 = vunpack.c.h.b16 %v308
    %v2126 = vunpack.c.l.b16 %v309
    %v2127 = vunpack.c.h.b16 %v309
    %v2128 = vunpack.c.l.b16 %v310
    %v2129 = vunpack.c.h.b16 %v310
    %v2130 = vunpack.c.l.b16 %v311
    %v2131 = vunpack.c.h.b16 %v311
    %v2132 = vunpack.c.l.b16 %v312
    %v2133 = vunpack.c.h.b16 %v312
    %v2134 = vunpack.c.l.b16 %v313
    %v2135 = vunpack.c.h.b16 %v313
    %v2136 = vunpack.c.l.b16 %v314
    %v2137 = vunpack.c.h.b16 %v314
    %v2138 = vunpack.c.l.b16 %v315
    %v2139 = vunpack.c.h.b16 %v315
    %v2140 = vunpack.c.l.b16 %v316
    %v2141 = vunpack.c.h.b16 %v316
    %v2142 = vunpack.c.l.b16 %v317
    %v2143 = vunpack.c.h.b16 %v317
    %v2144 = vunpack.c.l.b16 %v318
    %v2145 = vunpack.c.h.b16 %v318
    %v2146 = vunpack.c.l.b16 %v319
    %v2147 = vunpack.c.h.b16 %v319
    %v2148 = vunpack.c.l.b16 %v320
    %v2149 = vunpack.c.h.b16 %v320
    %v2150 = vunpack.c.l.b16 %v321
    %v2151 = vunpack.c.h.b16 %v321
    %v2152 = vunpack.c.l.b16 %v322
    %v2153 = vunpack.c.h.b16 %v322
    %v2154 = vunpack.c.l.b16 %v323
    %v2155 = vunpack.c.h.b16 %v323
    %v2156 = vunpack.c.l.b16 %v324
    %v2157 = vunpack.c.h.b16 %v324
    %v2158 = vunpack.c.l.b16 %v325
    %v2159 = vunpack.c.h.b16 %v325
    %v2160 = vunpack.c.l.b16 %v326
    %v2161 = vunpack.c.h.b16 %v326
    %v2162 = vunpack.c.l.b16 %v327
    %v2163 = vunpack.c.h.b16 %v327
    %v2164 = vunpack.c.l.b16 %v328
    %v2165 = vunpack.c.h.b16 %v328
    %v2166 = vunpack.c.l.b16 %v329
    %v2167 = vunpack.c.h.b16 %v329
    %v2168 = vunpack.c.l.b16 %v330
    %v2169 = vunpack.c.h.b16 %v330
    %v2170 = vunpack.c.l.b16 %v331
    %v2171 = vunpack.c.h.b16 %v331
    %v2172 = vunpack.c.l.b16 %v332
    %v2173 = vunpack.c.h.b16 %v332
    %v2174 = vunpack.c.l.b16 %v333
    %v2175 = vunpack.c.h.b16 %v333
    %v2176 = vunpack.c.l.b16 %v334
    %v2177 = vunpack.c.h.b16 %v334
    %v2178 = vunpack.c.l.b16 %v335
    %v2179 = vunpack.c.h.b16 %v335
    %v2180 = vunpack.c.l.b16 %v336
    %v2181 = vunpack.c.h.b16 %v336
    %v2182 = vunpack.c.l.b16 %v337
    %v2183 = vunpack.c.h.b16 %v337
    %v2184 = vunpack.c.l.b16 %v338
    %v2185 = vunpack.c.h.b16 %v338
    %v2186 = vunpack.c.l.b16 %v339
    %v2187 = vunpack.c.h.b16 %v339
    %v2188 = vunpack.c.l.b16 %v340
    %v2189 = vunpack.c.h.b16 %v340
    %v2190 = vunpack.c.l.b16 %v341
    %v2191 = vunpack.c.h.b16 %v341
    %v2192 = vunpack.c.l.b16 %v342
    %v2193 = vunpack.c.h.b16 %v342
    %v2194 = vunpack.c.l.b16 %v343
    %v2195 = vunpack.c.h.b16 %v343
    %v2196 = vunpack.c.l.b16 %v344
    %v2197 = vunpack.c.h.b16 %v344
    %v2198 = vunpack.c.l.b16 %v345
    %v2199 = vunpack.c.h.b16 %v345
    %v2200 = vunpack.c.l.b16 %v346
    %v2201 = vunpack.c.h.b16 %v346
    %v2202 = vunpack.c.l.b16 %v347
    %v2203 = vunpack.c.h.b16 %v347
    %v2204 = vunpack.c.l.b16 %v348
    %v2205 = vunpack.c.h.b16 %v348
    %v2206 = vunpack.c.l.b16 %v349
    %v2207 = vunpack.c.h.b16 %v349
    %v2208 = vunpack.c.l.b16 %v350
    %v2209 = vunpack.c.h.b16 %v350
    %v2210 = vunpack.c.l.b16 %v351
    %v2211 = vunpack.c.h.b16 %v351
    %v2212 = vunpack.c.l.b16 %v352
    %v2213 = vunpack.c.h.b16 %v352
    %v2214 = vunpack.c.l.b16 %v353
    %v2215 = vunpack.c.h.b16 %v353
    %v2216 = vunpack.c.l.b16 %v354
    %v2217 = vunpack.c.h.b16 %v354
    %v2218 = vunpack.c.l.b16 %v355
    %v2219 = vunpack.c.h.b16 %v355
    %v2220 = vunpack.c.l.b16 %v356
    %v2221 = vunpack.c.h.b16 %v356
    %v2222 = vunpack.c.l.b16 %v357
    %v2223 = vunpack.c.h.b16 %v357
    %v2224 = vunpack.c.l.b16 %v358
    %v2225 = vunpack.c.h.b16 %v358
    %v2226 = vunpack.c.l.b16 %v359
    %v2227 = vunpack.c.h.b16 %v359
    %v2228 = vunpack.c.l.b16 %v360
    %v2229 = vunpack.c.h.b16 %v360
    %v2230 = vunpack.c.l.b16 %v361
    %v2231 = vunpack.c.h.b16 %v361
    %v2232 = vunpack.c.l.b16 %v362
    %v2233 = vunpack.c.h.b16 %v362
    %v2234 = vunpack.c.l.b16 %v363
    %v2235 = vunpack.c.h.b16 %v363
    %v2236 = vunpack.c.l.b16 %v364
    %v2237 = vunpack.c.h.b16 %v364
    %v2238 = vunpack.c.l.b16 %v365
    %v2239 = vunpack.c.h.b16 %v365
    %v2240 = vunpack.c.l.b16 %v366
    %v2241 = vunpack.c.h.b16 %v366
    %v2242 = vunpack.c.l.b16 %v367
    %v2243 = vunpack.c.h.b16 %v367
    %v2244 = vunpack.c.l.b16 %v368
    %v2245 = vunpack.c.h.b16 %v368
    %v2246 = vunpack.c.l.b16 %v369
    %v2247 = vunpack.c.h.b16 %v369
    %v2248 = vunpack.c.l.b16 %v370
    %v2249 = vunpack.c.h.b16 %v370
    %v2250 = vunpack.c.l.b16 %v371
    %v2251 = vunpack.c.h.b16 %v371
    %v2252 = vunpack.c.l.b16 %v372
    %v2253 = vunpack.c.h.b16 %v372
    %v2254 = vunpack.c.l.b16 %v373
    %v2255 = vunpack.c.h.b16 %v373
    %v2256 = vunpack.c.l.b16 %v374
    %v2257 = vunpack.c.h.b16 %v374
    %v2258 = vunpack.c.l.b16 %v375
    %v2259 = vunpack.c.h.b16 %v375
    %v2260 = vunpack.c.l.b16 %v376
    %v2261 = vunpack.c.h.b16 %v376
    %v2262 = vunpack.c.l.b16 %v377
    %v2263 = vunpack.c.h.b16 %v377
    %v2264 = vunpack.c.l.b16 %v378
    %v2265 = vunpack.c.h.b16 %v378
    %v2266 = vunpack.c.l.b16 %v379
    %v2267 = vunpack.c.h.b16 %v379
    %v2268 = vunpack.c.l.b16 %v380
    %v2269 = vunpack.c.h.b16 %v380
    %v2270 = vunpack.c.l.b16 %v381
    %v2271 = vunpack.c.h.b16 %v381
    %v2272 = vunpack.c.l.b16 %v382
    %v2273 = vunpack.c.h.b16 %v382
    %v2274 = vunpack.c.l.b16 %v383
    %v2275 = vunpack.c.h.b16 %v383
    %v2276 = vunpack.c.l.b16 %v384
    %v2277 = vunpack.c.h.b16 %v384
    %v2278 = vunpack.c.l.b16 %v385
    %v2279 = vunpack.c.h.b16 %v385
    %v2280 = vunpack.c.l.b16 %v386
    %v2281 = vunpack.c.h.b16 %v386
    %v2282 = vunpack.c.l.b16 %v387
    %v2283 = vunpack.c.h.b16 %v387
    %v2284 = vunpack.c.l.b16 %v388
    %v2285 = vunpack.c.h.b16 %v388
    %v2286 = vunpack.c.l.b16 %v389
    %v2287 = vunpack.c.h.b16 %v389
    %v2288 = vunpack.c.l.b16 %v390
    %v2289 = vunpack.c.h.b16 %v390
    %v2290 = vunpack.c.l.b16 %v391
    %v2291 = vunpack.c.h.b16 %v391
    %v2292 = vunpack.c.l.b16 %v392
    %v2293 = vunpack.c.h.b16 %v392
    %v2294 = vunpack.c.l.b16 %v393
    %v2295 = vunpack.c.h.b16 %v393
    %v2296 = vunpack.c.l.b16 %v394
    %v2297 = vunpack.c.h.b16 %v394
    %v2298 = vunpack.c.l.b16 %v395
    %v2299 = vunpack.c.h.b16 %v395
    %v2300 = vunpack.c.l.b16 %v396
    %v2301 = vunpack.c.h.b16 %v396
    %v2302 = vunpack.c.l.b16 %v397
    %v2303 = vunpack.c.h.b16 %v397
    %v2304 = vunpack.c.l.b16 %v398
    %v2305 = vunpack.c.h.b16 %v398
    %v2306 = vunpack.c.l.b16 %v399
    %v2307 = vunpack.c.h.b16 %v399
    %v2308 = vunpack.c.l.b16 %v400
    %v2309 = vunpack.c.h.b16 %v400
    %v2310 = vunpack.c.l.b16 %v401
    %v2311 = vunpack.c.h.b16 %v401
    %v2312 = vunpack.c.l.b16 %v402
    %v2313 = vunpack.c.h.b16 %v402
    %v2314 = vunpack.c.l.b16 %v403
    %v2315 = vunpack.c.h.b16 %v403
    %v2316 = vunpack.c.l.b16 %v404
    %v2317 = vunpack.c.h.b16 %v404
    %v2318 = vunpack.c.l.b16 %v405
    %v2319 = vunpack.c.h.b16 %v405
    %v2320 = vunpack.c.l.b16 %v406
    %v2321 = vunpack.c.h.b16 %v406
    %v2322 = vunpack.c.l.b16 %v407
    %v2323 = vunpack.c.h.b16 %v407
    %v2324 = vunpack.c.l.b16 %v408
    %v2325 = vunpack.c.h.b16 %v408
    %v2326 = vunpack.c.l.b16 %v409
    %v2327 = vunpack.c.h.b16 %v409
    %v2328 = vunpack.c.l.b16 %v410
    %v2329 = vunpack.c.h.b16 %v410
    %v2330 = vunpack.c.l.b16 %v411
    %v2331 = vunpack.c.h.b16 %v411
    %v2332 = vunpack.c.l.b16 %v412
    %v2333 = vunpack.c.h.b16 %v412
    %v2334 = vunpack.c.l.b16 %v413
    %v2335 = vunpack.c.h.b16 %v413
    %v2336 = vunpack.c.l.b16 %v414
    %v2337 = vunpack.c.h.b16 %v414
    %v2338 = vunpack.c.l.b16 %v415
    %v2339 = vunpack.c.h.b16 %v415
    %v2340 = vunpack.c.l.b16 %v416
    %v2341 = vunpack.c.h.b16 %v416
    %v2342 = vunpack.c.l.b16 %v417
    %v2343 = vunpack.c.h.b16 %v417
    %v2344 = vunpack.c.l.b16 %v418
    %v2345 = vunpack.c.h.b16 %v418
    %v2346 = vunpack.c.l.b16 %v419
    %v2347 = vunpack.c.h.b16 %v419
    %v2348 = vunpack.c.l.b16 %v420
    %v2349 = vunpack.c.h.b16 %v420
    %v2350 = vunpack.c.l.b16 %v421
    %v2351 = vunpack.c.h.b16 %v421
    %v2352 = vunpack.c.l.b16 %v422
    %v2353 = vunpack.c.h.b16 %v422
    %v2354 = vunpack.c.l.b16 %v423
    %v2355 = vunpack.c.h.b16 %v423
    %v2356 = vunpack.c.l.b16 %v424
    %v2357 = vunpack.c.h.b16 %v424
    %v2358 = vunpack.c.l.b16 %v425
    %v2359 = vunpack.c.h.b16 %v425
    %v2360 = vunpack.c.l.b16 %v426
    %v2361 = vunpack.c.h.b16 %v426
    %v2362 = vunpack.c.l.b16 %v427
    %v2363 = vunpack.c.h.b16 %v427
    %v2364 = vunpack.c.l.b16 %v428
    %v2365 = vunpack.c.h.b16 %v428
    %v2366 = vunpack.c.l.b16 %v429
    %v2367 = vunpack.c.h.b16 %v429
    %v2368 = vunpack.c.l.b16 %v430
    %v2369 = vunpack.c.h.b16 %v430
    %v2370 = vunpack.c.l.b16 %v431
    %v2371 = vunpack.c.h.b16 %v431
    %v2372 = vunpack.c.l.b16 %v432
    %v2373 = vunpack.c.h.b16 %v432
    %v2374 = vunpack.c.l.b16 %v433
    %v2375 = vunpack.c.h.b16 %v433
    %v2376 = vunpack.c.l.b16 %v434
    %v2377 = vunpack.c.h.b16 %v434
    %v2378 = vunpack.c.l.b16 %v435
    %v2379 = vunpack.c.h.b16 %v435
    %v2380 = vunpack.c.l.b16 %v436
    %v2381 = vunpack.c.h.b16 %v436
    %v2382 = vunpack.c.l.b16 %v437
    %v2383 = vunpack.c.h.b16 %v437
    %v2384 = vunpack.c.l.b16 %v438
    %v2385 = vunpack.c.h.b16 %v438
    %v2386 = vunpack.c.l.b16 %v439
    %v2387 = vunpack.c.h.b16 %v439
    %v2388 = vunpack.c.l.b16 %v440
    %v2389 = vunpack.c.h.b16 %v440
    %v2390 = vunpack.c.l.b16 %v441
    %v2391 = vunpack.c.h.b16 %v441
    %v2392 = vunpack.c.l.b16 %v442
    %v2393 = vunpack.c.h.b16 %v442
    %v2394 = vunpack.c.l.b16 %v443
    %v2395 = vunpack.c.h.b16 %v443
    %v2396 = vunpack.c.l.b16 %v444
    %v2397 = vunpack.c.h.b16 %v444
    %v2398 = vunpack.c.l.b16 %v445
    %v2399 = vunpack.c.h.b16 %v445
    %v2400 = vunpack.c.l.b16 %v446
    %v2401 = vunpack.c.h.b16 %v446
    %v2402 = vunpack.c.l.b16 %v447
    %v2403 = vunpack.c.h.b16 %v447
    %v2404 = vunpack.c.l.b16 %v448
    %v2405 = vunpack.c.h.b16 %v448
    %v2406 = vunpack.c.l.b16 %v449
    %v2407 = vunpack.c.h.b16 %v449
    %v2408 = vunpack.c.l.b16 %v450
    %v2409 = vunpack.c.h.b16 %v450
    %v2410 = vunpack.c.l.b16 %v451
    %v2411 = vunpack.c.h.b16 %v451
    %v2412 = vunpack.c.l.b16 %v452
    %v2413 = vunpack.c.h.b16 %v452
    %v2414 = vunpack.c.l.b16 %v453
    %v2415 = vunpack.c.h.b16 %v453
    %v2416 = vunpack.c.l.b16 %v454
    %v2417 = vunpack.c.h.b16 %v454
    %v2418 = vunpack.c.l.b16 %v455
    %v2419 = vunpack.c.h.b16 %v455
    %v2420 = vunpack.c.l.b16 %v456
    %v2421 = vunpack.c.h.b16 %v456
    %v2422 = vunpack.c.l.b16 %v457
    %v2423 = vunpack.c.h.b16 %v457
    %v2424 = vunpack.c.l.b16 %v458
    %v2425 = vunpack.c.h.b16 %v458
    %v2426 = vunpack.c.l.b16 %v459
    %v2427 = vunpack.c.h.b16 %v459
    %v2428 = vunpack.c.l.b16 %v460
    %v2429 = vunpack.c.h.b16 %v460
    %v2430 = vunpack.c.l.b16 %v461
    %v2431 = vunpack.c.h.b16 %v461
    %v2432 = vunpack.c.l.b16 %v462
    %v2433 = vunpack.c.h.b16 %v462
    %v2434 = vunpack.c.l.b16 %v463
    %v2435 = vunpack.c.h.b16 %v463
    %v2436 = vunpack.c.l.b16 %v464
    %v2437 = vunpack.c.h.b16 %v464
    %v2438 = vunpack.c.l.b16 %v465
    %v2439 = vunpack.c.h.b16 %v465
    %v2440 = vunpack.c.l.b16 %v466
    %v2441 = vunpack.c.h.b16 %v466
    %v2442 = vunpack.c.l.b16 %v467
    %v2443 = vunpack.c.h.b16 %v467
    %v2444 = vunpack.c.l.b16 %v468
    %v2445 = vunpack.c.h.b16 %v468
    %v2446 = vunpack.c.l.b16 %v469
    %v2447 = vunpack.c.h.b16 %v469
    %v2448 = vunpack.c.l.b16 %v470
    %v2449 = vunpack.c.h.b16 %v470
    %v2450 = vunpack.c.l.b16 %v471
    %v2451 = vunpack.c.h.b16 %v471
    %v2452 = vunpack.c.l.b16 %v472
    %v2453 = vunpack.c.h.b16 %v472
    %v2454 = vunpack.c.l.b16 %v473
    %v2455 = vunpack.c.h.b16 %v473
    %v2456 = vunpack.c.l.b16 %v474
    %v2457 = vunpack.c.h.b16 %v474
    %v2458 = vunpack.c.l.b16 %v475
    %v2459 = vunpack.c.h.b16 %v475
    %v2460 = vunpack.c.l.b16 %v476
    %v2461 = vunpack.c.h.b16 %v476
    %v2462 = vunpack.c.l.b16 %v477
    %v2463 = vunpack.c.h.b16 %v477
    %v2464 = vunpack.c.l.b16 %v478
    %v2465 = vunpack.c.h.b16 %v478
    %v2466 = vunpack.c.l.b16 %v479
    %v2467 = vunpack.c.h.b16 %v479
    %v2468 = vunpack.c.l.b16 %v480
    %v2469 = vunpack.c.h.b16 %v480
    %v2470 = vunpack.c.l.b16 %v481
    %v2471 = vunpack.c.h.b16 %v481
    %v2472 = vunpack.c.l.b16 %v482
    %v2473 = vunpack.c.h.b16 %v482
    %v2474 = vunpack.c.l.b16 %v483
    %v2475 = vunpack.c.h.b16 %v483
    %v2476 = vunpack.c.l.b16 %v484
    %v2477 = vunpack.c.h.b16 %v484
    %v2478 = vunpack.c.l.b16 %v485
    %v2479 = vunpack.c.h.b16 %v485
    %v2480 = vunpack.c.l.b16 %v486
    %v2481 = vunpack.c.h.b16 %v486
    %v2482 = vunpack.c.l.b16 %v487
    %v2483 = vunpack.c.h.b16 %v487
    %v2484 = vunpack.c.l.b16 %v488
    %v2485 = vunpack.c.h.b16 %v488
    %v2486 = vunpack.c.l.b16 %v489
    %v2487 = vunpack.c.h.b16 %v489
    %v2488 = vunpack.c.l.b16 %v490
    %v2489 = vunpack.c.h.b16 %v490
    %v2490 = vunpack.c.l.b16 %v491
    %v2491 = vunpack.c.h.b16 %v491
    %v2492 = vunpack.c.l.b16 %v492
    %v2493 = vunpack.c.h.b16 %v492
    %v2494 = vunpack.c.l.b16 %v493
    %v2495 = vunpack.c.h.b16 %v493
    %v2496 = vunpack.c.l.b16 %v494
    %v2497 = vunpack.c.h.b16 %v494
    %v2498 = vunpack.c.l.b16 %v495
    %v2499 = vunpack.c.h.b16 %v495
    %v2500 = vunpack.c.l.b16 %v496
    %v2501 = vunpack.c.h.b16 %v496
    %v2502 = vunpack.c.l.b16 %v497
    %v2503 = vunpack.c.h.b16 %v497
    %v2504 = vunpack.c.l.b16 %v498
    %v2505 = vunpack.c.h.b16 %v498
    %v2506 = vunpack.c.l.b16 %v499
    %v2507 = vunpack.c.h.b16 %v499
    %v2508 = vunpack.c.l.b16 %v500
    %v2509 = vunpack.c.h.b16 %v500
    %v2510 = vunpack.c.l.b16 %v501
    %v2511 = vunpack.c.h.b16 %v501
    %v2512 = vunpack.c.l.b16 %v502
    %v2513 = vunpack.c.h.b16 %v502
    %v2514 = vunpack.c.l.b16 %v503
    %v2515 = vunpack.c.h.b16 %v503
    %v2516 = vunpack.c.l.b16 %v504
    %v2517 = vunpack.c.h.b16 %v504
    %v2518 = vunpack.c.l.b16 %v505
    %v2519 = vunpack.c.h.b16 %v505
    %v2520 = vunpack.c.l.b16 %v506
    %v2521 = vunpack.c.h.b16 %v506
    %v2522 = vunpack.c.l.b16 %v507
    %v2523 = vunpack.c.h.b16 %v507
    %v2524 = vunpack.c.l.b16 %v508
    %v2525 = vunpack.c.h.b16 %v508
    %v2526 = vunpack.c.l.b16 %v509
    %v2527 = vunpack.c.h.b16 %v509
    %v2528 = vunpack.c.l.b16 %v510
    %v2529 = vunpack.c.h.b16 %v510
    %v2530 = vunpack.c.l.b16 %v511
    %v2531 = vunpack.c.h.b16 %v511
    %v2532 = vunpack.c.l.b16 %v512
    %v2533 = vunpack.c.h.b16 %v512
    %v2534 = vunpack.c.l.b16 %v513
    %v2535 = vunpack.c.h.b16 %v513
    %v2536 = vunpack.c.l.b16 %v514
    %v2537 = vunpack.c.h.b16 %v514
    %v2538 = vunpack.c.l.b16 %v515
    %v2539 = vunpack.c.h.b16 %v515
    %v2540 = vunpack.c.l.b16 %v516
    %v2541 = vunpack.c.h.b16 %v516
    %v2542 = vunpack.c.l.b16 %v517
    %v2543 = vunpack.c.h.b16 %v517
    %v2544 = vunpack.c.l.b16 %v518
    %v2545 = vunpack.c.h.b16 %v518
    %v2546 = vunpack.c.l.b16 %v519
    %v2547 = vunpack.c.h.b16 %v519
    %v2548 = vunpack.c.l.b16 %v520
    %v2549 = vunpack.c.h.b16 %v520
    %v2550 = vunpack.c.l.b16 %v521
    %v2551 = vunpack.c.h.b16 %v521
    %v2552 = vunpack.c.l.b16 %v522
    %v2553 = vunpack.c.h.b16 %v522
    %v2554 = vunpack.c.l.b16 %v523
    %v2555 = vunpack.c.h.b16 %v523
    %v2556 = vunpack.c.l.b16 %v524
    %v2557 = vunpack.c.h.b16 %v524
    %v2558 = vunpack.c.l.b16 %v525
    %v2559 = vunpack.c.h.b16 %v525
    %v2560 = vunpack.c.l.b16 %v526
    %v2561 = vunpack.c.h.b16 %v526
    %v2562 = vunpack.c.l.b16 %v527
    %v2563 = vunpack.c.h.b16 %v527
    %v2564 = vunpack.c.l.b16 %v528
    %v2565 = vunpack.c.h.b16 %v528
    %v2566 = vunpack.c.l.b16 %v529
    %v2567 = vunpack.c.h.b16 %v529
    %v2568 = vunpack.c.l.b16 %v530
    %v2569 = vunpack.c.h.b16 %v530
    %v2570 = vunpack.c.l.b16 %v531
    %v2571 = vunpack.c.h.b16 %v531
    %v2572 = vunpack.c.l.b16 %v532
    %v2573 = vunpack.c.h.b16 %v532
    %v2574 = vunpack.c.l.b16 %v533
    %v2575 = vunpack.c.h.b16 %v533
    %v2576 = vunpack.c.l.b16 %v534
    %v2577 = vunpack.c.h.b16 %v534
    %v2578 = vunpack.c.l.b16 %v535
    %v2579 = vunpack.c.h.b16 %v535
    %v2580 = vunpack.c.l.b16 %v536
    %v2581 = vunpack.c.h.b16 %v536
    %v2582 = vunpack.c.l.b16 %v537
    %v2583 = vunpack.c.h.b16 %v537
    %v2584 = vunpack.c.l.b16 %v538
    %v2585 = vunpack.c.h.b16 %v538
    %v2586 = vunpack.c.l.b16 %v539
    %v2587 = vunpack.c.h.b16 %v539
    %v2588 = vunpack.c.l.b16 %v540
    %v2589 = vunpack.c.h.b16 %v540
    %v2590 = vunpack.c.l.b16 %v541
    %v2591 = vunpack.c.h.b16 %v541
    %v2592 = vunpack.c.l.b16 %v542
    %v2593 = vunpack.c.h.b16 %v542
    %v2594 = vunpack.c.l.b16 %v543
    %v2595 = vunpack.c.h.b16 %v543
    %v2596 = vunpack.c.l.b16 %v544
    %v2597 = vunpack.c.h.b16 %v544
    %v2598 = vunpack.c.l.b16 %v545
    %v2599 = vunpack.c.h.b16 %v545
    %v2600 = vunpack.c.l.b16 %v546
    %v2601 = vunpack.c.h.b16 %v546
    %v2602 = vunpack.c.l.b16 %v547
    %v2603 = vunpack.c.h.b16 %v547
    %v2604 = vunpack.c.l.b16 %v548
    %v2605 = vunpack.c.h.b16 %v548
    %v2606 = vunpack.c.l.b16 %v549
    %v2607 = vunpack.c.h.b16 %v549
    %v2608 = vunpack.c.l.b16 %v550
    %v2609 = vunpack.c.h.b16 %v550
    %v2610 = vunpack.c.l.b16 %v551
    %v2611 = vunpack.c.h.b16 %v551
    %v2612 = vunpack.c.l.b16 %v552
    %v2613 = vunpack.c.h.b16 %v552
    %v2614 = vunpack.c.l.b16 %v553
    %v2615 = vunpack.c.h.b16 %v553
    %v2616 = vunpack.c.l.b16 %v554
    %v2617 = vunpack.c.h.b16 %v554
    %v2618 = vunpack.c.l.b16 %v555
    %v2619 = vunpack.c.h.b16 %v555
    %v2620 = vunpack.c.l.b16 %v556
    %v2621 = vunpack.c.h.b16 %v556
    %v2622 = vunpack.c.l.b16 %v557
    %v2623 = vunpack.c.h.b16 %v557
    %v2624 = vunpack.c.l.b16 %v558
    %v2625 = vunpack.c.h.b16 %v558
    %v2626 = vunpack.c.l.b16 %v559
    %v2627 = vunpack.c.h.b16 %v559
    %v2628 = vunpack.c.l.b16 %v560
    %v2629 = vunpack.c.h.b16 %v560
    %v2630 = vunpack.c.l.b16 %v561
    %v2631 = vunpack.c.h.b16 %v561
    %v2632 = vunpack.c.l.b16 %v562
    %v2633 = vunpack.c.h.b16 %v562
    %v2634 = vunpack.c.l.b16 %v563
    %v2635 = vunpack.c.h.b16 %v563
    %v2636 = vunpack.c.l.b16 %v564
    %v2637 = vunpack.c.h.b16 %v564
    %v2638 = vunpack.c.l.b16 %v565
    %v2639 = vunpack.c.h.b16 %v565
    %v2640 = vunpack.c.l.b16 %v566
    %v2641 = vunpack.c.h.b16 %v566
    %v2642 = vunpack.c.l.b16 %v567
    %v2643 = vunpack.c.h.b16 %v567
    %v2644 = vunpack.c.l.b16 %v568
    %v2645 = vunpack.c.h.b16 %v568
    %v2646 = vunpack.c.l.b16 %v569
    %v2647 = vunpack.c.h.b16 %v569
    %v2648 = vunpack.c.l.b16 %v570
    %v2649 = vunpack.c.h.b16 %v570
    %v2650 = vunpack.c.l.b16 %v571
    %v2651 = vunpack.c.h.b16 %v571
    %v2652 = vunpack.c.l.b16 %v572
    %v2653 = vunpack.c.h.b16 %v572
    %v2654 = vunpack.c.l.b16 %v573
    %v2655 = vunpack.c.h.b16 %v573
    %v2656 = vunpack.c.l.b16 %v574
    %v2657 = vunpack.c.h.b16 %v574
    %v2658 = vunpack.c.l.b16 %v575
    %v2659 = vunpack.c.h.b16 %v575
    %v2660 = vunpack.c.l.b16 %v576
    %v2661 = vunpack.c.h.b16 %v576
    %v2662 = vunpack.c.l.b16 %v577
    %v2663 = vunpack.c.h.b16 %v577
    %v2664 = vunpack.c.l.b16 %v578
    %v2665 = vunpack.c.h.b16 %v578
    %v2666 = vunpack.c.l.b16 %v579
    %v2667 = vunpack.c.h.b16 %v579
    %v2668 = vunpack.c.l.b16 %v580
    %v2669 = vunpack.c.h.b16 %v580
    %v2670 = vunpack.c.l.b16 %v581
    %v2671 = vunpack.c.h.b16 %v581
    %v2672 = vunpack.c.l.b16 %v582
    %v2673 = vunpack.c.h.b16 %v582
    %v2674 = vunpack.c.l.b16 %v583
    %v2675 = vunpack.c.h.b16 %v583
    %v2676 = vunpack.c.l.b16 %v584
    %v2677 = vunpack.c.h.b16 %v584
    %v2678 = vunpack.c.l.b16 %v585
    %v2679 = vunpack.c.h.b16 %v585
    %v2680 = vunpack.c.l.b16 %v586
    %v2681 = vunpack.c.h.b16 %v586
    %v2682 = vunpack.c.l.b16 %v587
    %v2683 = vunpack.c.h.b16 %v587
    %v2684 = vunpack.c.l.b16 %v588
    %v2685 = vunpack.c.h.b16 %v588
    %v2686 = vunpack.c.l.b16 %v589
    %v2687 = vunpack.c.h.b16 %v589
    %v2688 = vunpack.c.l.b16 %v590
    %v2689 = vunpack.c.h.b16 %v590
    %v2690 = vunpack.c.l.b16 %v591
    %v2691 = vunpack.c.h.b16 %v591
    %v2692 = vunpack.c.l.b16 %v592
    %v2693 = vunpack.c.h.b16 %v592
    %v2694 = vunpack.c.l.b16 %v593
    %v2695 = vunpack.c.h.b16 %v593
    %v2696 = vunpack.c.l.b16 %v594
    %v2697 = vunpack.c.h.b16 %v594
    %v2698 = vunpack.c.l.b16 %v595
    %v2699 = vunpack.c.h.b16 %v595
    %v2700 = vunpack.c.l.b16 %v596
    %v2701 = vunpack.c.h.b16 %v596
    %v2702 = vunpack.c.l.b16 %v597
    %v2703 = vunpack.c.h.b16 %v597
    %v2704 = vunpack.c.l.b16 %v598
    %v2705 = vunpack.c.h.b16 %v598
    %v2706 = vunpack.c.l.b16 %v599
    %v2707 = vunpack.c.h.b16 %v599
    %v2708 = vunpack.c.l.b16 %v600
    %v2709 = vunpack.c.h.b16 %v600
    %v2710 = vunpack.c.l.b16 %v601
    %v2711 = vunpack.c.h.b16 %v601
    %v2712 = vunpack.c.l.b16 %v602
    %v2713 = vunpack.c.h.b16 %v602
    %v2714 = vunpack.c.l.b16 %v603
    %v2715 = vunpack.c.h.b16 %v603
    %v2716 = vunpack.c.l.b16 %v604
    %v2717 = vunpack.c.h.b16 %v604
    %v2718 = vunpack.c.l.b16 %v605
    %v2719 = vunpack.c.h.b16 %v605
    %v2720 = vunpack.c.l.b16 %v606
    %v2721 = vunpack.c.h.b16 %v606
    %v2722 = vunpack.c.l.b16 %v607
    %v2723 = vunpack.c.h.b16 %v607
    %v2724 = vunpack.c.l.b16 %v608
    %v2725 = vunpack.c.h.b16 %v608
    %v2726 = vunpack.c.l.b16 %v609
    %v2727 = vunpack.c.h.b16 %v609
    %v2728 = vunpack.c.l.b16 %v610
    %v2729 = vunpack.c.h.b16 %v610
    %v2730 = vunpack.c.l.b16 %v611
    %v2731 = vunpack.c.h.b16 %v611
    %v2732 = vunpack.c.l.b16 %v612
    %v2733 = vunpack.c.h.b16 %v612
    %v2734 = vunpack.c.l.b16 %v613
    %v2735 = vunpack.c.h.b16 %v613
    %v2736 = vunpack.c.l.b16 %v614
    %v2737 = vunpack.c.h.b16 %v614
    %v2738 = vunpack.c.l.b16 %v615
    %v2739 = vunpack.c.h.b16 %v615
    %v2740 = vunpack.c.l.b16 %v616
    %v2741 = vunpack.c.h.b16 %v616
    %v2742 = vunpack.c.l.b16 %v617
    %v2743 = vunpack.c.h.b16 %v617
    %v2744 = vunpack.c.l.b16 %v618
    %v2745 = vunpack.c.h.b16 %v618
    %v2746 = vunpack.c.l.b16 %v619
    %v2747 = vunpack.c.h.b16 %v619
    %v2748 = vunpack.c.l.b16 %v620
    %v2749 = vunpack.c.h.b16 %v620
    %v2750 = vunpack.c.l.b16 %v621
    %v2751 = vunpack.c.h.b16 %v621
    %v2752 = vunpack.c.l.b16 %v622
    %v2753 = vunpack.c.h.b16 %v622
    %v2754 = vunpack.c.l.b16 %v623
    %v2755 = vunpack.c.h.b16 %v623
    %v2756 = vunpack.c.l.b16 %v624
    %v2757 = vunpack.c.h.b16 %v624
    %v2758 = vunpack.c.l.b16 %v625
    %v2759 = vunpack.c.h.b16 %v625
    %v2760 = vunpack.c.l.b16 %v626
    %v2761 = vunpack.c.h.b16 %v626
    %v2762 = vunpack.c.l.b16 %v627
    %v2763 = vunpack.c.h.b16 %v627
    %v2764 = vunpack.c.l.b16 %v628
    %v2765 = vunpack.c.h.b16 %v628
    %v2766 = vunpack.c.l.b16 %v629
    %v2767 = vunpack.c.h.b16 %v629
    %v2768 = vunpack.c.l.b16 %v630
    %v2769 = vunpack.c.h.b16 %v630
    %v2770 = vunpack.c.l.b16 %v631
    %v2771 = vunpack.c.h.b16 %v631
    %v2772 = vunpack.c.l.b16 %v632
    %v2773 = vunpack.c.h.b16 %v632
    %v2774 = vunpack.c.l.b16 %v633
    %v2775 = vunpack.c.h.b16 %v633
    %v2776 = vunpack.c.l.b16 %v634
    %v2777 = vunpack.c.h.b16 %v634
    %v2778 = vunpack.c.l.b16 %v635
    %v2779 = vunpack.c.h.b16 %v635
    %v2780 = vunpack.c.l.b16 %v636
    %v2781 = vunpack.c.h.b16 %v636
    %v2782 = vunpack.c.l.b16 %v637
    %v2783 = vunpack.c.h.b16 %v637
    %v2784 = vunpack.c.l.b16 %v638
    %v2785 = vunpack.c.h.b16 %v638
    %v2786 = vunpack.c.l.b16 %v639
    %v2787 = vunpack.c.h.b16 %v639
    %v2788 = vunpack.c.l.b16 %v640
    %v2789 = vunpack.c.h.b16 %v640
    %v2790 = vunpack.c.l.b16 %v641
    %v2791 = vunpack.c.h.b16 %v641
    %v2792 = vunpack.c.l.b16 %v642
    %v2793 = vunpack.c.h.b16 %v642
    %v2794 = vunpack.c.l.b16 %v643
    %v2795 = vunpack.c.h.b16 %v643
    %v2796 = vunpack.c.l.b16 %v644
    %v2797 = vunpack.c.h.b16 %v644
    %v2798 = vunpack.c.l.b16 %v645
    %v2799 = vunpack.c.h.b16 %v645
    %v2800 = vunpack.c.l.b16 %v646
    %v2801 = vunpack.c.h.b16 %v646
    %v2802 = vunpack.c.l.b16 %v647
    %v2803 = vunpack.c.h.b16 %v647
    %v2804 = vunpack.c.l.b16 %v648
    %v2805 = vunpack.c.h.b16 %v648
    %v2806 = vunpack.c.l.b16 %v649
    %v2807 = vunpack.c.h.b16 %v649
    %v2808 = vunpack.c.l.b16 %v650
    %v2809 = vunpack.c.h.b16 %v650
    %v2810 = vunpack.c.l.b16 %v651
    %v2811 = vunpack.c.h.b16 %v651
    %v2812 = vunpack.c.l.b16 %v652
    %v2813 = vunpack.c.h.b16 %v652
    %v2814 = vunpack.c.l.b16 %v653
    %v2815 = vunpack.c.h.b16 %v653
    %v2816 = vunpack.c.l.b16 %v654
    %v2817 = vunpack.c.h.b16 %v654
    %v2818 = vunpack.c.l.b16 %v655
    %v2819 = vunpack.c.h.b16 %v655
    %v2820 = vunpack.c.l.b16 %v656
    %v2821 = vunpack.c.h.b16 %v656
    %v2822 = vunpack.c.l.b16 %v657
    %v2823 = vunpack.c.h.b16 %v657
    %v2824 = vunpack.c.l.b16 %v658
    %v2825 = vunpack.c.h.b16 %v658
    %v2826 = vunpack.c.l.b16 %v659
    %v2827 = vunpack.c.h.b16 %v659
    %v2828 = vunpack.c.l.b16 %v660
    %v2829 = vunpack.c.h.b16 %v660
    %v2830 = vunpack.c.l.b16 %v661
    %v2831 = vunpack.c.h.b16 %v661
    %v2832 = vunpack.c.l.b16 %v662
    %v2833 = vunpack.c.h.b16 %v662
    %v2834 = vunpack.c.l.b16 %v663
    %v2835 = vunpack.c.h.b16 %v663
    %v2836 = vunpack.c.l.b16 %v664
    %v2837 = vunpack.c.h.b16 %v664
    %v2838 = vunpack.c.l.b16 %v665
    %v2839 = vunpack.c.h.b16 %v665
    %v2840 = vunpack.c.l.b16 %v666
    %v2841 = vunpack.c.h.b16 %v666
    %v2842 = vunpack.c.l.b16 %v667
    %v2843 = vunpack.c.h.b16 %v667
    %v2844 = vunpack.c.l.b16 %v668
    %v2845 = vunpack.c.h.b16 %v668
    %v2846 = vunpack.c.l.b16 %v669
    %v2847 = vunpack.c.h.b16 %v669
    %v2848 = vunpack.c.l.b16 %v670
    %v2849 = vunpack.c.h.b16 %v670
    %v2850 = vunpack.c.l.b16 %v671
    %v2851 = vunpack.c.h.b16 %v671
    %v2852 = vunpack.c.l.b16 %v672
    %v2853 = vunpack.c.h.b16 %v672
    %v2854 = vunpack.c.l.b16 %v673
    %v2855 = vunpack.c.h.b16 %v673
    %v2856 = vunpack.c.l.b16 %v674
    %v2857 = vunpack.c.h.b16 %v674
    %v2858 = vunpack.c.l.b16 %v675
    %v2859 = vunpack.c.h.b16 %v675
    %v2860 = vunpack.c.l.b16 %v676
    %v2861 = vunpack.c.h.b16 %v676
    %v2862 = vunpack.c.l.b16 %v677
    %v2863 = vunpack.c.h.b16 %v677
    %v2864 = vunpack.c.l.b16 %v678
    %v2865 = vunpack.c.h.b16 %v678
    %v2866 = vunpack.c.l.b16 %v679
    %v2867 = vunpack.c.h.b16 %v679
    %v2868 = vunpack.c.l.b16 %v680
    %v2869 = vunpack.c.h.b16 %v680
    %v2870 = vunpack.c.l.b16 %v681
    %v2871 = vunpack.c.h.b16 %v681
    %v2872 = vunpack.c.l.b16 %v682
    %v2873 = vunpack.c.h.b16 %v682
    %v2874 = vunpack.c.l.b16 %v683
    %v2875 = vunpack.c.h.b16 %v683
    %v2876 = vunpack.c.l.b16 %v684
    %v2877 = vunpack.c.h.b16 %v684
    %v2878 = vunpack.c.l.b16 %v685
    %v2879 = vunpack.c.h.b16 %v685
    %v2880 = vunpack.c.l.b16 %v686
    %v2881 = vunpack.c.h.b16 %v686
    %v2882 = vunpack.c.l.b16 %v687
    %v2883 = vunpack.c.h.b16 %v687
    %v2884 = vunpack.c.l.b16 %v688
    %v2885 = vunpack.c.h.b16 %v688
    %v2886 = vunpack.c.l.b16 %v689
    %v2887 = vunpack.c.h.b16 %v689
    %v2888 = vunpack.c.l.b16 %v690
    %v2889 = vunpack.c.h.b16 %v690
    %v2890 = vunpack.c.l.b16 %v691
    %v2891 = vunpack.c.h.b16 %v691
    %v2892 = vunpack.c.l.b16 %v692
    %v2893 = vunpack.c.h.b16 %v692
    %v2894 = vunpack.c.l.b16 %v693
    %v2895 = vunpack.c.h.b16 %v693
    %v2896 = vunpack.c.l.b16 %v694
    %v2897 = vunpack.c.h.b16 %v694
    %v2898 = vunpack.c.l.b16 %v695
    %v2899 = vunpack.c.h.b16 %v695
    %v2900 = vunpack.c.l.b16 %v696
    %v2901 = vunpack.c.h.b16 %v696
    %v2902 = vunpack.c.l.b16 %v697
    %v2903 = vunpack.c.h.b16 %v697
    %v2904 = vunpack.c.l.b16 %v698
    %v2905 = vunpack.c.h.b16 %v698
    %v2906 = vunpack.c.l.b16 %v699
    %v2907 = vunpack.c.h.b16 %v699
    %v2908 = vunpack.c.l.b16 %v700
    %v2909 = vunpack.c.h.b16 %v700
    %v2910 = vunpack.c.l.b16 %v701
    %v2911 = vunpack.c.h.b16 %v701
    %v2912 = vunpack.c.l.b16 %v702
    %v2913 = vunpack.c.h.b16 %v702
    %v2914 = vunpack.c.l.b16 %v703
    %v2915 = vunpack.c.h.b16 %v703
    %v2916 = vunpack.c.l.b16 %v704
    %v2917 = vunpack.c.h.b16 %v704
    %v2918 = vunpack.c.l.b16 %v705
    %v2919 = vunpack.c.h.b16 %v705
    %v2920 = vunpack.c.l.b16 %v706
    %v2921 = vunpack.c.h.b16 %v706
    %v2922 = vunpack.c.l.b16 %v707
    %v2923 = vunpack.c.h.b16 %v707
    %v2924 = vunpack.c.l.b16 %v708
    %v2925 = vunpack.c.h.b16 %v708
    %v2926 = vunpack.c.l.b16 %v709
    %v2927 = vunpack.c.h.b16 %v709
    %v2928 = vunpack.c.l.b16 %v710
    %v2929 = vunpack.c.h.b16 %v710
    %v2930 = vunpack.c.l.b16 %v711
    %v2931 = vunpack.c.h.b16 %v711
    %v2932 = vunpack.c.l.b16 %v712
    %v2933 = vunpack.c.h.b16 %v712
    %v2934 = vunpack.c.l.b16 %v713
    %v2935 = vunpack.c.h.b16 %v713
    %v2936 = vunpack.c.l.b16 %v714
    %v2937 = vunpack.c.h.b16 %v714
    %v2938 = vunpack.c.l.b16 %v715
    %v2939 = vunpack.c.h.b16 %v715
    %v2940 = vunpack.c.l.b16 %v716
    %v2941 = vunpack.c.h.b16 %v716
    %v2942 = vunpack.c.l.b16 %v717
    %v2943 = vunpack.c.h.b16 %v717
    %v2944 = vunpack.c.l.b16 %v718
    %v2945 = vunpack.c.h.b16 %v718
    %v2946 = vunpack.c.l.b16 %v719
    %v2947 = vunpack.c.h.b16 %v719
    %v2948 = vunpack.c.l.b16 %v720
    %v2949 = vunpack.c.h.b16 %v720
    %v2950 = vunpack.c.l.b16 %v721
    %v2951 = vunpack.c.h.b16 %v721
    %v2952 = vunpack.c.l.b16 %v722
    %v2953 = vunpack.c.h.b16 %v722
    %v2954 = vunpack.c.l.b16 %v723
    %v2955 = vunpack.c.h.b16 %v723
    %v2956 = vunpack.c.l.b16 %v724
    %v2957 = vunpack.c.h.b16 %v724
    %v2958 = vunpack.c.l.b16 %v725
    %v2959 = vunpack.c.h.b16 %v725
    %v2960 = vunpack.c.l.b16 %v726
    %v2961 = vunpack.c.h.b16 %v726
    %v2962 = vunpack.c.l.b16 %v727
    %v2963 = vunpack.c.h.b16 %v727
    %v2964 = vunpack.c.l.b16 %v728
    %v2965 = vunpack.c.h.b16 %v728
    %v2966 = vunpack.c.l.b16 %v729
    %v2967 = vunpack.c.h.b16 %v729
    %v2968 = vunpack.c.l.b16 %v730
    %v2969 = vunpack.c.h.b16 %v730
    %v2970 = vunpack.c.l.b16 %v731
    %v2971 = vunpack.c.h.b16 %v731
    %v2972 = vunpack.c.l.b16 %v732
    %v2973 = vunpack.c.h.b16 %v732
    %v2974 = vunpack.c.l.b16 %v733
    %v2975 = vunpack.c.h.b16 %v733
    %v2976 = vunpack.c.l.b16 %v734
    %v2977 = vunpack.c.h.b16 %v734
    %v2978 = vunpack.c.l.b16 %v735
    %v2979 = vunpack.c.h.b16 %v735
    %v2980 = vunpack.c.l.b16 %v736
    %v2981 = vunpack.c.h.b16 %v736
    %v2982 = vunpack.c.l.b16 %v737
    %v2983 = vunpack.c.h.b16 %v737
    %v2984 = vunpack.c.l.b16 %v738
    %v2985 = vunpack.c.h.b16 %v738
    %v2986 = vunpack.c.l.b16 %v739
    %v2987 = vunpack.c.h.b16 %v739
    %v2988 = vunpack.c.l.b16 %v740
    %v2989 = vunpack.c.h.b16 %v740
    %v2990 = vunpack.c.l.b16 %v741
    %v2991 = vunpack.c.h.b16 %v741
    %v2992 = vunpack.c.l.b16 %v742
    %v2993 = vunpack.c.h.b16 %v742
    %v2994 = vunpack.c.l.b16 %v743
    %v2995 = vunpack.c.h.b16 %v743
    %v2996 = vunpack.c.l.b16 %v744
    %v2997 = vunpack.c.h.b16 %v744
    %v2998 = vunpack.c.l.b16 %v745
    %v2999 = vunpack.c.h.b16 %v745
    %v3000 = vunpack.c.l.b16 %v746
    %v3001 = vunpack.c.h.b16 %v746
    %v3002 = vunpack.c.l.b16 %v747
    %v3003 = vunpack.c.h.b16 %v747
    %v3004 = vunpack.c.l.b16 %v748
    %v3005 = vunpack.c.h.b16 %v748
    %v3006 = vunpack.c.l.b16 %v749
    %v3007 = vunpack.c.h.b16 %v749
    %v3008 = vunpack.c.l.b16 %v750
    %v3009 = vunpack.c.h.b16 %v750
    %v3010 = vunpack.c.l.b16 %v751
    %v3011 = vunpack.c.h.b16 %v751
    %v3012 = vunpack.c.l.b16 %v752
    %v3013 = vunpack.c.h.b16 %v752
    %v3014 = vunpack.c.l.b16 %v753
    %v3015 = vunpack.c.h.b16 %v753
    %v3016 = vunpack.c.l.b16 %v754
    %v3017 = vunpack.c.h.b16 %v754
    %v3018 = vunpack.c.l.b16 %v755
    %v3019 = vunpack.c.h.b16 %v755
    %v3020 = vunpack.c.l.b16 %v756
    %v3021 = vunpack.c.h.b16 %v756
    %v3022 = vunpack.c.l.b16 %v757
    %v3023 = vunpack.c.h.b16 %v757
    %v3024 = vunpack.c.l.b16 %v758
    %v3025 = vunpack.c.h.b16 %v758
    %v3026 = vunpack.c.l.b16 %v759
    %v3027 = vunpack.c.h.b16 %v759
    %v3028 = vunpack.c.l.b16 %v760
    %v3029 = vunpack.c.h.b16 %v760
    %v3030 = vunpack.c.l.b16 %v761
    %v3031 = vunpack.c.h.b16 %v761
    %v3032 = vunpack.c.l.b16 %v762
    %v3033 = vunpack.c.h.b16 %v762
    %v3034 = vunpack.c.l.b16 %v763
    %v3035 = vunpack.c.h.b16 %v763
    %v3036 = vunpack.c.l.b16 %v764
    %v3037 = vunpack.c.h.b16 %v764
    %v3038 = vunpack.c.l.b16 %v765
    %v3039 = vunpack.c.h.b16 %v765
    %v3040 = vunpack.c.l.b16 %v766
    %v3041 = vunpack.c.h.b16 %v766
    %v3042 = vunpack.c.l.b16 %v767
    %v3043 = vunpack.c.h.b16 %v767
    %v3044 = vunpack.c.l.b16 %v768
    %v3045 = vunpack.c.h.b16 %v768
    %v3046 = vunpack.c.l.b16 %v769
    %v3047 = vunpack.c.h.b16 %v769
    %v3048 = vunpack.c.l.b16 %v770
    %v3049 = vunpack.c.h.b16 %v770
    %v3050 = vunpack.c.l.b16 %v771
    %v3051 = vunpack.c.h.b16 %v771
    %v3052 = vunpack.c.l.b16 %v772
    %v3053 = vunpack.c.h.b16 %v772
    %v3054 = vunpack.c.l.b16 %v773
    %v3055 = vunpack.c.h.b16 %v773
    %v3056 = vunpack.c.l.b16 %v774
    %v3057 = vunpack.c.h.b16 %v774
    %v3058 = vunpack.c.l.b16 %v775
    %v3059 = vunpack.c.h.b16 %v775
    %v3060 = vunpack.c.l.b16 %v776
    %v3061 = vunpack.c.h.b16 %v776
    %v3062 = vunpack.c.l.b16 %v777
    %v3063 = vunpack.c.h.b16 %v777
    %v3064 = vunpack.c.l.b16 %v778
    %v3065 = vunpack.c.h.b16 %v778
    %v3066 = vunpack.c.l.b16 %v779
    %v3067 = vunpack.c.h.b16 %v779
    %v3068 = vunpack.c.l.b16 %v780
    %v3069 = vunpack.c.h.b16 %v780
    %v3070 = vunpack.c.l.b16 %v781
    %v3071 = vunpack.c.h.b16 %v781
    %v3072 = vunpack.c.l.b16 %v782
    %v3073 = vunpack.c.h.b16 %v782
    %v3074 = vunpack.c.l.b16 %v783
    %v3075 = vunpack.c.h.b16 %v783
    %v3076 = vunpack.c.l.b16 %v784
    %v3077 = vunpack.c.h.b16 %v784
    %v3078 = vunpack.c.l.b16 %v785
    %v3079 = vunpack.c.h.b16 %v785
    %v3080 = vunpack.c.l.b16 %v786
    %v3081 = vunpack.c.h.b16 %v786
    %v3082 = vunpack.c.l.b16 %v787
    %v3083 = vunpack.c.h.b16 %v787
    %v3084 = vunpack.c.l.b16 %v788
    %v3085 = vunpack.c.h.b16 %v788
    %v3086 = vunpack.c.l.b16 %v789
    %v3087 = vunpack.c.h.b16 %v789
    %v3088 = vunpack.c.l.b16 %v790
    %v3089 = vunpack.c.h.b16 %v790
    %v3090 = vunpack.c.l.b16 %v791
    %v3091 = vunpack.c.h.b16 %v791
    %v3092 = vunpack.c.l.b16 %v792
    %v3093 = vunpack.c.h.b16 %v792
    %v3094 = vunpack.c.l.b16 %v793
    %v3095 = vunpack.c.h.b16 %v793
    %v3096 = vunpack.c.l.b16 %v794
    %v3097 = vunpack.c.h.b16 %v794
    %v3098 = vunpack.c.l.b16 %v795
    %v3099 = vunpack.c.h.b16 %v795
    %v3100 = vunpack.c.l.b16 %v796
    %v3101 = vunpack.c.h.b16 %v796
    %v3102 = vunpack.c.l.b16 %v797
    %v3103 = vunpack.c.h.b16 %v797
    %v3104 = vunpack.c.l.b16 %v798
    %v3105 = vunpack.c.h.b16 %v798
    %v3106 = vunpack.c.l.b16 %v799
    %v3107 = vunpack.c.h.b16 %v799
    %v3108 = vunpack.c.l.b16 %v800
    %v3109 = vunpack.c.h.b16 %v800
    %v3110 = vunpack.c.l.b16 %v801
    %v3111 = vunpack.c.h.b16 %v801
    %v3112 = vunpack.c.l.b16 %v802
    %v3113 = vunpack.c.h.b16 %v802
    %v3114 = vunpack.c.l.b16 %v803
    %v3115 = vunpack.c.h.b16 %v803
    %v3116 = vunpack.c.l.b16 %v804
    %v3117 = vunpack.c.h.b16 %v804
    %v3118 = vunpack.c.l.b16 %v805
    %v3119 = vunpack.c.h.b16 %v805
    %v3120 = vunpack.c.l.b16 %v806
    %v3121 = vunpack.c.h.b16 %v806
    %v3122 = vunpack.c.l.b16 %v807
    %v3123 = vunpack.c.h.b16 %v807
    %v3124 = vunpack.c.l.b16 %v808
    %v3125 = vunpack.c.h.b16 %v808
    %v3126 = vunpack.c.l.b16 %v809
    %v3127 = vunpack.c.h.b16 %v809
    %v3128 = vunpack.c.l.b16 %v810
    %v3129 = vunpack.c.h.b16 %v810
    %v3130 = vunpack.c.l.b16 %v811
    %v3131 = vunpack.c.h.b16 %v811
    %v3132 = vunpack.c.l.b16 %v812
    %v3133 = vunpack.c.h.b16 %v812
    %v3134 = vunpack.c.l.b16 %v813
    %v3135 = vunpack.c.h.b16 %v813
    %v3136 = vunpack.c.l.b16 %v814
    %v3137 = vunpack.c.h.b16 %v814
    %v3138 = vunpack.c.l.b16 %v815
    %v3139 = vunpack.c.h.b16 %v815
    %v3140 = vunpack.c.l.b16 %v816
    %v3141 = vunpack.c.h.b16 %v816
    %v3142 = vunpack.c.l.b16 %v817
    %v3143 = vunpack.c.h.b16 %v817
    %v3144 = vunpack.c.l.b16 %v818
    %v3145 = vunpack.c.h.b16 %v818
    %v3146 = vunpack.c.l.b16 %v819
    %v3147 = vunpack.c.h.b16 %v819
    %v3148 = vunpack.c.l.b16 %v820
    %v3149 = vunpack.c.h.b16 %v820
    %v3150 = vunpack.c.l.b16 %v821
    %v3151 = vunpack.c.h.b16 %v821
    %v3152 = vunpack.c.l.b16 %v822
    %v3153 = vunpack.c.h.b16 %v822
    %v3154 = vunpack.c.l.b16 %v823
    %v3155 = vunpack.c.h.b16 %v823
    %v3156 = vunpack.c.l.b16 %v824
    %v3157 = vunpack.c.h.b16 %v824
    %v3158 = vunpack.c.l.b16 %v825
    %v3159 = vunpack.c.h.b16 %v825
    %v3160 = vunpack.c.l.b16 %v826
    %v3161 = vunpack.c.h.b16 %v826
    %v3162 = vunpack.c.l.b16 %v827
    %v3163 = vunpack.c.h.b16 %v827
    %v3164 = vunpack.c.l.b16 %v828
    %v3165 = vunpack.c.h.b16 %v828
    %v3166 = vunpack.c.l.b16 %v829
    %v3167 = vunpack.c.h.b16 %v829
    %v3168 = vunpack.c.l.b16 %v830
    %v3169 = vunpack.c.h.b16 %v830
    %v3170 = vunpack.c.l.b16 %v831
    %v3171 = vunpack.c.h.b16 %v831
    %v3172 = vunpack.c.l.b16 %v832
    %v3173 = vunpack.c.h.b16 %v832
    %v3174 = vunpack.c.l.b16 %v833
    %v3175 = vunpack.c.h.b16 %v833
    %v3176 = vunpack.c.l.b16 %v834
    %v3177 = vunpack.c.h.b16 %v834
    %v3178 = vunpack.c.l.b16 %v835
    %v3179 = vunpack.c.h.b16 %v835
    %v3180 = vunpack.c.l.b16 %v836
    %v3181 = vunpack.c.h.b16 %v836
    %v3182 = vunpack.c.l.b16 %v837
    %v3183 = vunpack.c.h.b16 %v837
    %v3184 = vunpack.c.l.b16 %v838
    %v3185 = vunpack.c.h.b16 %v838
    %v3186 = vunpack.c.l.b16 %v839
    %v3187 = vunpack.c.h.b16 %v839
    %v3188 = vunpack.c.l.b16 %v840
    %v3189 = vunpack.c.h.b16 %v840
    %v3190 = vunpack.c.l.b16 %v841
    %v3191 = vunpack.c.h.b16 %v841
    %v3192 = vunpack.c.l.b16 %v842
    %v3193 = vunpack.c.h.b16 %v842
    %v3194 = vunpack.c.l.b16 %v843
    %v3195 = vunpack.c.h.b16 %v843
    %v3196 = vunpack.c.l.b16 %v844
    %v3197 = vunpack.c.h.b16 %v844
    %v3198 = vunpack.c.l.b16 %v845
    %v3199 = vunpack.c.h.b16 %v845
    %v3200 = vunpack.c.l.b16 %v846
    %v3201 = vunpack.c.h.b16 %v846
    %v3202 = vunpack.c.l.b16 %v847
    %v3203 = vunpack.c.h.b16 %v847
    %v3204 = vunpack.c.l.b16 %v848
    %v3205 = vunpack.c.h.b16 %v848
    %v3206 = vunpack.c.l.b16 %v849
    %v3207 = vunpack.c.h.b16 %v849
    %v3208 = vunpack.c.l.b16 %v850
    %v3209 = vunpack.c.h.b16 %v850
    %v3210 = vunpack.c.l.b16 %v851
    %v3211 = vunpack.c.h.b16 %v851
    %v3212 = vunpack.c.l.b16 %v852
    %v3213 = vunpack.c.h.b16 %v852
    %v3214 = vunpack.c.l.b16 %v853
    %v3215 = vunpack.c.h.b16 %v853
    %v3216 = vunpack.c.l.b16 %v854
    %v3217 = vunpack.c.h.b16 %v854
    %v3218 = vunpack.c.l.b16 %v855
    %v3219 = vunpack.c.h.b16 %v855
    %v3220 = vunpack.c.l.b16 %v856
    %v3221 = vunpack.c.h.b16 %v856
    %v3222 = vunpack.c.l.b16 %v857
    %v3223 = vunpack.c.h.b16 %v857
    %v3224 = vunpack.c.l.b16 %v858
    %v3225 = vunpack.c.h.b16 %v858
    %v3226 = vunpack.c.l.b16 %v859
    %v3227 = vunpack.c.h.b16 %v859
    %v3228 = vunpack.c.l.b16 %v860
    %v3229 = vunpack.c.h.b16 %v860
    %v3230 = vunpack.c.l.b16 %v861
    %v3231 = vunpack.c.h.b16 %v861
    %v3232 = vunpack.c.l.b16 %v862
    %v3233 = vunpack.c.h.b16 %v862
    %v3234 = vunpack.c.l.b16 %v863
    %v3235 = vunpack.c.h.b16 %v863
    %v3236 = vunpack.c.l.b16 %v864
    %v3237 = vunpack.c.h.b16 %v864
    %v3238 = vunpack.c.l.b16 %v865
    %v3239 = vunpack.c.h.b16 %v865
    %v3240 = vunpack.c.l.b16 %v866
    %v3241 = vunpack.c.h.b16 %v866
    %v3242 = vunpack.c.l.b16 %v867
    %v3243 = vunpack.c.h.b16 %v867
    %v3244 = vpack.c.b16 %v1692, %v1676
    %v3245 = vpack.c.b16 %v1693, %v1677
    %v3246 = vpack.c.b16 %v1694, %v1678
    %v3247 = vpack.c.b16 %v1695, %v1679
    %v3248 = vpack.c.b16 %v1696, %v1680
    %v3249 = vpack.c.b16 %v1697, %v1681
    %v3250 = vpack.c.b16 %v1698, %v1682
    %v3251 = vpack.c.b16 %v1699, %v1683
    %v3252 = vpack.c.b16 %v1700, %v1684
    %v3253 = vpack.c.b16 %v1701, %v1685
    %v3254 = vpack.c.b16 %v1702, %v1686
    %v3255 = vpack.c.b16 %v1703, %v1687
    %v3256 = vpack.c.b16 %v1704, %v1688
    %v3257 = vpack.c.b16 %v1705, %v1689
    %v3258 = vpack.c.b16 %v1706, %v1690
    %v3259 = vpack.c.b16 %v1707, %v1691
    %v3260 = vpack.c.b16 %v1724, %v1708
    %v3261 = vpack.c.b16 %v1725, %v1709
    %v3262 = vpack.c.b16 %v1726, %v1710
    %v3263 = vpack.c.b16 %v1727, %v1711
    %v3264 = vpack.c.b16 %v1728, %v1712
    %v3265 = vpack.c.b16 %v1729, %v1713
    %v3266 = vpack.c.b16 %v1730, %v1714
    %v3267 = vpack.c.b16 %v1731, %v1715
    %v3268 = vpack.c.b16 %v1732, %v1716
    %v3269 = vpack.c.b16 %v1733, %v1717
    %v3270 = vpack.c.b16 %v1734, %v1718
    %v3271 = vpack.c.b16 %v1735, %v1719
    %v3272 = vpack.c.b16 %v1736, %v1720
    %v3273 = vpack.c.b16 %v1737, %v1721
    %v3274 = vpack.c.b16 %v1738, %v1722
    %v3275 = vpack.c.b16 %v1739, %v1723
    %v3276 = vpack.c.b16 %v1756, %v1740
    %v3277 = vpack.c.b16 %v1757, %v1741
    %v3278 = vpack.c.b16 %v1758, %v1742
    %v3279 = vpack.c.b16 %v1759, %v1743
    %v3280 = vpack.c.b16 %v1760, %v1744
    %v3281 = vpack.c.b16 %v1761, %v1745
    %v3282 = vpack.c.b16 %v1762, %v1746
    %v3283 = vpack.c.b16 %v1763, %v1747
    %v3284 = vpack.c.b16 %v1764, %v1748
    %v3285 = vpack.c.b16 %v1765, %v1749
    %v3286 = vpack.c.b16 %v1766, %v1750
    %v3287 = vpack.c.b16 %v1767, %v1751
    %v3288 = vpack.c.b16 %v1768, %v1752
    %v3289 = vpack.c.b16 %v1769, %v1753
    %v3290 = vpack.c.b16 %v1770, %v1754
    %v3291 = vpack.c.b16 %v1771, %v1755
    %v3292 = vpack.c.b16 %v1788, %v1772
    %v3293 = vpack.c.b16 %v1789, %v1773
    %v3294 = vpack.c.b16 %v1790, %v1774
    %v3295 = vpack.c.b16 %v1791, %v1775
    %v3296 = vpack.c.b16 %v1792, %v1776
    %v3297 = vpack.c.b16 %v1793, %v1777
    %v3298 = vpack.c.b16 %v1794, %v1778
    %v3299 = vpack.c.b16 %v1795, %v1779
    %v3300 = vpack.c.b16 %v1796, %v1780
    %v3301 = vpack.c.b16 %v1797, %v1781
    %v3302 = vpack.c.b16 %v1798, %v1782
    %v3303 = vpack.c.b16 %v1799, %v1783
    %v3304 = vpack.c.b16 %v1800, %v1784
    %v3305 = vpack.c.b16 %v1801, %v1785
    %v3306 = vpack.c.b16 %v1802, %v1786
    %v3307 = vpack.c.b16 %v1803, %v1787
    %v3308 = vpack.c.b16 %v1820, %v1804
    %v3309 = vpack.c.b16 %v1821, %v1805
    %v3310 = vpack.c.b16 %v1822, %v1806
    %v3311 = vpack.c.b16 %v1823, %v1807
    %v3312 = vpack.c.b16 %v1824, %v1808
    %v3313 = vpack.c.b16 %v1825, %v1809
    %v3314 = vpack.c.b16 %v1826, %v1810
    %v3315 = vpack.c.b16 %v1827, %v1811
    %v3316 = vpack.c.b16 %v1828, %v1812
    %v3317 = vpack.c.b16 %v1829, %v1813
    %v3318 = vpack.c.b16 %v1830, %v1814
    %v3319 = vpack.c.b16 %v1831, %v1815
    %v3320 = vpack.c.b16 %v1832, %v1816
    %v3321 = vpack.c.b16 %v1833, %v1817
    %v3322 = vpack.c.b16 %v1834, %v1818
    %v3323 = vpack.c.b16 %v1835, %v1819
    %v3324 = vpack.c.b16 %v1852, %v1836
    %v3325 = vpack.c.b16 %v1853, %v1837
    %v3326 = vpack.c.b16 %v1854, %v1838
    %v3327 = vpack.c.b16 %v1855, %v1839
    %v3328 = vpack.c.b16 %v1856, %v1840
    %v3329 = vpack.c.b16 %v1857, %v1841
    %v3330 = vpack.c.b16 %v1858, %v1842
    %v3331 = vpack.c.b16 %v1859, %v1843
    %v3332 = vpack.c.b16 %v1860, %v1844
    %v3333 = vpack.c.b16 %v1861, %v1845
    %v3334 = vpack.c.b16 %v1862, %v1846
    %v3335 = vpack.c.b16 %v1863, %v1847
    %v3336 = vpack.c.b16 %v1864, %v1848
    %v3337 = vpack.c.b16 %v1865, %v1849
    %v3338 = vpack.c.b16 %v1866, %v1850
    %v3339 = vpack.c.b16 %v1867, %v1851
    %v3340 = vpack.c.b16 %v1884, %v1868
    %v3341 = vpack.c.b16 %v1885, %v1869
    %v3342 = vpack.c.b16 %v1886, %v1870
    %v3343 = vpack.c.b16 %v1887, %v1871
    %v3344 = vpack.c.b16 %v1888, %v1872
    %v3345 = vpack.c.b16 %v1889, %v1873
    %v3346 = vpack.c.b16 %v1890, %v1874
    %v3347 = vpack.c.b16 %v1891, %v1875
    %v3348 = vpack.c.b16 %v1892, %v1876
    %v3349 = vpack.c.b16 %v1893, %v1877
    %v3350 = vpack.c.b16 %v1894, %v1878
    %v3351 = vpack.c.b16 %v1895, %v1879
    %v3352 = vpack.c.b16 %v1896, %v1880
    %v3353 = vpack.c.b16 %v1897, %v1881
    %v3354 = vpack.c.b16 %v1898, %v1882
    %v3355 = vpack.c.b16 %v1899, %v1883
    %v3356 = vpack.c.b16 %v1916, %v1900
    %v3357 = vpack.c.b16 %v1917, %v1901
    %v3358 = vpack.c.b16 %v1918, %v1902
    %v3359 = vpack.c.b16 %v1919, %v1903
    %v3360 = vpack.c.b16 %v1920, %v1904
    %v3361 = vpack.c.b16 %v1921, %v1905
    %v3362 = vpack.c.b16 %v1922, %v1906
    %v3363 = vpack.c.b16 %v1923, %v1907
    %v3364 = vpack.c.b16 %v1924, %v1908
    %v3365 = vpack.c.b16 %v1925, %v1909
    %v3366 = vpack.c.b16 %v1926, %v1910
    %v3367 = vpack.c.b16 %v1927, %v1911
    %v3368 = vpack.c.b16 %v1928, %v1912
    %v3369 = vpack.c.b16 %v1929, %v1913
    %v3370 = vpack.c.b16 %v1930, %v1914
    %v3371 = vpack.c.b16 %v1931, %v1915
    %v3372 = vpack.c.b16 %v1948, %v1932
    %v3373 = vpack.c.b16 %v1949, %v1933
    %v3374 = vpack.c.b16 %v1950, %v1934
    %v3375 = vpack.c.b16 %v1951, %v1935
    %v3376 = vpack.c.b16 %v1952, %v1936
    %v3377 = vpack.c.b16 %v1953, %v1937
    %v3378 = vpack.c.b16 %v1954, %v1938
    %v3379 = vpack.c.b16 %v1955, %v1939
    %v3380 = vpack.c.b16 %v1956, %v1940
    %v3381 = vpack.c.b16 %v1957, %v1941
    %v3382 = vpack.c.b16 %v1958, %v1942
    %v3383 = vpack.c.b16 %v1959, %v1943
    %v3384 = vpack.c.b16 %v1960, %v1944
    %v3385 = vpack.c.b16 %v1961, %v1945
    %v3386 = vpack.c.b16 %v1962, %v1946
    %v3387 = vpack.c.b16 %v1963, %v1947
    %v3388 = vpack.c.b16 %v1980, %v1964
    %v3389 = vpack.c.b16 %v1981, %v1965
    %v3390 = vpack.c.b16 %v1982, %v1966
    %v3391 = vpack.c.b16 %v1983, %v1967
    %v3392 = vpack.c.b16 %v1984, %v1968
    %v3393 = vpack.c.b16 %v1985, %v1969
    %v3394 = vpack.c.b16 %v1986, %v1970
    %v3395 = vpack.c.b16 %v1987, %v1971
    %v3396 = vpack.c.b16 %v1988, %v1972
    %v3397 = vpack.c.b16 %v1989, %v1973
    %v3398 = vpack.c.b16 %v1990, %v1974
    %v3399 = vpack.c.b16 %v1991, %v1975
    %v3400 = vpack.c.b16 %v1992, %v1976
    %v3401 = vpack.c.b16 %v1993, %v1977
    %v3402 = vpack.c.b16 %v1994, %v1978
    %v3403 = vpack.c.b16 %v1995, %v1979
    %v3404 = vpack.c.b16 %v2012, %v1996
    %v3405 = vpack.c.b16 %v2013, %v1997
    %v3406 = vpack.c.b16 %v2014, %v1998
    %v3407 = vpack.c.b16 %v2015, %v1999
    %v3408 = vpack.c.b16 %v2016, %v2000
    %v3409 = vpack.c.b16 %v2017, %v2001
    %v3410 = vpack.c.b16 %v2018, %v2002
    %v3411 = vpack.c.b16 %v2019, %v2003
    %v3412 = vpack.c.b16 %v2020, %v2004
    %v3413 = vpack.c.b16 %v2021, %v2005
    %v3414 = vpack.c.b16 %v2022, %v2006
    %v3415 = vpack.c.b16 %v2023, %v2007
    %v3416 = vpack.c.b16 %v2024, %v2008
    %v3417 = vpack.c.b16 %v2025, %v2009
    %v3418 = vpack.c.b16 %v2026, %v2010
    %v3419 = vpack.c.b16 %v2027, %v2011
    %v3420 = vpack.c.b16 %v2044, %v2028
    %v3421 = vpack.c.b16 %v2045, %v2029
    %v3422 = vpack.c.b16 %v2046, %v2030
    %v3423 = vpack.c.b16 %v2047, %v2031
    %v3424 = vpack.c.b16 %v2048, %v2032
    %v3425 = vpack.c.b16 %v2049, %v2033
    %v3426 = vpack.c.b16 %v2050, %v2034
    %v3427 = vpack.c.b16 %v2051, %v2035
    %v3428 = vpack.c.b16 %v2052, %v2036
    %v3429 = vpack.c.b16 %v2053, %v2037
    %v3430 = vpack.c.b16 %v2054, %v2038
    %v3431 = vpack.c.b16 %v2055, %v2039
    %v3432 = vpack.c.b16 %v2056, %v2040
    %v3433 = vpack.c.b16 %v2057, %v2041
    %v3434 = vpack.c.b16 %v2058, %v2042
    %v3435 = vpack.c.b16 %v2059, %v2043
    %v3436 = vpack.c.b16 %v2076, %v2060
    %v3437 = vpack.c.b16 %v2077, %v2061
    %v3438 = vpack.c.b16 %v2078, %v2062
    %v3439 = vpack.c.b16 %v2079, %v2063
    %v3440 = vpack.c.b16 %v2080, %v2064
    %v3441 = vpack.c.b16 %v2081, %v2065
    %v3442 = vpack.c.b16 %v2082, %v2066
    %v3443 = vpack.c.b16 %v2083, %v2067
    %v3444 = vpack.c.b16 %v2084, %v2068
    %v3445 = vpack.c.b16 %v2085, %v2069
    %v3446 = vpack.c.b16 %v2086, %v2070
    %v3447 = vpack.c.b16 %v2087, %v2071
    %v3448 = vpack.c.b16 %v2088, %v2072
    %v3449 = vpack.c.b16 %v2089, %v2073
    %v3450 = vpack.c.b16 %v2090, %v2074
    %v3451 = vpack.c.b16 %v2091, %v2075
    %v3452 = vpack.c.b16 %v2108, %v2092
    %v3453 = vpack.c.b16 %v2109, %v2093
    %v3454 = vpack.c.b16 %v2110, %v2094
    %v3455 = vpack.c.b16 %v2111, %v2095
    %v3456 = vpack.c.b16 %v2112, %v2096
    %v3457 = vpack.c.b16 %v2113, %v2097
    %v3458 = vpack.c.b16 %v2114, %v2098
    %v3459 = vpack.c.b16 %v2115, %v2099
    %v3460 = vpack.c.b16 %v2116, %v2100
    %v3461 = vpack.c.b16 %v2117, %v2101
    %v3462 = vpack.c.b16 %v2118, %v2102
    %v3463 = vpack.c.b16 %v2119, %v2103
    %v3464 = vpack.c.b16 %v2120, %v2104
    %v3465 = vpack.c.b16 %v2121, %v2105
    %v3466 = vpack.c.b16 %v2122, %v2106
    %v3467 = vpack.c.b16 %v2123, %v2107
    %v3468 = vpack.c.b16 %v2140, %v2124
    %v3469 = vpack.c.b16 %v2141, %v2125
    %v3470 = vpack.c.b16 %v2142, %v2126
    %v3471 = vpack.c.b16 %v2143, %v2127
    %v3472 = vpack.c.b16 %v2144, %v2128
    %v3473 = vpack.c.b16 %v2145, %v2129
    %v3474 = vpack.c.b16 %v2146, %v2130
    %v3475 = vpack.c.b16 %v2147, %v2131
    %v3476 = vpack.c.b16 %v2148, %v2132
    %v3477 = vpack.c.b16 %v2149, %v2133
    %v3478 = vpack.c.b16 %v2150, %v2134
    %v3479 = vpack.c.b16 %v2151, %v2135
    %v3480 = vpack.c.b16 %v2152, %v2136
    %v3481 = vpack.c.b16 %v2153, %v2137
    %v3482 = vpack.c.b16 %v2154, %v2138
    %v3483 = vpack.c.b16 %v2155, %v2139
    %v3484 = vpack.c.b16 %v2172, %v2156
    %v3485 = vpack.c.b16 %v2173, %v2157
    %v3486 = vpack.c.b16 %v2174, %v2158
    %v3487 = vpack.c.b16 %v2175, %v2159
    %v3488 = vpack.c.b16 %v2176, %v2160
    %v3489 = vpack.c.b16 %v2177, %v2161
    %v3490 = vpack.c.b16 %v2178, %v2162
    %v3491 = vpack.c.b16 %v2179, %v2163
    %v3492 = vpack.c.b16 %v2180, %v2164
    %v3493 = vpack.c.b16 %v2181, %v2165
    %v3494 = vpack.c.b16 %v2182, %v2166
    %v3495 = vpack.c.b16 %v2183, %v2167
    %v3496 = vpack.c.b16 %v2184, %v2168
    %v3497 = vpack.c.b16 %v2185, %v2169
    %v3498 = vpack.c.b16 %v2186, %v2170
    %v3499 = vpack.c.b16 %v2187, %v2171
    %v3500 = vpack.c.b16 %v2204, %v2188
    %v3501 = vpack.c.b16 %v2205, %v2189
    %v3502 = vpack.c.b16 %v2206, %v2190
    %v3503 = vpack.c.b16 %v2207, %v2191
    %v3504 = vpack.c.b16 %v2208, %v2192
    %v3505 = vpack.c.b16 %v2209, %v2193
    %v3506 = vpack.c.b16 %v2210, %v2194
    %v3507 = vpack.c.b16 %v2211, %v2195
    %v3508 = vpack.c.b16 %v2212, %v2196
    %v3509 = vpack.c.b16 %v2213, %v2197
    %v3510 = vpack.c.b16 %v2214, %v2198
    %v3511 = vpack.c.b16 %v2215, %v2199
    %v3512 = vpack.c.b16 %v2216, %v2200
    %v3513 = vpack.c.b16 %v2217, %v2201
    %v3514 = vpack.c.b16 %v2218, %v2202
    %v3515 = vpack.c.b16 %v2219, %v2203
    %v3516 = vpack.c.b16 %v2236, %v2220
    %v3517 = vpack.c.b16 %v2237, %v2221
    %v3518 = vpack.c.b16 %v2238, %v2222
    %v3519 = vpack.c.b16 %v2239, %v2223
    %v3520 = vpack.c.b16 %v2240, %v2224
    %v3521 = vpack.c.b16 %v2241, %v2225
    %v3522 = vpack.c.b16 %v2242, %v2226
    %v3523 = vpack.c.b16 %v2243, %v2227
    %v3524 = vpack.c.b16 %v2244, %v2228
    %v3525 = vpack.c.b16 %v2245, %v2229
    %v3526 = vpack.c.b16 %v2246, %v2230
    %v3527 = vpack.c.b16 %v2247, %v2231
    %v3528 = vpack.c.b16 %v2248, %v2232
    %v3529 = vpack.c.b16 %v2249, %v2233
    %v3530 = vpack.c.b16 %v2250, %v2234
    %v3531 = vpack.c.b16 %v2251, %v2235
    %v3532 = vpack.c.b16 %v2268, %v2252
    %v3533 = vpack.c.b16 %v2269, %v2253
    %v3534 = vpack.c.b16 %v2270, %v2254
    %v3535 = vpack.c.b16 %v2271, %v2255
    %v3536 = vpack.c.b16 %v2272, %v2256
    %v3537 = vpack.c.b16 %v2273, %v2257
    %v3538 = vpack.c.b16 %v2274, %v2258
    %v3539 = vpack.c.b16 %v2275, %v2259
    %v3540 = vpack.c.b16 %v2276, %v2260
    %v3541 = vpack.c.b16 %v2277, %v2261
    %v3542 = vpack.c.b16 %v2278, %v2262
    %v3543 = vpack.c.b16 %v2279, %v2263
    %v3544 = vpack.c.b16 %v2280, %v2264
    %v3545 = vpack.c.b16 %v2281, %v2265
    %v3546 = vpack.c.b16 %v2282, %v2266
    %v3547 = vpack.c.b16 %v2283, %v2267
    %v3548 = vpack.c.b16 %v2300, %v2284
    %v3549 = vpack.c.b16 %v2301, %v2285
    %v3550 = vpack.c.b16 %v2302, %v2286
    %v3551 = vpack.c.b16 %v2303, %v2287
    %v3552 = vpack.c.b16 %v2304, %v2288
    %v3553 = vpack.c.b16 %v2305, %v2289
    %v3554 = vpack.c.b16 %v2306, %v2290
    %v3555 = vpack.c.b16 %v2307, %v2291
    %v3556 = vpack.c.b16 %v2308, %v2292
    %v3557 = vpack.c.b16 %v2309, %v2293
    %v3558 = vpack.c.b16 %v2310, %v2294
    %v3559 = vpack.c.b16 %v2311, %v2295
    %v3560 = vpack.c.b16 %v2312, %v2296
    %v3561 = vpack.c.b16 %v2313, %v2297
    %v3562 = vpack.c.b16 %v2314, %v2298
    %v3563 = vpack.c.b16 %v2315, %v2299
    %v3564 = vpack.c.b16 %v2332, %v2316
    %v3565 = vpack.c.b16 %v2333, %v2317
    %v3566 = vpack.c.b16 %v2334, %v2318
    %v3567 = vpack.c.b16 %v2335, %v2319
    %v3568 = vpack.c.b16 %v2336, %v2320
    %v3569 = vpack.c.b16 %v2337, %v2321
    %v3570 = vpack.c.b16 %v2338, %v2322
    %v3571 = vpack.c.b16 %v2339, %v2323
    %v3572 = vpack.c.b16 %v2340, %v2324
    %v3573 = vpack.c.b16 %v2341, %v2325
    %v3574 = vpack.c.b16 %v2342, %v2326
    %v3575 = vpack.c.b16 %v2343, %v2327
    %v3576 = vpack.c.b16 %v2344, %v2328
    %v3577 = vpack.c.b16 %v2345, %v2329
    %v3578 = vpack.c.b16 %v2346, %v2330
    %v3579 = vpack.c.b16 %v2347, %v2331
    %v3580 = vpack.c.b16 %v2364, %v2348
    %v3581 = vpack.c.b16 %v2365, %v2349
    %v3582 = vpack.c.b16 %v2366, %v2350
    %v3583 = vpack.c.b16 %v2367, %v2351
    %v3584 = vpack.c.b16 %v2368, %v2352
    %v3585 = vpack.c.b16 %v2369, %v2353
    %v3586 = vpack.c.b16 %v2370, %v2354
    %v3587 = vpack.c.b16 %v2371, %v2355
    %v3588 = vpack.c.b16 %v2372, %v2356
    %v3589 = vpack.c.b16 %v2373, %v2357
    %v3590 = vpack.c.b16 %v2374, %v2358
    %v3591 = vpack.c.b16 %v2375, %v2359
    %v3592 = vpack.c.b16 %v2376, %v2360
    %v3593 = vpack.c.b16 %v2377, %v2361
    %v3594 = vpack.c.b16 %v2378, %v2362
    %v3595 = vpack.c.b16 %v2379, %v2363
    %v3596 = vpack.c.b16 %v2396, %v2380
    %v3597 = vpack.c.b16 %v2397, %v2381
    %v3598 = vpack.c.b16 %v2398, %v2382
    %v3599 = vpack.c.b16 %v2399, %v2383
    %v3600 = vpack.c.b16 %v2400, %v2384
    %v3601 = vpack.c.b16 %v2401, %v2385
    %v3602 = vpack.c.b16 %v2402, %v2386
    %v3603 = vpack.c.b16 %v2403, %v2387
    %v3604 = vpack.c.b16 %v2404, %v2388
    %v3605 = vpack.c.b16 %v2405, %v2389
    %v3606 = vpack.c.b16 %v2406, %v2390
    %v3607 = vpack.c.b16 %v2407, %v2391
    %v3608 = vpack.c.b16 %v2408, %v2392
    %v3609 = vpack.c.b16 %v2409, %v2393
    %v3610 = vpack.c.b16 %v2410, %v2394
    %v3611 = vpack.c.b16 %v2411, %v2395
    %v3612 = vpack.c.b16 %v2428, %v2412
    %v3613 = vpack.c.b16 %v2429, %v2413
    %v3614 = vpack.c.b16 %v2430, %v2414
    %v3615 = vpack.c.b16 %v2431, %v2415
    %v3616 = vpack.c.b16 %v2432, %v2416
    %v3617 = vpack.c.b16 %v2433, %v2417
    %v3618 = vpack.c.b16 %v2434, %v2418
    %v3619 = vpack.c.b16 %v2435, %v2419
    %v3620 = vpack.c.b16 %v2436, %v2420
    %v3621 = vpack.c.b16 %v2437, %v2421
    %v3622 = vpack.c.b16 %v2438, %v2422
    %v3623 = vpack.c.b16 %v2439, %v2423
    %v3624 = vpack.c.b16 %v2440, %v2424
    %v3625 = vpack.c.b16 %v2441, %v2425
    %v3626 = vpack.c.b16 %v2442, %v2426
    %v3627 = vpack.c.b16 %v2443, %v2427
    %v3628 = vpack.c.b16 %v2460, %v2444
    %v3629 = vpack.c.b16 %v2461, %v2445
    %v3630 = vpack.c.b16 %v2462, %v2446
    %v3631 = vpack.c.b16 %v2463, %v2447
    %v3632 = vpack.c.b16 %v2464, %v2448
    %v3633 = vpack.c.b16 %v2465, %v2449
    %v3634 = vpack.c.b16 %v2466, %v2450
    %v3635 = vpack.c.b16 %v2467, %v2451
    %v3636 = vpack.c.b16 %v2468, %v2452
    %v3637 = vpack.c.b16 %v2469, %v2453
    %v3638 = vpack.c.b16 %v2470, %v2454
    %v3639 = vpack.c.b16 %v2471, %v2455
    %v3640 = vpack.c.b16 %v2472, %v2456
    %v3641 = vpack.c.b16 %v2473, %v2457
    %v3642 = vpack.c.b16 %v2474, %v2458
    %v3643 = vpack.c.b16 %v2475, %v2459
    %v3644 = vpack.c.b16 %v2492, %v2476
    %v3645 = vpack.c.b16 %v2493, %v2477
    %v3646 = vpack.c.b16 %v2494, %v2478
    %v3647 = vpack.c.b16 %v2495, %v2479
    %v3648 = vpack.c.b16 %v2496, %v2480
    %v3649 = vpack.c.b16 %v2497, %v2481
    %v3650 = vpack.c.b16 %v2498, %v2482
    %v3651 = vpack.c.b16 %v2499, %v2483
    %v3652 = vpack.c.b16 %v2500, %v2484
    %v3653 = vpack.c.b16 %v2501, %v2485
    %v3654 = vpack.c.b16 %v2502, %v2486
    %v3655 = vpack.c.b16 %v2503, %v2487
    %v3656 = vpack.c.b16 %v2504, %v2488
    %v3657 = vpack.c.b16 %v2505, %v2489
    %v3658 = vpack.c.b16 %v2506, %v2490
    %v3659 = vpack.c.b16 %v2507, %v2491
    %v3660 = vpack.c.b16 %v2524, %v2508
    %v3661 = vpack.c.b16 %v2525, %v2509
    %v3662 = vpack.c.b16 %v2526, %v2510
    %v3663 = vpack.c.b16 %v2527, %v2511
    %v3664 = vpack.c.b16 %v2528, %v2512
    %v3665 = vpack.c.b16 %v2529, %v2513
    %v3666 = vpack.c.b16 %v2530, %v2514
    %v3667 = vpack.c.b16 %v2531, %v2515
    %v3668 = vpack.c.b16 %v2532, %v2516
    %v3669 = vpack.c.b16 %v2533, %v2517
    %v3670 = vpack.c.b16 %v2534, %v2518
    %v3671 = vpack.c.b16 %v2535, %v2519
    %v3672 = vpack.c.b16 %v2536, %v2520
    %v3673 = vpack.c.b16 %v2537, %v2521
    %v3674 = vpack.c.b16 %v2538, %v2522
    %v3675 = vpack.c.b16 %v2539, %v2523
    %v3676 = vpack.c.b16 %v2556, %v2540
    %v3677 = vpack.c.b16 %v2557, %v2541
    %v3678 = vpack.c.b16 %v2558, %v2542
    %v3679 = vpack.c.b16 %v2559, %v2543
    %v3680 = vpack.c.b16 %v2560, %v2544
    %v3681 = vpack.c.b16 %v2561, %v2545
    %v3682 = vpack.c.b16 %v2562, %v2546
    %v3683 = vpack.c.b16 %v2563, %v2547
    %v3684 = vpack.c.b16 %v2564, %v2548
    %v3685 = vpack.c.b16 %v2565, %v2549
    %v3686 = vpack.c.b16 %v2566, %v2550
    %v3687 = vpack.c.b16 %v2567, %v2551
    %v3688 = vpack.c.b16 %v2568, %v2552
    %v3689 = vpack.c.b16 %v2569, %v2553
    %v3690 = vpack.c.b16 %v2570, %v2554
    %v3691 = vpack.c.b16 %v2571, %v2555
    %v3692 = vpack.c.b16 %v2588, %v2572
    %v3693 = vpack.c.b16 %v2589, %v2573
    %v3694 = vpack.c.b16 %v2590, %v2574
    %v3695 = vpack.c.b16 %v2591, %v2575
    %v3696 = vpack.c.b16 %v2592, %v2576
    %v3697 = vpack.c.b16 %v2593, %v2577
    %v3698 = vpack.c.b16 %v2594, %v2578
    %v3699 = vpack.c.b16 %v2595, %v2579
    %v3700 = vpack.c.b16 %v2596, %v2580
    %v3701 = vpack.c.b16 %v2597, %v2581
    %v3702 = vpack.c.b16 %v2598, %v2582
    %v3703 = vpack.c.b16 %v2599, %v2583
    %v3704 = vpack.c.b16 %v2600, %v2584
    %v3705 = vpack.c.b16 %v2601, %v2585
    %v3706 = vpack.c.b16 %v2602, %v2586
    %v3707 = vpack.c.b16 %v2603, %v2587
    %v3708 = vpack.c.b16 %v2620, %v2604
    %v3709 = vpack.c.b16 %v2621, %v2605
    %v3710 = vpack.c.b16 %v2622, %v2606
    %v3711 = vpack.c.b16 %v2623, %v2607
    %v3712 = vpack.c.b16 %v2624, %v2608
    %v3713 = vpack.c.b16 %v2625, %v2609
    %v3714 = vpack.c.b16 %v2626, %v2610
    %v3715 = vpack.c.b16 %v2627, %v2611
    %v3716 = vpack.c.b16 %v2628, %v2612
    %v3717 = vpack.c.b16 %v2629, %v2613
    %v3718 = vpack.c.b16 %v2630, %v2614
    %v3719 = vpack.c.b16 %v2631, %v2615
    %v3720 = vpack.c.b16 %v2632, %v2616
    %v3721 = vpack.c.b16 %v2633, %v2617
    %v3722 = vpack.c.b16 %v2634, %v2618
    %v3723 = vpack.c.b16 %v2635, %v2619
    %v3724 = vpack.c.b16 %v2652, %v2636
    %v3725 = vpack.c.b16 %v2653, %v2637
    %v3726 = vpack.c.b16 %v2654, %v2638
    %v3727 = vpack.c.b16 %v2655, %v2639
    %v3728 = vpack.c.b16 %v2656, %v2640
    %v3729 = vpack.c.b16 %v2657, %v2641
    %v3730 = vpack.c.b16 %v2658, %v2642
    %v3731 = vpack.c.b16 %v2659, %v2643
    %v3732 = vpack.c.b16 %v2660, %v2644
    %v3733 = vpack.c.b16 %v2661, %v2645
    %v3734 = vpack.c.b16 %v2662, %v2646
    %v3735 = vpack.c.b16 %v2663, %v2647
    %v3736 = vpack.c.b16 %v2664, %v2648
    %v3737 = vpack.c.b16 %v2665, %v2649
    %v3738 = vpack.c.b16 %v2666, %v2650
    %v3739 = vpack.c.b16 %v2667, %v2651
    %v3740 = vpack.c.b16 %v2684, %v2668
    %v3741 = vpack.c.b16 %v2685, %v2669
    %v3742 = vpack.c.b16 %v2686, %v2670
    %v3743 = vpack.c.b16 %v2687, %v2671
    %v3744 = vpack.c.b16 %v2688, %v2672
    %v3745 = vpack.c.b16 %v2689, %v2673
    %v3746 = vpack.c.b16 %v2690, %v2674
    %v3747 = vpack.c.b16 %v2691, %v2675
    %v3748 = vpack.c.b16 %v2692, %v2676
    %v3749 = vpack.c.b16 %v2693, %v2677
    %v3750 = vpack.c.b16 %v2694, %v2678
    %v3751 = vpack.c.b16 %v2695, %v2679
    %v3752 = vpack.c.b16 %v2696, %v2680
    %v3753 = vpack.c.b16 %v2697, %v2681
    %v3754 = vpack.c.b16 %v2698, %v2682
    %v3755 = vpack.c.b16 %v2699, %v2683
    %v3756 = vpack.c.b16 %v2716, %v2700
    %v3757 = vpack.c.b16 %v2717, %v2701
    %v3758 = vpack.c.b16 %v2718, %v2702
    %v3759 = vpack.c.b16 %v2719, %v2703
    %v3760 = vpack.c.b16 %v2720, %v2704
    %v3761 = vpack.c.b16 %v2721, %v2705
    %v3762 = vpack.c.b16 %v2722, %v2706
    %v3763 = vpack.c.b16 %v2723, %v2707
    %v3764 = vpack.c.b16 %v2724, %v2708
    %v3765 = vpack.c.b16 %v2725, %v2709
    %v3766 = vpack.c.b16 %v2726, %v2710
    %v3767 = vpack.c.b16 %v2727, %v2711
    %v3768 = vpack.c.b16 %v2728, %v2712
    %v3769 = vpack.c.b16 %v2729, %v2713
    %v3770 = vpack.c.b16 %v2730, %v2714
    %v3771 = vpack.c.b16 %v2731, %v2715
    %v3772 = vpack.c.b16 %v2748, %v2732
    %v3773 = vpack.c.b16 %v2749, %v2733
    %v3774 = vpack.c.b16 %v2750, %v2734
    %v3775 = vpack.c.b16 %v2751, %v2735
    %v3776 = vpack.c.b16 %v2752, %v2736
    %v3777 = vpack.c.b16 %v2753, %v2737
    %v3778 = vpack.c.b16 %v2754, %v2738
    %v3779 = vpack.c.b16 %v2755, %v2739
    %v3780 = vpack.c.b16 %v2756, %v2740
    %v3781 = vpack.c.b16 %v2757, %v2741
    %v3782 = vpack.c.b16 %v2758, %v2742
    %v3783 = vpack.c.b16 %v2759, %v2743
    %v3784 = vpack.c.b16 %v2760, %v2744
    %v3785 = vpack.c.b16 %v2761, %v2745
    %v3786 = vpack.c.b16 %v2762, %v2746
    %v3787 = vpack.c.b16 %v2763, %v2747
    %v3788 = vpack.c.b16 %v2780, %v2764
    %v3789 = vpack.c.b16 %v2781, %v2765
    %v3790 = vpack.c.b16 %v2782, %v2766
    %v3791 = vpack.c.b16 %v2783, %v2767
    %v3792 = vpack.c.b16 %v2784, %v2768
    %v3793 = vpack.c.b16 %v2785, %v2769
    %v3794 = vpack.c.b16 %v2786, %v2770
    %v3795 = vpack.c.b16 %v2787, %v2771
    %v3796 = vpack.c.b16 %v2788, %v2772
    %v3797 = vpack.c.b16 %v2789, %v2773
    %v3798 = vpack.c.b16 %v2790, %v2774
    %v3799 = vpack.c.b16 %v2791, %v2775
    %v3800 = vpack.c.b16 %v2792, %v2776
    %v3801 = vpack.c.b16 %v2793, %v2777
    %v3802 = vpack.c.b16 %v2794, %v2778
    %v3803 = vpack.c.b16 %v2795, %v2779
    %v3804 = vpack.c.b16 %v2812, %v2796
    %v3805 = vpack.c.b16 %v2813, %v2797
    %v3806 = vpack.c.b16 %v2814, %v2798
    %v3807 = vpack.c.b16 %v2815, %v2799
    %v3808 = vpack.c.b16 %v2816, %v2800
    %v3809 = vpack.c.b16 %v2817, %v2801
    %v3810 = vpack.c.b16 %v2818, %v2802
    %v3811 = vpack.c.b16 %v2819, %v2803
    %v3812 = vpack.c.b16 %v2820, %v2804
    %v3813 = vpack.c.b16 %v2821, %v2805
    %v3814 = vpack.c.b16 %v2822, %v2806
    %v3815 = vpack.c.b16 %v2823, %v2807
    %v3816 = vpack.c.b16 %v2824, %v2808
    %v3817 = vpack.c.b16 %v2825, %v2809
    %v3818 = vpack.c.b16 %v2826, %v2810
    %v3819 = vpack.c.b16 %v2827, %v2811
    %v3820 = vpack.c.b16 %v2844, %v2828
    %v3821 = vpack.c.b16 %v2845, %v2829
    %v3822 = vpack.c.b16 %v2846, %v2830
    %v3823 = vpack.c.b16 %v2847, %v2831
    %v3824 = vpack.c.b16 %v2848, %v2832
    %v3825 = vpack.c.b16 %v2849, %v2833
    %v3826 = vpack.c.b16 %v2850, %v2834
    %v3827 = vpack.c.b16 %v2851, %v2835
    %v3828 = vpack.c.b16 %v2852, %v2836
    %v3829 = vpack.c.b16 %v2853, %v2837
    %v3830 = vpack.c.b16 %v2854, %v2838
    %v3831 = vpack.c.b16 %v2855, %v2839
    %v3832 = vpack.c.b16 %v2856, %v2840
    %v3833 = vpack.c.b16 %v2857, %v2841
    %v3834 = vpack.c.b16 %v2858, %v2842
    %v3835 = vpack.c.b16 %v2859, %v2843
    %v3836 = vpack.c.b16 %v2876, %v2860
    %v3837 = vpack.c.b16 %v2877, %v2861
    %v3838 = vpack.c.b16 %v2878, %v2862
    %v3839 = vpack.c.b16 %v2879, %v2863
    %v3840 = vpack.c.b16 %v2880, %v2864
    %v3841 = vpack.c.b16 %v2881, %v2865
    %v3842 = vpack.c.b16 %v2882, %v2866
    %v3843 = vpack.c.b16 %v2883, %v2867
    %v3844 = vpack.c.b16 %v2884, %v2868
    %v3845 = vpack.c.b16 %v2885, %v2869
    %v3846 = vpack.c.b16 %v2886, %v2870
    %v3847 = vpack.c.b16 %v2887, %v2871
    %v3848 = vpack.c.b16 %v2888, %v2872
    %v3849 = vpack.c.b16 %v2889, %v2873
    %v3850 = vpack.c.b16 %v2890, %v2874
    %v3851 = vpack.c.b16 %v2891, %v2875
    %v3852 = vpack.c.b16 %v2908, %v2892
    %v3853 = vpack.c.b16 %v2909, %v2893
    %v3854 = vpack.c.b16 %v2910, %v2894
    %v3855 = vpack.c.b16 %v2911, %v2895
    %v3856 = vpack.c.b16 %v2912, %v2896
    %v3857 = vpack.c.b16 %v2913, %v2897
    %v3858 = vpack.c.b16 %v2914, %v2898
    %v3859 = vpack.c.b16 %v2915, %v2899
    %v3860 = vpack.c.b16 %v2916, %v2900
    %v3861 = vpack.c.b16 %v2917, %v2901
    %v3862 = vpack.c.b16 %v2918, %v2902
    %v3863 = vpack.c.b16 %v2919, %v2903
    %v3864 = vpack.c.b16 %v2920, %v2904
    %v3865 = vpack.c.b16 %v2921, %v2905
    %v3866 = vpack.c.b16 %v2922, %v2906
    %v3867 = vpack.c.b16 %v2923, %v2907
    %v3868 = vpack.c.b16 %v2940, %v2924
    %v3869 = vpack.c.b16 %v2941, %v2925
    %v3870 = vpack.c.b16 %v2942, %v2926
    %v3871 = vpack.c.b16 %v2943, %v2927
    %v3872 = vpack.c.b16 %v2944, %v2928
    %v3873 = vpack.c.b16 %v2945, %v2929
    %v3874 = vpack.c.b16 %v2946, %v2930
    %v3875 = vpack.c.b16 %v2947, %v2931
    %v3876 = vpack.c.b16 %v2948, %v2932
    %v3877 = vpack.c.b16 %v2949, %v2933
    %v3878 = vpack.c.b16 %v2950, %v2934
    %v3879 = vpack.c.b16 %v2951, %v2935
    %v3880 = vpack.c.b16 %v2952, %v2936
    %v3881 = vpack.c.b16 %v2953, %v2937
    %v3882 = vpack.c.b16 %v2954, %v2938
    %v3883 = vpack.c.b16 %v2955, %v2939
    %v3884 = vpack.c.b16 %v2972, %v2956
    %v3885 = vpack.c.b16 %v2973, %v2957
    %v3886 = vpack.c.b16 %v2974, %v2958
    %v3887 = vpack.c.b16 %v2975, %v2959
    %v3888 = vpack.c.b16 %v2976, %v2960
    %v3889 = vpack.c.b16 %v2977, %v2961
    %v3890 = vpack.c.b16 %v2978, %v2962
    %v3891 = vpack.c.b16 %v2979, %v2963
    %v3892 = vpack.c.b16 %v2980, %v2964
    %v3893 = vpack.c.b16 %v2981, %v2965
    %v3894 = vpack.c.b16 %v2982, %v2966
    %v3895 = vpack.c.b16 %v2983, %v2967
    %v3896 = vpack.c.b16 %v2984, %v2968
    %v3897 = vpack.c.b16 %v2985, %v2969
    %v3898 = vpack.c.b16 %v2986, %v2970
    %v3899 = vpack.c.b16 %v2987, %v2971
    %v3900 = vpack.c.b16 %v3004, %v2988
    %v3901 = vpack.c.b16 %v3005, %v2989
    %v3902 = vpack.c.b16 %v3006, %v2990
    %v3903 = vpack.c.b16 %v3007, %v2991
    %v3904 = vpack.c.b16 %v3008, %v2992
    %v3905 = vpack.c.b16 %v3009, %v2993
    %v3906 = vpack.c.b16 %v3010, %v2994
    %v3907 = vpack.c.b16 %v3011, %v2995
    %v3908 = vpack.c.b16 %v3012, %v2996
    %v3909 = vpack.c.b16 %v3013, %v2997
    %v3910 = vpack.c.b16 %v3014, %v2998
    %v3911 = vpack.c.b16 %v3015, %v2999
    %v3912 = vpack.c.b16 %v3016, %v3000
    %v3913 = vpack.c.b16 %v3017, %v3001
    %v3914 = vpack.c.b16 %v3018, %v3002
    %v3915 = vpack.c.b16 %v3019, %v3003
    %v3916 = vpack.c.b16 %v3036, %v3020
    %v3917 = vpack.c.b16 %v3037, %v3021
    %v3918 = vpack.c.b16 %v3038, %v3022
    %v3919 = vpack.c.b16 %v3039, %v3023
    %v3920 = vpack.c.b16 %v3040, %v3024
    %v3921 = vpack.c.b16 %v3041, %v3025
    %v3922 = vpack.c.b16 %v3042, %v3026
    %v3923 = vpack.c.b16 %v3043, %v3027
    %v3924 = vpack.c.b16 %v3044, %v3028
    %v3925 = vpack.c.b16 %v3045, %v3029
    %v3926 = vpack.c.b16 %v3046, %v3030
    %v3927 = vpack.c.b16 %v3047, %v3031
    %v3928 = vpack.c.b16 %v3048, %v3032
    %v3929 = vpack.c.b16 %v3049, %v3033
    %v3930 = vpack.c.b16 %v3050, %v3034
    %v3931 = vpack.c.b16 %v3051, %v3035
    %v3932 = vpack.c.b16 %v3068, %v3052
    %v3933 = vpack.c.b16 %v3069, %v3053
    %v3934 = vpack.c.b16 %v3070, %v3054
    %v3935 = vpack.c.b16 %v3071, %v3055
    %v3936 = vpack.c.b16 %v3072, %v3056
    %v3937 = vpack.c.b16 %v3073, %v3057
    %v3938 = vpack.c.b16 %v3074, %v3058
    %v3939 = vpack.c.b16 %v3075, %v3059
    %v3940 = vpack.c.b16 %v3076, %v3060
    %v3941 = vpack.c.b16 %v3077, %v3061
    %v3942 = vpack.c.b16 %v3078, %v3062
    %v3943 = vpack.c.b16 %v3079, %v3063
    %v3944 = vpack.c.b16 %v3080, %v3064
    %v3945 = vpack.c.b16 %v3081, %v3065
    %v3946 = vpack.c.b16 %v3082, %v3066
    %v3947 = vpack.c.b16 %v3083, %v3067
    %v3948 = vpack.c.b16 %v3100, %v3084
    %v3949 = vpack.c.b16 %v3101, %v3085
    %v3950 = vpack.c.b16 %v3102, %v3086
    %v3951 = vpack.c.b16 %v3103, %v3087
    %v3952 = vpack.c.b16 %v3104, %v3088
    %v3953 = vpack.c.b16 %v3105, %v3089
    %v3954 = vpack.c.b16 %v3106, %v3090
    %v3955 = vpack.c.b16 %v3107, %v3091
    %v3956 = vpack.c.b16 %v3108, %v3092
    %v3957 = vpack.c.b16 %v3109, %v3093
    %v3958 = vpack.c.b16 %v3110, %v3094
    %v3959 = vpack.c.b16 %v3111, %v3095
    %v3960 = vpack.c.b16 %v3112, %v3096
    %v3961 = vpack.c.b16 %v3113, %v3097
    %v3962 = vpack.c.b16 %v3114, %v3098
    %v3963 = vpack.c.b16 %v3115, %v3099
    %v3964 = vpack.c.b16 %v3132, %v3116
    %v3965 = vpack.c.b16 %v3133, %v3117
    %v3966 = vpack.c.b16 %v3134, %v3118
    %v3967 = vpack.c.b16 %v3135, %v3119
    %v3968 = vpack.c.b16 %v3136, %v3120
    %v3969 = vpack.c.b16 %v3137, %v3121
    %v3970 = vpack.c.b16 %v3138, %v3122
    %v3971 = vpack.c.b16 %v3139, %v3123
    %v3972 = vpack.c.b16 %v3140, %v3124
    %v3973 = vpack.c.b16 %v3141, %v3125
    %v3974 = vpack.c.b16 %v3142, %v3126
    %v3975 = vpack.c.b16 %v3143, %v3127
    %v3976 = vpack.c.b16 %v3144, %v3128
    %v3977 = vpack.c.b16 %v3145, %v3129
    %v3978 = vpack.c.b16 %v3146, %v3130
    %v3979 = vpack.c.b16 %v3147, %v3131
    %v3980 = vpack.c.b16 %v3164, %v3148
    %v3981 = vpack.c.b16 %v3165, %v3149
    %v3982 = vpack.c.b16 %v3166, %v3150
    %v3983 = vpack.c.b16 %v3167, %v3151
    %v3984 = vpack.c.b16 %v3168, %v3152
    %v3985 = vpack.c.b16 %v3169, %v3153
    %v3986 = vpack.c.b16 %v3170, %v3154
    %v3987 = vpack.c.b16 %v3171, %v3155
    %v3988 = vpack.c.b16 %v3172, %v3156
    %v3989 = vpack.c.b16 %v3173, %v3157
    %v3990 = vpack.c.b16 %v3174, %v3158
    %v3991 = vpack.c.b16 %v3175, %v3159
    %v3992 = vpack.c.b16 %v3176, %v3160
    %v3993 = vpack.c.b16 %v3177, %v3161
    %v3994 = vpack.c.b16 %v3178, %v3162
    %v3995 = vpack.c.b16 %v3179, %v3163
    %v3996 = vpack.c.b16 %v3196, %v3180
    %v3997 = vpack.c.b16 %v3197, %v3181
    %v3998 = vpack.c.b16 %v3198, %v3182
    %v3999 = vpack.c.b16 %v3199, %v3183
    %v4000 = vpack.c.b16 %v3200, %v3184
    %v4001 = vpack.c.b16 %v3201, %v3185
    %v4002 = vpack.c.b16 %v3202, %v3186
    %v4003 = vpack.c.b16 %v3203, %v3187
    %v4004 = vpack.c.b16 %v3204, %v3188
    %v4005 = vpack.c.b16 %v3205, %v3189
    %v4006 = vpack.c.b16 %v3206, %v3190
    %v4007 = vpack.c.b16 %v3207, %v3191
    %v4008 = vpack.c.b16 %v3208, %v3192
    %v4009 = vpack.c.b16 %v3209, %v3193
    %v4010 = vpack.c.b16 %v3210, %v3194
    %v4011 = vpack.c.b16 %v3211, %v3195
    %v4012 = vpack.c.b16 %v3228, %v3212
    %v4013 = vpack.c.b16 %v3229, %v3213
    %v4014 = vpack.c.b16 %v3230, %v3214
    %v4015 = vpack.c.b16 %v3231, %v3215
    %v4016 = vpack.c.b16 %v3232, %v3216
    %v4017 = vpack.c.b16 %v3233, %v3217
    %v4018 = vpack.c.b16 %v3234, %v3218
    %v4019 = vpack.c.b16 %v3235, %v3219
    %v4020 = vpack.c.b16 %v3236, %v3220
    %v4021 = vpack.c.b16 %v3237, %v3221
    %v4022 = vpack.c.b16 %v3238, %v3222
    %v4023 = vpack.c.b16 %v3239, %v3223
    %v4024 = vpack.c.b16 %v3240, %v3224
    %v4025 = vpack.c.b16 %v3241, %v3225
    %v4026 = vpack.c.b16 %v3242, %v3226
    %v4027 = vpack.c.b16 %v3243, %v3227
    %vm4812 = vcmask 130048
    %v4814 = vsel %vm4812, %v885, 0
    %4816 = vmatpush.bf16.msra.mxu0 %v3356
    %4817 = vmatpush.bf16.msra.mxu0 %v3340
    %4818 = vmatpush.bf16.msra.mxu0 %v3324
    %4819 = vmatpush.bf16.msra.mxu0 %v3308
    %4820 = vmatpush.bf16.msra.mxu0 %v3292
    %4821 = vmatpush.bf16.msra.mxu0 %v3276
    %4822 = vmatpush.bf16.msra.mxu0 %v3260
    %4823 = vmatpush.bf16.msra.mxu0 %v3244
    %4824 = vmatmul.bf16.gmra.mxu0 %v879
    %v4825 = vpop.f32.mrf.mxu0
    %v4826 = vadd.f32 0.0, %v4825
    %v4827 = vpop.f32.mrf.mxu0
    %4828 = vdwg.mxu0
    %4829 = vmatpush.bf16.msra.mxu0 %v3484
    %4830 = vmatpush.bf16.msra.mxu0 %v3468
    %4831 = vmatpush.bf16.msra.mxu0 %v3452
    %4832 = vmatpush.bf16.msra.mxu0 %v3436
    %4833 = vmatpush.bf16.msra.mxu0 %v3420
    %4834 = vmatpush.bf16.msra.mxu0 %v3404
    %4835 = vmatpush.bf16.msra.mxu0 %v3388
    %4836 = vmatpush.bf16.msra.mxu0 %v3372
    %4837 = vmatmul.bf16.gmra.mxu0 %v880
    %v4838 = vpop.f32.mrf.mxu0
    %v4839 = vadd.f32 %v4826, %v4838
    %v4840 = vpop.f32.mrf.mxu0
    %4841 = vdwg.mxu0
    %4842 = vmatpush.bf16.msra.mxu0 %v3612
    %4843 = vmatpush.bf16.msra.mxu0 %v3596
    %4844 = vmatpush.bf16.msra.mxu0 %v3580
    %4845 = vmatpush.bf16.msra.mxu0 %v3564
    %4846 = vmatpush.bf16.msra.mxu0 %v3548
    %4847 = vmatpush.bf16.msra.mxu0 %v3532
    %4848 = vmatpush.bf16.msra.mxu0 %v3516
    %4849 = vmatpush.bf16.msra.mxu0 %v3500
    %4850 = vmatmul.bf16.gmra.mxu0 %v881
    %v4851 = vpop.f32.mrf.mxu0
    %v4852 = vadd.f32 %v4839, %v4851
    %v4853 = vpop.f32.mrf.mxu0
    %4854 = vdwg.mxu0
    %4855 = vmatpush.bf16.msra.mxu0 %v3740
    %4856 = vmatpush.bf16.msra.mxu0 %v3724
    %4857 = vmatpush.bf16.msra.mxu0 %v3708
    %4858 = vmatpush.bf16.msra.mxu0 %v3692
    %4859 = vmatpush.bf16.msra.mxu0 %v3676
    %4860 = vmatpush.bf16.msra.mxu0 %v3660
    %4861 = vmatpush.bf16.msra.mxu0 %v3644
    %4862 = vmatpush.bf16.msra.mxu0 %v3628
    %4863 = vmatmul.bf16.gmra.mxu0 %v882
    %v4864 = vpop.f32.mrf.mxu0
    %v4865 = vadd.f32 %v4852, %v4864
    %v4866 = vpop.f32.mrf.mxu0
    %4867 = vdwg.mxu0
    %4868 = vmatpush.bf16.msra.mxu0 %v3868
    %4869 = vmatpush.bf16.msra.mxu0 %v3852
    %4870 = vmatpush.bf16.msra.mxu0 %v3836
    %4871 = vmatpush.bf16.msra.mxu0 %v3820
    %4872 = vmatpush.bf16.msra.mxu0 %v3804
    %4873 = vmatpush.bf16.msra.mxu0 %v3788
    %4874 = vmatpush.bf16.msra.mxu0 %v3772
    %4875 = vmatpush.bf16.msra.mxu0 %v3756
    %4876 = vmatmul.bf16.gmra.mxu0 %v883
    %v4877 = vpop.f32.mrf.mxu0
    %v4878 = vadd.f32 %v4865, %v4877
    %v4879 = vpop.f32.mrf.mxu0
    %4880 = vdwg.mxu0
    %4881 = vmatpush.bf16.msra.mxu0 %v3996
    %4882 = vmatpush.bf16.msra.mxu0 %v3980
    %4883 = vmatpush.bf16.msra.mxu0 %v3964
    %4884 = vmatpush.bf16.msra.mxu0 %v3948
    %4885 = vmatpush.bf16.msra.mxu0 %v3932
    %4886 = vmatpush.bf16.msra.mxu0 %v3916
    %4887 = vmatpush.bf16.msra.mxu0 %v3900
    %4888 = vmatpush.bf16.msra.mxu0 %v3884
    %4889 = vmatmul.bf16.gmra.mxu0 %v884
    %v4890 = vpop.f32.mrf.mxu0
    %v4891 = vadd.f32 %v4878, %v4890
    %v4892 = vpop.f32.mrf.mxu0
    %4893 = vdwg.mxu0
    %4894 = vmatpush.bf16.msra.mxu0 0
    %4895 = vmatpush.bf16.msra.mxu0 0
    %4896 = vmatpush.bf16.msra.mxu0 0
    %4897 = vmatpush.bf16.msra.mxu0 0
    %4898 = vmatpush.bf16.msra.mxu0 0
    %4899 = vmatpush.bf16.msra.mxu0 0
    %4900 = vmatpush.bf16.msra.mxu0 0
    %4901 = vmatpush.bf16.msra.mxu0 %v4012
    %4902 = vmatmul.bf16.gmra.mxu0 %v4814
    %v4903 = vpop.f32.mrf.mxu0
    %v4904 = vadd.f32 %v4891, %v4903
    %v4905 = vpop.f32.mrf.mxu0
    %4906 = vdwg.mxu0
    %4907 = vmatpush.bf16.msra.mxu0 %v3357
    %4908 = vmatpush.bf16.msra.mxu0 %v3341
    %4909 = vmatpush.bf16.msra.mxu0 %v3325
    %4910 = vmatpush.bf16.msra.mxu0 %v3309
    %4911 = vmatpush.bf16.msra.mxu0 %v3293
    %4912 = vmatpush.bf16.msra.mxu0 %v3277
    %4913 = vmatpush.bf16.msra.mxu0 %v3261
    %4914 = vmatpush.bf16.msra.mxu0 %v3245
    %4915 = vmatmul.bf16.gmra.mxu0 %v879
    %v4916 = vpop.f32.mrf.mxu0
    %v4917 = vadd.f32 0.0, %v4916
    %v4918 = vpop.f32.mrf.mxu0
    %4919 = vdwg.mxu0
    %4920 = vmatpush.bf16.msra.mxu0 %v3485
    %4921 = vmatpush.bf16.msra.mxu0 %v3469
    %4922 = vmatpush.bf16.msra.mxu0 %v3453
    %4923 = vmatpush.bf16.msra.mxu0 %v3437
    %4924 = vmatpush.bf16.msra.mxu0 %v3421
    %4925 = vmatpush.bf16.msra.mxu0 %v3405
    %4926 = vmatpush.bf16.msra.mxu0 %v3389
    %4927 = vmatpush.bf16.msra.mxu0 %v3373
    %4928 = vmatmul.bf16.gmra.mxu0 %v880
    %v4929 = vpop.f32.mrf.mxu0
    %v4930 = vadd.f32 %v4917, %v4929
    %v4931 = vpop.f32.mrf.mxu0
    %4932 = vdwg.mxu0
    %4933 = vmatpush.bf16.msra.mxu0 %v3613
    %4934 = vmatpush.bf16.msra.mxu0 %v3597
    %4935 = vmatpush.bf16.msra.mxu0 %v3581
    %4936 = vmatpush.bf16.msra.mxu0 %v3565
    %4937 = vmatpush.bf16.msra.mxu0 %v3549
    %4938 = vmatpush.bf16.msra.mxu0 %v3533
    %4939 = vmatpush.bf16.msra.mxu0 %v3517
    %4940 = vmatpush.bf16.msra.mxu0 %v3501
    %4941 = vmatmul.bf16.gmra.mxu0 %v881
    %v4942 = vpop.f32.mrf.mxu0
    %v4943 = vadd.f32 %v4930, %v4942
    %v4944 = vpop.f32.mrf.mxu0
    %4945 = vdwg.mxu0
    %4946 = vmatpush.bf16.msra.mxu0 %v3741
    %4947 = vmatpush.bf16.msra.mxu0 %v3725
    %4948 = vmatpush.bf16.msra.mxu0 %v3709
    %4949 = vmatpush.bf16.msra.mxu0 %v3693
    %4950 = vmatpush.bf16.msra.mxu0 %v3677
    %4951 = vmatpush.bf16.msra.mxu0 %v3661
    %4952 = vmatpush.bf16.msra.mxu0 %v3645
    %4953 = vmatpush.bf16.msra.mxu0 %v3629
    %4954 = vmatmul.bf16.gmra.mxu0 %v882
    %v4955 = vpop.f32.mrf.mxu0
    %v4956 = vadd.f32 %v4943, %v4955
    %v4957 = vpop.f32.mrf.mxu0
    %4958 = vdwg.mxu0
    %4959 = vmatpush.bf16.msra.mxu0 %v3869
    %4960 = vmatpush.bf16.msra.mxu0 %v3853
    %4961 = vmatpush.bf16.msra.mxu0 %v3837
    %4962 = vmatpush.bf16.msra.mxu0 %v3821
    %4963 = vmatpush.bf16.msra.mxu0 %v3805
    %4964 = vmatpush.bf16.msra.mxu0 %v3789
    %4965 = vmatpush.bf16.msra.mxu0 %v3773
    %4966 = vmatpush.bf16.msra.mxu0 %v3757
    %4967 = vmatmul.bf16.gmra.mxu0 %v883
    %v4968 = vpop.f32.mrf.mxu0
    %v4969 = vadd.f32 %v4956, %v4968
    %v4970 = vpop.f32.mrf.mxu0
    %4971 = vdwg.mxu0
    %4972 = vmatpush.bf16.msra.mxu0 %v3997
    %4973 = vmatpush.bf16.msra.mxu0 %v3981
    %4974 = vmatpush.bf16.msra.mxu0 %v3965
    %4975 = vmatpush.bf16.msra.mxu0 %v3949
    %4976 = vmatpush.bf16.msra.mxu0 %v3933
    %4977 = vmatpush.bf16.msra.mxu0 %v3917
    %4978 = vmatpush.bf16.msra.mxu0 %v3901
    %4979 = vmatpush.bf16.msra.mxu0 %v3885
    %4980 = vmatmul.bf16.gmra.mxu0 %v884
    %v4981 = vpop.f32.mrf.mxu0
    %v4982 = vadd.f32 %v4969, %v4981
    %v4983 = vpop.f32.mrf.mxu0
    %4984 = vdwg.mxu0
    %4985 = vmatpush.bf16.msra.mxu0 0
    %4986 = vmatpush.bf16.msra.mxu0 0
    %4987 = vmatpush.bf16.msra.mxu0 0
    %4988 = vmatpush.bf16.msra.mxu0 0
    %4989 = vmatpush.bf16.msra.mxu0 0
    %4990 = vmatpush.bf16.msra.mxu0 0
    %4991 = vmatpush.bf16.msra.mxu0 0
    %4992 = vmatpush.bf16.msra.mxu0 %v4013
    %4993 = vmatmul.bf16.gmra.mxu0 %v4814
    %v4994 = vpop.f32.mrf.mxu0
    %v4995 = vadd.f32 %v4982, %v4994
    %v4996 = vpop.f32.mrf.mxu0
    %4997 = vdwg.mxu0
    %4998 = vmatpush.bf16.msra.mxu0 %v3358
    %4999 = vmatpush.bf16.msra.mxu0 %v3342
    %5000 = vmatpush.bf16.msra.mxu0 %v3326
    %5001 = vmatpush.bf16.msra.mxu0 %v3310
    %5002 = vmatpush.bf16.msra.mxu0 %v3294
    %5003 = vmatpush.bf16.msra.mxu0 %v3278
    %5004 = vmatpush.bf16.msra.mxu0 %v3262
    %5005 = vmatpush.bf16.msra.mxu0 %v3246
    %5006 = vmatmul.bf16.gmra.mxu0 %v879
    %v5007 = vpop.f32.mrf.mxu0
    %v5008 = vadd.f32 0.0, %v5007
    %v5009 = vpop.f32.mrf.mxu0
    %5010 = vdwg.mxu0
    %5011 = vmatpush.bf16.msra.mxu0 %v3486
    %5012 = vmatpush.bf16.msra.mxu0 %v3470
    %5013 = vmatpush.bf16.msra.mxu0 %v3454
    %5014 = vmatpush.bf16.msra.mxu0 %v3438
    %5015 = vmatpush.bf16.msra.mxu0 %v3422
    %5016 = vmatpush.bf16.msra.mxu0 %v3406
    %5017 = vmatpush.bf16.msra.mxu0 %v3390
    %5018 = vmatpush.bf16.msra.mxu0 %v3374
    %5019 = vmatmul.bf16.gmra.mxu0 %v880
    %v5020 = vpop.f32.mrf.mxu0
    %v5021 = vadd.f32 %v5008, %v5020
    %v5022 = vpop.f32.mrf.mxu0
    %5023 = vdwg.mxu0
    %5024 = vmatpush.bf16.msra.mxu0 %v3614
    %5025 = vmatpush.bf16.msra.mxu0 %v3598
    %5026 = vmatpush.bf16.msra.mxu0 %v3582
    %5027 = vmatpush.bf16.msra.mxu0 %v3566
    %5028 = vmatpush.bf16.msra.mxu0 %v3550
    %5029 = vmatpush.bf16.msra.mxu0 %v3534
    %5030 = vmatpush.bf16.msra.mxu0 %v3518
    %5031 = vmatpush.bf16.msra.mxu0 %v3502
    %5032 = vmatmul.bf16.gmra.mxu0 %v881
    %v5033 = vpop.f32.mrf.mxu0
    %v5034 = vadd.f32 %v5021, %v5033
    %v5035 = vpop.f32.mrf.mxu0
    %5036 = vdwg.mxu0
    %5037 = vmatpush.bf16.msra.mxu0 %v3742
    %5038 = vmatpush.bf16.msra.mxu0 %v3726
    %5039 = vmatpush.bf16.msra.mxu0 %v3710
    %5040 = vmatpush.bf16.msra.mxu0 %v3694
    %5041 = vmatpush.bf16.msra.mxu0 %v3678
    %5042 = vmatpush.bf16.msra.mxu0 %v3662
    %5043 = vmatpush.bf16.msra.mxu0 %v3646
    %5044 = vmatpush.bf16.msra.mxu0 %v3630
    %5045 = vmatmul.bf16.gmra.mxu0 %v882
    %v5046 = vpop.f32.mrf.mxu0
    %v5047 = vadd.f32 %v5034, %v5046
    %v5048 = vpop.f32.mrf.mxu0
    %5049 = vdwg.mxu0
    %5050 = vmatpush.bf16.msra.mxu0 %v3870
    %5051 = vmatpush.bf16.msra.mxu0 %v3854
    %5052 = vmatpush.bf16.msra.mxu0 %v3838
    %5053 = vmatpush.bf16.msra.mxu0 %v3822
    %5054 = vmatpush.bf16.msra.mxu0 %v3806
    %5055 = vmatpush.bf16.msra.mxu0 %v3790
    %5056 = vmatpush.bf16.msra.mxu0 %v3774
    %5057 = vmatpush.bf16.msra.mxu0 %v3758
    %5058 = vmatmul.bf16.gmra.mxu0 %v883
    %v5059 = vpop.f32.mrf.mxu0
    %v5060 = vadd.f32 %v5047, %v5059
    %v5061 = vpop.f32.mrf.mxu0
    %5062 = vdwg.mxu0
    %5063 = vmatpush.bf16.msra.mxu0 %v3998
    %5064 = vmatpush.bf16.msra.mxu0 %v3982
    %5065 = vmatpush.bf16.msra.mxu0 %v3966
    %5066 = vmatpush.bf16.msra.mxu0 %v3950
    %5067 = vmatpush.bf16.msra.mxu0 %v3934
    %5068 = vmatpush.bf16.msra.mxu0 %v3918
    %5069 = vmatpush.bf16.msra.mxu0 %v3902
    %5070 = vmatpush.bf16.msra.mxu0 %v3886
    %5071 = vmatmul.bf16.gmra.mxu0 %v884
    %v5072 = vpop.f32.mrf.mxu0
    %v5073 = vadd.f32 %v5060, %v5072
    %v5074 = vpop.f32.mrf.mxu0
    %5075 = vdwg.mxu0
    %5076 = vmatpush.bf16.msra.mxu0 0
    %5077 = vmatpush.bf16.msra.mxu0 0
    %5078 = vmatpush.bf16.msra.mxu0 0
    %5079 = vmatpush.bf16.msra.mxu0 0
    %5080 = vmatpush.bf16.msra.mxu0 0
    %5081 = vmatpush.bf16.msra.mxu0 0
    %5082 = vmatpush.bf16.msra.mxu0 0
    %5083 = vmatpush.bf16.msra.mxu0 %v4014
    %5084 = vmatmul.bf16.gmra.mxu0 %v4814
    %v5085 = vpop.f32.mrf.mxu0
    %v5086 = vadd.f32 %v5073, %v5085
    %v5087 = vpop.f32.mrf.mxu0
    %5088 = vdwg.mxu0
    %5089 = vmatpush.bf16.msra.mxu0 %v3359
    %5090 = vmatpush.bf16.msra.mxu0 %v3343
    %5091 = vmatpush.bf16.msra.mxu0 %v3327
    %5092 = vmatpush.bf16.msra.mxu0 %v3311
    %5093 = vmatpush.bf16.msra.mxu0 %v3295
    %5094 = vmatpush.bf16.msra.mxu0 %v3279
    %5095 = vmatpush.bf16.msra.mxu0 %v3263
    %5096 = vmatpush.bf16.msra.mxu0 %v3247
    %5097 = vmatmul.bf16.gmra.mxu0 %v879
    %v5098 = vpop.f32.mrf.mxu0
    %v5099 = vadd.f32 0.0, %v5098
    %v5100 = vpop.f32.mrf.mxu0
    %5101 = vdwg.mxu0
    %5102 = vmatpush.bf16.msra.mxu0 %v3487
    %5103 = vmatpush.bf16.msra.mxu0 %v3471
    %5104 = vmatpush.bf16.msra.mxu0 %v3455
    %5105 = vmatpush.bf16.msra.mxu0 %v3439
    %5106 = vmatpush.bf16.msra.mxu0 %v3423
    %5107 = vmatpush.bf16.msra.mxu0 %v3407
    %5108 = vmatpush.bf16.msra.mxu0 %v3391
    %5109 = vmatpush.bf16.msra.mxu0 %v3375
    %5110 = vmatmul.bf16.gmra.mxu0 %v880
    %v5111 = vpop.f32.mrf.mxu0
    %v5112 = vadd.f32 %v5099, %v5111
    %v5113 = vpop.f32.mrf.mxu0
    %5114 = vdwg.mxu0
    %5115 = vmatpush.bf16.msra.mxu0 %v3615
    %5116 = vmatpush.bf16.msra.mxu0 %v3599
    %5117 = vmatpush.bf16.msra.mxu0 %v3583
    %5118 = vmatpush.bf16.msra.mxu0 %v3567
    %5119 = vmatpush.bf16.msra.mxu0 %v3551
    %5120 = vmatpush.bf16.msra.mxu0 %v3535
    %5121 = vmatpush.bf16.msra.mxu0 %v3519
    %5122 = vmatpush.bf16.msra.mxu0 %v3503
    %5123 = vmatmul.bf16.gmra.mxu0 %v881
    %v5124 = vpop.f32.mrf.mxu0
    %v5125 = vadd.f32 %v5112, %v5124
    %v5126 = vpop.f32.mrf.mxu0
    %5127 = vdwg.mxu0
    %5128 = vmatpush.bf16.msra.mxu0 %v3743
    %5129 = vmatpush.bf16.msra.mxu0 %v3727
    %5130 = vmatpush.bf16.msra.mxu0 %v3711
    %5131 = vmatpush.bf16.msra.mxu0 %v3695
    %5132 = vmatpush.bf16.msra.mxu0 %v3679
    %5133 = vmatpush.bf16.msra.mxu0 %v3663
    %5134 = vmatpush.bf16.msra.mxu0 %v3647
    %5135 = vmatpush.bf16.msra.mxu0 %v3631
    %5136 = vmatmul.bf16.gmra.mxu0 %v882
    %v5137 = vpop.f32.mrf.mxu0
    %v5138 = vadd.f32 %v5125, %v5137
    %v5139 = vpop.f32.mrf.mxu0
    %5140 = vdwg.mxu0
    %5141 = vmatpush.bf16.msra.mxu0 %v3871
    %5142 = vmatpush.bf16.msra.mxu0 %v3855
    %5143 = vmatpush.bf16.msra.mxu0 %v3839
    %5144 = vmatpush.bf16.msra.mxu0 %v3823
    %5145 = vmatpush.bf16.msra.mxu0 %v3807
    %5146 = vmatpush.bf16.msra.mxu0 %v3791
    %5147 = vmatpush.bf16.msra.mxu0 %v3775
    %5148 = vmatpush.bf16.msra.mxu0 %v3759
    %5149 = vmatmul.bf16.gmra.mxu0 %v883
    %v5150 = vpop.f32.mrf.mxu0
    %v5151 = vadd.f32 %v5138, %v5150
    %v5152 = vpop.f32.mrf.mxu0
    %5153 = vdwg.mxu0
    %5154 = vmatpush.bf16.msra.mxu0 %v3999
    %5155 = vmatpush.bf16.msra.mxu0 %v3983
    %5156 = vmatpush.bf16.msra.mxu0 %v3967
    %5157 = vmatpush.bf16.msra.mxu0 %v3951
    %5158 = vmatpush.bf16.msra.mxu0 %v3935
    %5159 = vmatpush.bf16.msra.mxu0 %v3919
    %5160 = vmatpush.bf16.msra.mxu0 %v3903
    %5161 = vmatpush.bf16.msra.mxu0 %v3887
    %5162 = vmatmul.bf16.gmra.mxu0 %v884
    %v5163 = vpop.f32.mrf.mxu0
    %v5164 = vadd.f32 %v5151, %v5163
    %v5165 = vpop.f32.mrf.mxu0
    %5166 = vdwg.mxu0
    %5167 = vmatpush.bf16.msra.mxu0 0
    %5168 = vmatpush.bf16.msra.mxu0 0
    %5169 = vmatpush.bf16.msra.mxu0 0
    %5170 = vmatpush.bf16.msra.mxu0 0
    %5171 = vmatpush.bf16.msra.mxu0 0
    %5172 = vmatpush.bf16.msra.mxu0 0
    %5173 = vmatpush.bf16.msra.mxu0 0
    %5174 = vmatpush.bf16.msra.mxu0 %v4015
    %5175 = vmatmul.bf16.gmra.mxu0 %v4814
    %v5176 = vpop.f32.mrf.mxu0
    %v5177 = vadd.f32 %v5164, %v5176
    %v5178 = vpop.f32.mrf.mxu0
    %5179 = vdwg.mxu0
    %5180 = vmatpush.bf16.msra.mxu0 %v3360
    %5181 = vmatpush.bf16.msra.mxu0 %v3344
    %5182 = vmatpush.bf16.msra.mxu0 %v3328
    %5183 = vmatpush.bf16.msra.mxu0 %v3312
    %5184 = vmatpush.bf16.msra.mxu0 %v3296
    %5185 = vmatpush.bf16.msra.mxu0 %v3280
    %5186 = vmatpush.bf16.msra.mxu0 %v3264
    %5187 = vmatpush.bf16.msra.mxu0 %v3248
    %5188 = vmatmul.bf16.gmra.mxu0 %v879
    %v5189 = vpop.f32.mrf.mxu0
    %v5190 = vadd.f32 0.0, %v5189
    %v5191 = vpop.f32.mrf.mxu0
    %5192 = vdwg.mxu0
    %5193 = vmatpush.bf16.msra.mxu0 %v3488
    %5194 = vmatpush.bf16.msra.mxu0 %v3472
    %5195 = vmatpush.bf16.msra.mxu0 %v3456
    %5196 = vmatpush.bf16.msra.mxu0 %v3440
    %5197 = vmatpush.bf16.msra.mxu0 %v3424
    %5198 = vmatpush.bf16.msra.mxu0 %v3408
    %5199 = vmatpush.bf16.msra.mxu0 %v3392
    %5200 = vmatpush.bf16.msra.mxu0 %v3376
    %5201 = vmatmul.bf16.gmra.mxu0 %v880
    %v5202 = vpop.f32.mrf.mxu0
    %v5203 = vadd.f32 %v5190, %v5202
    %v5204 = vpop.f32.mrf.mxu0
    %5205 = vdwg.mxu0
    %5206 = vmatpush.bf16.msra.mxu0 %v3616
    %5207 = vmatpush.bf16.msra.mxu0 %v3600
    %5208 = vmatpush.bf16.msra.mxu0 %v3584
    %5209 = vmatpush.bf16.msra.mxu0 %v3568
    %5210 = vmatpush.bf16.msra.mxu0 %v3552
    %5211 = vmatpush.bf16.msra.mxu0 %v3536
    %5212 = vmatpush.bf16.msra.mxu0 %v3520
    %5213 = vmatpush.bf16.msra.mxu0 %v3504
    %5214 = vmatmul.bf16.gmra.mxu0 %v881
    %v5215 = vpop.f32.mrf.mxu0
    %v5216 = vadd.f32 %v5203, %v5215
    %v5217 = vpop.f32.mrf.mxu0
    %5218 = vdwg.mxu0
    %5219 = vmatpush.bf16.msra.mxu0 %v3744
    %5220 = vmatpush.bf16.msra.mxu0 %v3728
    %5221 = vmatpush.bf16.msra.mxu0 %v3712
    %5222 = vmatpush.bf16.msra.mxu0 %v3696
    %5223 = vmatpush.bf16.msra.mxu0 %v3680
    %5224 = vmatpush.bf16.msra.mxu0 %v3664
    %5225 = vmatpush.bf16.msra.mxu0 %v3648
    %5226 = vmatpush.bf16.msra.mxu0 %v3632
    %5227 = vmatmul.bf16.gmra.mxu0 %v882
    %v5228 = vpop.f32.mrf.mxu0
    %v5229 = vadd.f32 %v5216, %v5228
    %v5230 = vpop.f32.mrf.mxu0
    %5231 = vdwg.mxu0
    %5232 = vmatpush.bf16.msra.mxu0 %v3872
    %5233 = vmatpush.bf16.msra.mxu0 %v3856
    %5234 = vmatpush.bf16.msra.mxu0 %v3840
    %5235 = vmatpush.bf16.msra.mxu0 %v3824
    %5236 = vmatpush.bf16.msra.mxu0 %v3808
    %5237 = vmatpush.bf16.msra.mxu0 %v3792
    %5238 = vmatpush.bf16.msra.mxu0 %v3776
    %5239 = vmatpush.bf16.msra.mxu0 %v3760
    %5240 = vmatmul.bf16.gmra.mxu0 %v883
    %v5241 = vpop.f32.mrf.mxu0
    %v5242 = vadd.f32 %v5229, %v5241
    %v5243 = vpop.f32.mrf.mxu0
    %5244 = vdwg.mxu0
    %5245 = vmatpush.bf16.msra.mxu0 %v4000
    %5246 = vmatpush.bf16.msra.mxu0 %v3984
    %5247 = vmatpush.bf16.msra.mxu0 %v3968
    %5248 = vmatpush.bf16.msra.mxu0 %v3952
    %5249 = vmatpush.bf16.msra.mxu0 %v3936
    %5250 = vmatpush.bf16.msra.mxu0 %v3920
    %5251 = vmatpush.bf16.msra.mxu0 %v3904
    %5252 = vmatpush.bf16.msra.mxu0 %v3888
    %5253 = vmatmul.bf16.gmra.mxu0 %v884
    %v5254 = vpop.f32.mrf.mxu0
    %v5255 = vadd.f32 %v5242, %v5254
    %v5256 = vpop.f32.mrf.mxu0
    %5257 = vdwg.mxu0
    %5258 = vmatpush.bf16.msra.mxu0 0
    %5259 = vmatpush.bf16.msra.mxu0 0
    %5260 = vmatpush.bf16.msra.mxu0 0
    %5261 = vmatpush.bf16.msra.mxu0 0
    %5262 = vmatpush.bf16.msra.mxu0 0
    %5263 = vmatpush.bf16.msra.mxu0 0
    %5264 = vmatpush.bf16.msra.mxu0 0
    %5265 = vmatpush.bf16.msra.mxu0 %v4016
    %5266 = vmatmul.bf16.gmra.mxu0 %v4814
    %v5267 = vpop.f32.mrf.mxu0
    %v5268 = vadd.f32 %v5255, %v5267
    %v5269 = vpop.f32.mrf.mxu0
    %5270 = vdwg.mxu0
    %5271 = vmatpush.bf16.msra.mxu0 %v3361
    %5272 = vmatpush.bf16.msra.mxu0 %v3345
    %5273 = vmatpush.bf16.msra.mxu0 %v3329
    %5274 = vmatpush.bf16.msra.mxu0 %v3313
    %5275 = vmatpush.bf16.msra.mxu0 %v3297
    %5276 = vmatpush.bf16.msra.mxu0 %v3281
    %5277 = vmatpush.bf16.msra.mxu0 %v3265
    %5278 = vmatpush.bf16.msra.mxu0 %v3249
    %5279 = vmatmul.bf16.gmra.mxu0 %v879
    %v5280 = vpop.f32.mrf.mxu0
    %v5281 = vadd.f32 0.0, %v5280
    %v5282 = vpop.f32.mrf.mxu0
    %5283 = vdwg.mxu0
    %5284 = vmatpush.bf16.msra.mxu0 %v3489
    %5285 = vmatpush.bf16.msra.mxu0 %v3473
    %5286 = vmatpush.bf16.msra.mxu0 %v3457
    %5287 = vmatpush.bf16.msra.mxu0 %v3441
    %5288 = vmatpush.bf16.msra.mxu0 %v3425
    %5289 = vmatpush.bf16.msra.mxu0 %v3409
    %5290 = vmatpush.bf16.msra.mxu0 %v3393
    %5291 = vmatpush.bf16.msra.mxu0 %v3377
    %5292 = vmatmul.bf16.gmra.mxu0 %v880
    %v5293 = vpop.f32.mrf.mxu0
    %v5294 = vadd.f32 %v5281, %v5293
    %v5295 = vpop.f32.mrf.mxu0
    %5296 = vdwg.mxu0
    %5297 = vmatpush.bf16.msra.mxu0 %v3617
    %5298 = vmatpush.bf16.msra.mxu0 %v3601
    %5299 = vmatpush.bf16.msra.mxu0 %v3585
    %5300 = vmatpush.bf16.msra.mxu0 %v3569
    %5301 = vmatpush.bf16.msra.mxu0 %v3553
    %5302 = vmatpush.bf16.msra.mxu0 %v3537
    %5303 = vmatpush.bf16.msra.mxu0 %v3521
    %5304 = vmatpush.bf16.msra.mxu0 %v3505
    %5305 = vmatmul.bf16.gmra.mxu0 %v881
    %v5306 = vpop.f32.mrf.mxu0
    %v5307 = vadd.f32 %v5294, %v5306
    %v5308 = vpop.f32.mrf.mxu0
    %5309 = vdwg.mxu0
    %5310 = vmatpush.bf16.msra.mxu0 %v3745
    %5311 = vmatpush.bf16.msra.mxu0 %v3729
    %5312 = vmatpush.bf16.msra.mxu0 %v3713
    %5313 = vmatpush.bf16.msra.mxu0 %v3697
    %5314 = vmatpush.bf16.msra.mxu0 %v3681
    %5315 = vmatpush.bf16.msra.mxu0 %v3665
    %5316 = vmatpush.bf16.msra.mxu0 %v3649
    %5317 = vmatpush.bf16.msra.mxu0 %v3633
    %5318 = vmatmul.bf16.gmra.mxu0 %v882
    %v5319 = vpop.f32.mrf.mxu0
    %v5320 = vadd.f32 %v5307, %v5319
    %v5321 = vpop.f32.mrf.mxu0
    %5322 = vdwg.mxu0
    %5323 = vmatpush.bf16.msra.mxu0 %v3873
    %5324 = vmatpush.bf16.msra.mxu0 %v3857
    %5325 = vmatpush.bf16.msra.mxu0 %v3841
    %5326 = vmatpush.bf16.msra.mxu0 %v3825
    %5327 = vmatpush.bf16.msra.mxu0 %v3809
    %5328 = vmatpush.bf16.msra.mxu0 %v3793
    %5329 = vmatpush.bf16.msra.mxu0 %v3777
    %5330 = vmatpush.bf16.msra.mxu0 %v3761
    %5331 = vmatmul.bf16.gmra.mxu0 %v883
    %v5332 = vpop.f32.mrf.mxu0
    %v5333 = vadd.f32 %v5320, %v5332
    %v5334 = vpop.f32.mrf.mxu0
    %5335 = vdwg.mxu0
    %5336 = vmatpush.bf16.msra.mxu0 %v4001
    %5337 = vmatpush.bf16.msra.mxu0 %v3985
    %5338 = vmatpush.bf16.msra.mxu0 %v3969
    %5339 = vmatpush.bf16.msra.mxu0 %v3953
    %5340 = vmatpush.bf16.msra.mxu0 %v3937
    %5341 = vmatpush.bf16.msra.mxu0 %v3921
    %5342 = vmatpush.bf16.msra.mxu0 %v3905
    %5343 = vmatpush.bf16.msra.mxu0 %v3889
    %5344 = vmatmul.bf16.gmra.mxu0 %v884
    %v5345 = vpop.f32.mrf.mxu0
    %v5346 = vadd.f32 %v5333, %v5345
    %v5347 = vpop.f32.mrf.mxu0
    %5348 = vdwg.mxu0
    %5349 = vmatpush.bf16.msra.mxu0 0
    %5350 = vmatpush.bf16.msra.mxu0 0
    %5351 = vmatpush.bf16.msra.mxu0 0
    %5352 = vmatpush.bf16.msra.mxu0 0
    %5353 = vmatpush.bf16.msra.mxu0 0
    %5354 = vmatpush.bf16.msra.mxu0 0
    %5355 = vmatpush.bf16.msra.mxu0 0
    %5356 = vmatpush.bf16.msra.mxu0 %v4017
    %5357 = vmatmul.bf16.gmra.mxu0 %v4814
    %v5358 = vpop.f32.mrf.mxu0
    %v5359 = vadd.f32 %v5346, %v5358
    %v5360 = vpop.f32.mrf.mxu0
    %5361 = vdwg.mxu0
    %5362 = vmatpush.bf16.msra.mxu0 %v3362
    %5363 = vmatpush.bf16.msra.mxu0 %v3346
    %5364 = vmatpush.bf16.msra.mxu0 %v3330
    %5365 = vmatpush.bf16.msra.mxu0 %v3314
    %5366 = vmatpush.bf16.msra.mxu0 %v3298
    %5367 = vmatpush.bf16.msra.mxu0 %v3282
    %5368 = vmatpush.bf16.msra.mxu0 %v3266
    %5369 = vmatpush.bf16.msra.mxu0 %v3250
    %5370 = vmatmul.bf16.gmra.mxu0 %v879
    %v5371 = vpop.f32.mrf.mxu0
    %v5372 = vadd.f32 0.0, %v5371
    %v5373 = vpop.f32.mrf.mxu0
    %5374 = vdwg.mxu0
    %5375 = vmatpush.bf16.msra.mxu0 %v3490
    %5376 = vmatpush.bf16.msra.mxu0 %v3474
    %5377 = vmatpush.bf16.msra.mxu0 %v3458
    %5378 = vmatpush.bf16.msra.mxu0 %v3442
    %5379 = vmatpush.bf16.msra.mxu0 %v3426
    %5380 = vmatpush.bf16.msra.mxu0 %v3410
    %5381 = vmatpush.bf16.msra.mxu0 %v3394
    %5382 = vmatpush.bf16.msra.mxu0 %v3378
    %5383 = vmatmul.bf16.gmra.mxu0 %v880
    %v5384 = vpop.f32.mrf.mxu0
    %v5385 = vadd.f32 %v5372, %v5384
    %v5386 = vpop.f32.mrf.mxu0
    %5387 = vdwg.mxu0
    %5388 = vmatpush.bf16.msra.mxu0 %v3618
    %5389 = vmatpush.bf16.msra.mxu0 %v3602
    %5390 = vmatpush.bf16.msra.mxu0 %v3586
    %5391 = vmatpush.bf16.msra.mxu0 %v3570
    %5392 = vmatpush.bf16.msra.mxu0 %v3554
    %5393 = vmatpush.bf16.msra.mxu0 %v3538
    %5394 = vmatpush.bf16.msra.mxu0 %v3522
    %5395 = vmatpush.bf16.msra.mxu0 %v3506
    %5396 = vmatmul.bf16.gmra.mxu0 %v881
    %v5397 = vpop.f32.mrf.mxu0
    %v5398 = vadd.f32 %v5385, %v5397
    %v5399 = vpop.f32.mrf.mxu0
    %5400 = vdwg.mxu0
    %5401 = vmatpush.bf16.msra.mxu0 %v3746
    %5402 = vmatpush.bf16.msra.mxu0 %v3730
    %5403 = vmatpush.bf16.msra.mxu0 %v3714
    %5404 = vmatpush.bf16.msra.mxu0 %v3698
    %5405 = vmatpush.bf16.msra.mxu0 %v3682
    %5406 = vmatpush.bf16.msra.mxu0 %v3666
    %5407 = vmatpush.bf16.msra.mxu0 %v3650
    %5408 = vmatpush.bf16.msra.mxu0 %v3634
    %5409 = vmatmul.bf16.gmra.mxu0 %v882
    %v5410 = vpop.f32.mrf.mxu0
    %v5411 = vadd.f32 %v5398, %v5410
    %v5412 = vpop.f32.mrf.mxu0
    %5413 = vdwg.mxu0
    %5414 = vmatpush.bf16.msra.mxu0 %v3874
    %5415 = vmatpush.bf16.msra.mxu0 %v3858
    %5416 = vmatpush.bf16.msra.mxu0 %v3842
    %5417 = vmatpush.bf16.msra.mxu0 %v3826
    %5418 = vmatpush.bf16.msra.mxu0 %v3810
    %5419 = vmatpush.bf16.msra.mxu0 %v3794
    %5420 = vmatpush.bf16.msra.mxu0 %v3778
    %5421 = vmatpush.bf16.msra.mxu0 %v3762
    %5422 = vmatmul.bf16.gmra.mxu0 %v883
    %v5423 = vpop.f32.mrf.mxu0
    %v5424 = vadd.f32 %v5411, %v5423
    %v5425 = vpop.f32.mrf.mxu0
    %5426 = vdwg.mxu0
    %5427 = vmatpush.bf16.msra.mxu0 %v4002
    %5428 = vmatpush.bf16.msra.mxu0 %v3986
    %5429 = vmatpush.bf16.msra.mxu0 %v3970
    %5430 = vmatpush.bf16.msra.mxu0 %v3954
    %5431 = vmatpush.bf16.msra.mxu0 %v3938
    %5432 = vmatpush.bf16.msra.mxu0 %v3922
    %5433 = vmatpush.bf16.msra.mxu0 %v3906
    %5434 = vmatpush.bf16.msra.mxu0 %v3890
    %5435 = vmatmul.bf16.gmra.mxu0 %v884
    %v5436 = vpop.f32.mrf.mxu0
    %v5437 = vadd.f32 %v5424, %v5436
    %v5438 = vpop.f32.mrf.mxu0
    %5439 = vdwg.mxu0
    %5440 = vmatpush.bf16.msra.mxu0 0
    %5441 = vmatpush.bf16.msra.mxu0 0
    %5442 = vmatpush.bf16.msra.mxu0 0
    %5443 = vmatpush.bf16.msra.mxu0 0
    %5444 = vmatpush.bf16.msra.mxu0 0
    %5445 = vmatpush.bf16.msra.mxu0 0
    %5446 = vmatpush.bf16.msra.mxu0 0
    %5447 = vmatpush.bf16.msra.mxu0 %v4018
    %5448 = vmatmul.bf16.gmra.mxu0 %v4814
    %v5449 = vpop.f32.mrf.mxu0
    %v5450 = vadd.f32 %v5437, %v5449
    %v5451 = vpop.f32.mrf.mxu0
    %5452 = vdwg.mxu0
    %5453 = vmatpush.bf16.msra.mxu0 %v3363
    %5454 = vmatpush.bf16.msra.mxu0 %v3347
    %5455 = vmatpush.bf16.msra.mxu0 %v3331
    %5456 = vmatpush.bf16.msra.mxu0 %v3315
    %5457 = vmatpush.bf16.msra.mxu0 %v3299
    %5458 = vmatpush.bf16.msra.mxu0 %v3283
    %5459 = vmatpush.bf16.msra.mxu0 %v3267
    %5460 = vmatpush.bf16.msra.mxu0 %v3251
    %5461 = vmatmul.bf16.gmra.mxu0 %v879
    %v5462 = vpop.f32.mrf.mxu0
    %v5463 = vadd.f32 0.0, %v5462
    %v5464 = vpop.f32.mrf.mxu0
    %5465 = vdwg.mxu0
    %5466 = vmatpush.bf16.msra.mxu0 %v3491
    %5467 = vmatpush.bf16.msra.mxu0 %v3475
    %5468 = vmatpush.bf16.msra.mxu0 %v3459
    %5469 = vmatpush.bf16.msra.mxu0 %v3443
    %5470 = vmatpush.bf16.msra.mxu0 %v3427
    %5471 = vmatpush.bf16.msra.mxu0 %v3411
    %5472 = vmatpush.bf16.msra.mxu0 %v3395
    %5473 = vmatpush.bf16.msra.mxu0 %v3379
    %5474 = vmatmul.bf16.gmra.mxu0 %v880
    %v5475 = vpop.f32.mrf.mxu0
    %v5476 = vadd.f32 %v5463, %v5475
    %v5477 = vpop.f32.mrf.mxu0
    %5478 = vdwg.mxu0
    %5479 = vmatpush.bf16.msra.mxu0 %v3619
    %5480 = vmatpush.bf16.msra.mxu0 %v3603
    %5481 = vmatpush.bf16.msra.mxu0 %v3587
    %5482 = vmatpush.bf16.msra.mxu0 %v3571
    %5483 = vmatpush.bf16.msra.mxu0 %v3555
    %5484 = vmatpush.bf16.msra.mxu0 %v3539
    %5485 = vmatpush.bf16.msra.mxu0 %v3523
    %5486 = vmatpush.bf16.msra.mxu0 %v3507
    %5487 = vmatmul.bf16.gmra.mxu0 %v881
    %v5488 = vpop.f32.mrf.mxu0
    %v5489 = vadd.f32 %v5476, %v5488
    %v5490 = vpop.f32.mrf.mxu0
    %5491 = vdwg.mxu0
    %5492 = vmatpush.bf16.msra.mxu0 %v3747
    %5493 = vmatpush.bf16.msra.mxu0 %v3731
    %5494 = vmatpush.bf16.msra.mxu0 %v3715
    %5495 = vmatpush.bf16.msra.mxu0 %v3699
    %5496 = vmatpush.bf16.msra.mxu0 %v3683
    %5497 = vmatpush.bf16.msra.mxu0 %v3667
    %5498 = vmatpush.bf16.msra.mxu0 %v3651
    %5499 = vmatpush.bf16.msra.mxu0 %v3635
    %5500 = vmatmul.bf16.gmra.mxu0 %v882
    %v5501 = vpop.f32.mrf.mxu0
    %v5502 = vadd.f32 %v5489, %v5501
    %v5503 = vpop.f32.mrf.mxu0
    %5504 = vdwg.mxu0
    %5505 = vmatpush.bf16.msra.mxu0 %v3875
    %5506 = vmatpush.bf16.msra.mxu0 %v3859
    %5507 = vmatpush.bf16.msra.mxu0 %v3843
    %5508 = vmatpush.bf16.msra.mxu0 %v3827
    %5509 = vmatpush.bf16.msra.mxu0 %v3811
    %5510 = vmatpush.bf16.msra.mxu0 %v3795
    %5511 = vmatpush.bf16.msra.mxu0 %v3779
    %5512 = vmatpush.bf16.msra.mxu0 %v3763
    %5513 = vmatmul.bf16.gmra.mxu0 %v883
    %v5514 = vpop.f32.mrf.mxu0
    %v5515 = vadd.f32 %v5502, %v5514
    %v5516 = vpop.f32.mrf.mxu0
    %5517 = vdwg.mxu0
    %5518 = vmatpush.bf16.msra.mxu0 %v4003
    %5519 = vmatpush.bf16.msra.mxu0 %v3987
    %5520 = vmatpush.bf16.msra.mxu0 %v3971
    %5521 = vmatpush.bf16.msra.mxu0 %v3955
    %5522 = vmatpush.bf16.msra.mxu0 %v3939
    %5523 = vmatpush.bf16.msra.mxu0 %v3923
    %5524 = vmatpush.bf16.msra.mxu0 %v3907
    %5525 = vmatpush.bf16.msra.mxu0 %v3891
    %5526 = vmatmul.bf16.gmra.mxu0 %v884
    %v5527 = vpop.f32.mrf.mxu0
    %v5528 = vadd.f32 %v5515, %v5527
    %v5529 = vpop.f32.mrf.mxu0
    %5530 = vdwg.mxu0
    %5531 = vmatpush.bf16.msra.mxu0 0
    %5532 = vmatpush.bf16.msra.mxu0 0
    %5533 = vmatpush.bf16.msra.mxu0 0
    %5534 = vmatpush.bf16.msra.mxu0 0
    %5535 = vmatpush.bf16.msra.mxu0 0
    %5536 = vmatpush.bf16.msra.mxu0 0
    %5537 = vmatpush.bf16.msra.mxu0 0
    %5538 = vmatpush.bf16.msra.mxu0 %v4019
    %5539 = vmatmul.bf16.gmra.mxu0 %v4814
    %v5540 = vpop.f32.mrf.mxu0
    %v5541 = vadd.f32 %v5528, %v5540
    %v5542 = vpop.f32.mrf.mxu0
    %5543 = vdwg.mxu0
    %5544 = vmatpush.bf16.msra.mxu0 %v3364
    %5545 = vmatpush.bf16.msra.mxu0 %v3348
    %5546 = vmatpush.bf16.msra.mxu0 %v3332
    %5547 = vmatpush.bf16.msra.mxu0 %v3316
    %5548 = vmatpush.bf16.msra.mxu0 %v3300
    %5549 = vmatpush.bf16.msra.mxu0 %v3284
    %5550 = vmatpush.bf16.msra.mxu0 %v3268
    %5551 = vmatpush.bf16.msra.mxu0 %v3252
    %5552 = vmatmul.bf16.gmra.mxu0 %v879
    %v5553 = vpop.f32.mrf.mxu0
    %v5554 = vadd.f32 0.0, %v5553
    %v5555 = vpop.f32.mrf.mxu0
    %5556 = vdwg.mxu0
    %5557 = vmatpush.bf16.msra.mxu0 %v3492
    %5558 = vmatpush.bf16.msra.mxu0 %v3476
    %5559 = vmatpush.bf16.msra.mxu0 %v3460
    %5560 = vmatpush.bf16.msra.mxu0 %v3444
    %5561 = vmatpush.bf16.msra.mxu0 %v3428
    %5562 = vmatpush.bf16.msra.mxu0 %v3412
    %5563 = vmatpush.bf16.msra.mxu0 %v3396
    %5564 = vmatpush.bf16.msra.mxu0 %v3380
    %5565 = vmatmul.bf16.gmra.mxu0 %v880
    %v5566 = vpop.f32.mrf.mxu0
    %v5567 = vadd.f32 %v5554, %v5566
    %v5568 = vpop.f32.mrf.mxu0
    %5569 = vdwg.mxu0
    %5570 = vmatpush.bf16.msra.mxu0 %v3620
    %5571 = vmatpush.bf16.msra.mxu0 %v3604
    %5572 = vmatpush.bf16.msra.mxu0 %v3588
    %5573 = vmatpush.bf16.msra.mxu0 %v3572
    %5574 = vmatpush.bf16.msra.mxu0 %v3556
    %5575 = vmatpush.bf16.msra.mxu0 %v3540
    %5576 = vmatpush.bf16.msra.mxu0 %v3524
    %5577 = vmatpush.bf16.msra.mxu0 %v3508
    %5578 = vmatmul.bf16.gmra.mxu0 %v881
    %v5579 = vpop.f32.mrf.mxu0
    %v5580 = vadd.f32 %v5567, %v5579
    %v5581 = vpop.f32.mrf.mxu0
    %5582 = vdwg.mxu0
    %5583 = vmatpush.bf16.msra.mxu0 %v3748
    %5584 = vmatpush.bf16.msra.mxu0 %v3732
    %5585 = vmatpush.bf16.msra.mxu0 %v3716
    %5586 = vmatpush.bf16.msra.mxu0 %v3700
    %5587 = vmatpush.bf16.msra.mxu0 %v3684
    %5588 = vmatpush.bf16.msra.mxu0 %v3668
    %5589 = vmatpush.bf16.msra.mxu0 %v3652
    %5590 = vmatpush.bf16.msra.mxu0 %v3636
    %5591 = vmatmul.bf16.gmra.mxu0 %v882
    %v5592 = vpop.f32.mrf.mxu0
    %v5593 = vadd.f32 %v5580, %v5592
    %v5594 = vpop.f32.mrf.mxu0
    %5595 = vdwg.mxu0
    %5596 = vmatpush.bf16.msra.mxu0 %v3876
    %5597 = vmatpush.bf16.msra.mxu0 %v3860
    %5598 = vmatpush.bf16.msra.mxu0 %v3844
    %5599 = vmatpush.bf16.msra.mxu0 %v3828
    %5600 = vmatpush.bf16.msra.mxu0 %v3812
    %5601 = vmatpush.bf16.msra.mxu0 %v3796
    %5602 = vmatpush.bf16.msra.mxu0 %v3780
    %5603 = vmatpush.bf16.msra.mxu0 %v3764
    %5604 = vmatmul.bf16.gmra.mxu0 %v883
    %v5605 = vpop.f32.mrf.mxu0
    %v5606 = vadd.f32 %v5593, %v5605
    %v5607 = vpop.f32.mrf.mxu0
    %5608 = vdwg.mxu0
    %5609 = vmatpush.bf16.msra.mxu0 %v4004
    %5610 = vmatpush.bf16.msra.mxu0 %v3988
    %5611 = vmatpush.bf16.msra.mxu0 %v3972
    %5612 = vmatpush.bf16.msra.mxu0 %v3956
    %5613 = vmatpush.bf16.msra.mxu0 %v3940
    %5614 = vmatpush.bf16.msra.mxu0 %v3924
    %5615 = vmatpush.bf16.msra.mxu0 %v3908
    %5616 = vmatpush.bf16.msra.mxu0 %v3892
    %5617 = vmatmul.bf16.gmra.mxu0 %v884
    %v5618 = vpop.f32.mrf.mxu0
    %v5619 = vadd.f32 %v5606, %v5618
    %v5620 = vpop.f32.mrf.mxu0
    %5621 = vdwg.mxu0
    %5622 = vmatpush.bf16.msra.mxu0 0
    %5623 = vmatpush.bf16.msra.mxu0 0
    %5624 = vmatpush.bf16.msra.mxu0 0
    %5625 = vmatpush.bf16.msra.mxu0 0
    %5626 = vmatpush.bf16.msra.mxu0 0
    %5627 = vmatpush.bf16.msra.mxu0 0
    %5628 = vmatpush.bf16.msra.mxu0 0
    %5629 = vmatpush.bf16.msra.mxu0 %v4020
    %5630 = vmatmul.bf16.gmra.mxu0 %v4814
    %v5631 = vpop.f32.mrf.mxu0
    %v5632 = vadd.f32 %v5619, %v5631
    %v5633 = vpop.f32.mrf.mxu0
    %5634 = vdwg.mxu0
    %5635 = vmatpush.bf16.msra.mxu0 %v3365
    %5636 = vmatpush.bf16.msra.mxu0 %v3349
    %5637 = vmatpush.bf16.msra.mxu0 %v3333
    %5638 = vmatpush.bf16.msra.mxu0 %v3317
    %5639 = vmatpush.bf16.msra.mxu0 %v3301
    %5640 = vmatpush.bf16.msra.mxu0 %v3285
    %5641 = vmatpush.bf16.msra.mxu0 %v3269
    %5642 = vmatpush.bf16.msra.mxu0 %v3253
    %5643 = vmatmul.bf16.gmra.mxu0 %v879
    %v5644 = vpop.f32.mrf.mxu0
    %v5645 = vadd.f32 0.0, %v5644
    %v5646 = vpop.f32.mrf.mxu0
    %5647 = vdwg.mxu0
    %5648 = vmatpush.bf16.msra.mxu0 %v3493
    %5649 = vmatpush.bf16.msra.mxu0 %v3477
    %5650 = vmatpush.bf16.msra.mxu0 %v3461
    %5651 = vmatpush.bf16.msra.mxu0 %v3445
    %5652 = vmatpush.bf16.msra.mxu0 %v3429
    %5653 = vmatpush.bf16.msra.mxu0 %v3413
    %5654 = vmatpush.bf16.msra.mxu0 %v3397
    %5655 = vmatpush.bf16.msra.mxu0 %v3381
    %5656 = vmatmul.bf16.gmra.mxu0 %v880
    %v5657 = vpop.f32.mrf.mxu0
    %v5658 = vadd.f32 %v5645, %v5657
    %v5659 = vpop.f32.mrf.mxu0
    %5660 = vdwg.mxu0
    %5661 = vmatpush.bf16.msra.mxu0 %v3621
    %5662 = vmatpush.bf16.msra.mxu0 %v3605
    %5663 = vmatpush.bf16.msra.mxu0 %v3589
    %5664 = vmatpush.bf16.msra.mxu0 %v3573
    %5665 = vmatpush.bf16.msra.mxu0 %v3557
    %5666 = vmatpush.bf16.msra.mxu0 %v3541
    %5667 = vmatpush.bf16.msra.mxu0 %v3525
    %5668 = vmatpush.bf16.msra.mxu0 %v3509
    %5669 = vmatmul.bf16.gmra.mxu0 %v881
    %v5670 = vpop.f32.mrf.mxu0
    %v5671 = vadd.f32 %v5658, %v5670
    %v5672 = vpop.f32.mrf.mxu0
    %5673 = vdwg.mxu0
    %5674 = vmatpush.bf16.msra.mxu0 %v3749
    %5675 = vmatpush.bf16.msra.mxu0 %v3733
    %5676 = vmatpush.bf16.msra.mxu0 %v3717
    %5677 = vmatpush.bf16.msra.mxu0 %v3701
    %5678 = vmatpush.bf16.msra.mxu0 %v3685
    %5679 = vmatpush.bf16.msra.mxu0 %v3669
    %5680 = vmatpush.bf16.msra.mxu0 %v3653
    %5681 = vmatpush.bf16.msra.mxu0 %v3637
    %5682 = vmatmul.bf16.gmra.mxu0 %v882
    %v5683 = vpop.f32.mrf.mxu0
    %v5684 = vadd.f32 %v5671, %v5683
    %v5685 = vpop.f32.mrf.mxu0
    %5686 = vdwg.mxu0
    %5687 = vmatpush.bf16.msra.mxu0 %v3877
    %5688 = vmatpush.bf16.msra.mxu0 %v3861
    %5689 = vmatpush.bf16.msra.mxu0 %v3845
    %5690 = vmatpush.bf16.msra.mxu0 %v3829
    %5691 = vmatpush.bf16.msra.mxu0 %v3813
    %5692 = vmatpush.bf16.msra.mxu0 %v3797
    %5693 = vmatpush.bf16.msra.mxu0 %v3781
    %5694 = vmatpush.bf16.msra.mxu0 %v3765
    %5695 = vmatmul.bf16.gmra.mxu0 %v883
    %v5696 = vpop.f32.mrf.mxu0
    %v5697 = vadd.f32 %v5684, %v5696
    %v5698 = vpop.f32.mrf.mxu0
    %5699 = vdwg.mxu0
    %5700 = vmatpush.bf16.msra.mxu0 %v4005
    %5701 = vmatpush.bf16.msra.mxu0 %v3989
    %5702 = vmatpush.bf16.msra.mxu0 %v3973
    %5703 = vmatpush.bf16.msra.mxu0 %v3957
    %5704 = vmatpush.bf16.msra.mxu0 %v3941
    %5705 = vmatpush.bf16.msra.mxu0 %v3925
    %5706 = vmatpush.bf16.msra.mxu0 %v3909
    %5707 = vmatpush.bf16.msra.mxu0 %v3893
    %5708 = vmatmul.bf16.gmra.mxu0 %v884
    %v5709 = vpop.f32.mrf.mxu0
    %v5710 = vadd.f32 %v5697, %v5709
    %v5711 = vpop.f32.mrf.mxu0
    %5712 = vdwg.mxu0
    %5713 = vmatpush.bf16.msra.mxu0 0
    %5714 = vmatpush.bf16.msra.mxu0 0
    %5715 = vmatpush.bf16.msra.mxu0 0
    %5716 = vmatpush.bf16.msra.mxu0 0
    %5717 = vmatpush.bf16.msra.mxu0 0
    %5718 = vmatpush.bf16.msra.mxu0 0
    %5719 = vmatpush.bf16.msra.mxu0 0
    %5720 = vmatpush.bf16.msra.mxu0 %v4021
    %5721 = vmatmul.bf16.gmra.mxu0 %v4814
    %v5722 = vpop.f32.mrf.mxu0
    %v5723 = vadd.f32 %v5710, %v5722
    %v5724 = vpop.f32.mrf.mxu0
    %5725 = vdwg.mxu0
    %5726 = vmatpush.bf16.msra.mxu0 %v3366
    %5727 = vmatpush.bf16.msra.mxu0 %v3350
    %5728 = vmatpush.bf16.msra.mxu0 %v3334
    %5729 = vmatpush.bf16.msra.mxu0 %v3318
    %5730 = vmatpush.bf16.msra.mxu0 %v3302
    %5731 = vmatpush.bf16.msra.mxu0 %v3286
    %5732 = vmatpush.bf16.msra.mxu0 %v3270
    %5733 = vmatpush.bf16.msra.mxu0 %v3254
    %5734 = vmatmul.bf16.gmra.mxu0 %v879
    %v5735 = vpop.f32.mrf.mxu0
    %v5736 = vadd.f32 0.0, %v5735
    %v5737 = vpop.f32.mrf.mxu0
    %5738 = vdwg.mxu0
    %5739 = vmatpush.bf16.msra.mxu0 %v3494
    %5740 = vmatpush.bf16.msra.mxu0 %v3478
    %5741 = vmatpush.bf16.msra.mxu0 %v3462
    %5742 = vmatpush.bf16.msra.mxu0 %v3446
    %5743 = vmatpush.bf16.msra.mxu0 %v3430
    %5744 = vmatpush.bf16.msra.mxu0 %v3414
    %5745 = vmatpush.bf16.msra.mxu0 %v3398
    %5746 = vmatpush.bf16.msra.mxu0 %v3382
    %5747 = vmatmul.bf16.gmra.mxu0 %v880
    %v5748 = vpop.f32.mrf.mxu0
    %v5749 = vadd.f32 %v5736, %v5748
    %v5750 = vpop.f32.mrf.mxu0
    %5751 = vdwg.mxu0
    %5752 = vmatpush.bf16.msra.mxu0 %v3622
    %5753 = vmatpush.bf16.msra.mxu0 %v3606
    %5754 = vmatpush.bf16.msra.mxu0 %v3590
    %5755 = vmatpush.bf16.msra.mxu0 %v3574
    %5756 = vmatpush.bf16.msra.mxu0 %v3558
    %5757 = vmatpush.bf16.msra.mxu0 %v3542
    %5758 = vmatpush.bf16.msra.mxu0 %v3526
    %5759 = vmatpush.bf16.msra.mxu0 %v3510
    %5760 = vmatmul.bf16.gmra.mxu0 %v881
    %v5761 = vpop.f32.mrf.mxu0
    %v5762 = vadd.f32 %v5749, %v5761
    %v5763 = vpop.f32.mrf.mxu0
    %5764 = vdwg.mxu0
    %5765 = vmatpush.bf16.msra.mxu0 %v3750
    %5766 = vmatpush.bf16.msra.mxu0 %v3734
    %5767 = vmatpush.bf16.msra.mxu0 %v3718
    %5768 = vmatpush.bf16.msra.mxu0 %v3702
    %5769 = vmatpush.bf16.msra.mxu0 %v3686
    %5770 = vmatpush.bf16.msra.mxu0 %v3670
    %5771 = vmatpush.bf16.msra.mxu0 %v3654
    %5772 = vmatpush.bf16.msra.mxu0 %v3638
    %5773 = vmatmul.bf16.gmra.mxu0 %v882
    %v5774 = vpop.f32.mrf.mxu0
    %v5775 = vadd.f32 %v5762, %v5774
    %v5776 = vpop.f32.mrf.mxu0
    %5777 = vdwg.mxu0
    %5778 = vmatpush.bf16.msra.mxu0 %v3878
    %5779 = vmatpush.bf16.msra.mxu0 %v3862
    %5780 = vmatpush.bf16.msra.mxu0 %v3846
    %5781 = vmatpush.bf16.msra.mxu0 %v3830
    %5782 = vmatpush.bf16.msra.mxu0 %v3814
    %5783 = vmatpush.bf16.msra.mxu0 %v3798
    %5784 = vmatpush.bf16.msra.mxu0 %v3782
    %5785 = vmatpush.bf16.msra.mxu0 %v3766
    %5786 = vmatmul.bf16.gmra.mxu0 %v883
    %v5787 = vpop.f32.mrf.mxu0
    %v5788 = vadd.f32 %v5775, %v5787
    %v5789 = vpop.f32.mrf.mxu0
    %5790 = vdwg.mxu0
    %5791 = vmatpush.bf16.msra.mxu0 %v4006
    %5792 = vmatpush.bf16.msra.mxu0 %v3990
    %5793 = vmatpush.bf16.msra.mxu0 %v3974
    %5794 = vmatpush.bf16.msra.mxu0 %v3958
    %5795 = vmatpush.bf16.msra.mxu0 %v3942
    %5796 = vmatpush.bf16.msra.mxu0 %v3926
    %5797 = vmatpush.bf16.msra.mxu0 %v3910
    %5798 = vmatpush.bf16.msra.mxu0 %v3894
    %5799 = vmatmul.bf16.gmra.mxu0 %v884
    %v5800 = vpop.f32.mrf.mxu0
    %v5801 = vadd.f32 %v5788, %v5800
    %v5802 = vpop.f32.mrf.mxu0
    %5803 = vdwg.mxu0
    %5804 = vmatpush.bf16.msra.mxu0 0
    %5805 = vmatpush.bf16.msra.mxu0 0
    %5806 = vmatpush.bf16.msra.mxu0 0
    %5807 = vmatpush.bf16.msra.mxu0 0
    %5808 = vmatpush.bf16.msra.mxu0 0
    %5809 = vmatpush.bf16.msra.mxu0 0
    %5810 = vmatpush.bf16.msra.mxu0 0
    %5811 = vmatpush.bf16.msra.mxu0 %v4022
    %5812 = vmatmul.bf16.gmra.mxu0 %v4814
    %v5813 = vpop.f32.mrf.mxu0
    %v5814 = vadd.f32 %v5801, %v5813
    %v5815 = vpop.f32.mrf.mxu0
    %5816 = vdwg.mxu0
    %5817 = vmatpush.bf16.msra.mxu0 %v3367
    %5818 = vmatpush.bf16.msra.mxu0 %v3351
    %5819 = vmatpush.bf16.msra.mxu0 %v3335
    %5820 = vmatpush.bf16.msra.mxu0 %v3319
    %5821 = vmatpush.bf16.msra.mxu0 %v3303
    %5822 = vmatpush.bf16.msra.mxu0 %v3287
    %5823 = vmatpush.bf16.msra.mxu0 %v3271
    %5824 = vmatpush.bf16.msra.mxu0 %v3255
    %5825 = vmatmul.bf16.gmra.mxu0 %v879
    %v5826 = vpop.f32.mrf.mxu0
    %v5827 = vadd.f32 0.0, %v5826
    %v5828 = vpop.f32.mrf.mxu0
    %5829 = vdwg.mxu0
    %5830 = vmatpush.bf16.msra.mxu0 %v3495
    %5831 = vmatpush.bf16.msra.mxu0 %v3479
    %5832 = vmatpush.bf16.msra.mxu0 %v3463
    %5833 = vmatpush.bf16.msra.mxu0 %v3447
    %5834 = vmatpush.bf16.msra.mxu0 %v3431
    %5835 = vmatpush.bf16.msra.mxu0 %v3415
    %5836 = vmatpush.bf16.msra.mxu0 %v3399
    %5837 = vmatpush.bf16.msra.mxu0 %v3383
    %5838 = vmatmul.bf16.gmra.mxu0 %v880
    %v5839 = vpop.f32.mrf.mxu0
    %v5840 = vadd.f32 %v5827, %v5839
    %v5841 = vpop.f32.mrf.mxu0
    %5842 = vdwg.mxu0
    %5843 = vmatpush.bf16.msra.mxu0 %v3623
    %5844 = vmatpush.bf16.msra.mxu0 %v3607
    %5845 = vmatpush.bf16.msra.mxu0 %v3591
    %5846 = vmatpush.bf16.msra.mxu0 %v3575
    %5847 = vmatpush.bf16.msra.mxu0 %v3559
    %5848 = vmatpush.bf16.msra.mxu0 %v3543
    %5849 = vmatpush.bf16.msra.mxu0 %v3527
    %5850 = vmatpush.bf16.msra.mxu0 %v3511
    %5851 = vmatmul.bf16.gmra.mxu0 %v881
    %v5852 = vpop.f32.mrf.mxu0
    %v5853 = vadd.f32 %v5840, %v5852
    %v5854 = vpop.f32.mrf.mxu0
    %5855 = vdwg.mxu0
    %5856 = vmatpush.bf16.msra.mxu0 %v3751
    %5857 = vmatpush.bf16.msra.mxu0 %v3735
    %5858 = vmatpush.bf16.msra.mxu0 %v3719
    %5859 = vmatpush.bf16.msra.mxu0 %v3703
    %5860 = vmatpush.bf16.msra.mxu0 %v3687
    %5861 = vmatpush.bf16.msra.mxu0 %v3671
    %5862 = vmatpush.bf16.msra.mxu0 %v3655
    %5863 = vmatpush.bf16.msra.mxu0 %v3639
    %5864 = vmatmul.bf16.gmra.mxu0 %v882
    %v5865 = vpop.f32.mrf.mxu0
    %v5866 = vadd.f32 %v5853, %v5865
    %v5867 = vpop.f32.mrf.mxu0
    %5868 = vdwg.mxu0
    %5869 = vmatpush.bf16.msra.mxu0 %v3879
    %5870 = vmatpush.bf16.msra.mxu0 %v3863
    %5871 = vmatpush.bf16.msra.mxu0 %v3847
    %5872 = vmatpush.bf16.msra.mxu0 %v3831
    %5873 = vmatpush.bf16.msra.mxu0 %v3815
    %5874 = vmatpush.bf16.msra.mxu0 %v3799
    %5875 = vmatpush.bf16.msra.mxu0 %v3783
    %5876 = vmatpush.bf16.msra.mxu0 %v3767
    %5877 = vmatmul.bf16.gmra.mxu0 %v883
    %v5878 = vpop.f32.mrf.mxu0
    %v5879 = vadd.f32 %v5866, %v5878
    %v5880 = vpop.f32.mrf.mxu0
    %5881 = vdwg.mxu0
    %5882 = vmatpush.bf16.msra.mxu0 %v4007
    %5883 = vmatpush.bf16.msra.mxu0 %v3991
    %5884 = vmatpush.bf16.msra.mxu0 %v3975
    %5885 = vmatpush.bf16.msra.mxu0 %v3959
    %5886 = vmatpush.bf16.msra.mxu0 %v3943
    %5887 = vmatpush.bf16.msra.mxu0 %v3927
    %5888 = vmatpush.bf16.msra.mxu0 %v3911
    %5889 = vmatpush.bf16.msra.mxu0 %v3895
    %5890 = vmatmul.bf16.gmra.mxu0 %v884
    %v5891 = vpop.f32.mrf.mxu0
    %v5892 = vadd.f32 %v5879, %v5891
    %v5893 = vpop.f32.mrf.mxu0
    %5894 = vdwg.mxu0
    %5895 = vmatpush.bf16.msra.mxu0 0
    %5896 = vmatpush.bf16.msra.mxu0 0
    %5897 = vmatpush.bf16.msra.mxu0 0
    %5898 = vmatpush.bf16.msra.mxu0 0
    %5899 = vmatpush.bf16.msra.mxu0 0
    %5900 = vmatpush.bf16.msra.mxu0 0
    %5901 = vmatpush.bf16.msra.mxu0 0
    %5902 = vmatpush.bf16.msra.mxu0 %v4023
    %5903 = vmatmul.bf16.gmra.mxu0 %v4814
    %v5904 = vpop.f32.mrf.mxu0
    %v5905 = vadd.f32 %v5892, %v5904
    %v5906 = vpop.f32.mrf.mxu0
    %5907 = vdwg.mxu0
    %5908 = vmatpush.bf16.msra.mxu0 %v3368
    %5909 = vmatpush.bf16.msra.mxu0 %v3352
    %5910 = vmatpush.bf16.msra.mxu0 %v3336
    %5911 = vmatpush.bf16.msra.mxu0 %v3320
    %5912 = vmatpush.bf16.msra.mxu0 %v3304
    %5913 = vmatpush.bf16.msra.mxu0 %v3288
    %5914 = vmatpush.bf16.msra.mxu0 %v3272
    %5915 = vmatpush.bf16.msra.mxu0 %v3256
    %5916 = vmatmul.bf16.gmra.mxu0 %v879
    %v5917 = vpop.f32.mrf.mxu0
    %v5918 = vadd.f32 0.0, %v5917
    %v5919 = vpop.f32.mrf.mxu0
    %5920 = vdwg.mxu0
    %5921 = vmatpush.bf16.msra.mxu0 %v3496
    %5922 = vmatpush.bf16.msra.mxu0 %v3480
    %5923 = vmatpush.bf16.msra.mxu0 %v3464
    %5924 = vmatpush.bf16.msra.mxu0 %v3448
    %5925 = vmatpush.bf16.msra.mxu0 %v3432
    %5926 = vmatpush.bf16.msra.mxu0 %v3416
    %5927 = vmatpush.bf16.msra.mxu0 %v3400
    %5928 = vmatpush.bf16.msra.mxu0 %v3384
    %5929 = vmatmul.bf16.gmra.mxu0 %v880
    %v5930 = vpop.f32.mrf.mxu0
    %v5931 = vadd.f32 %v5918, %v5930
    %v5932 = vpop.f32.mrf.mxu0
    %5933 = vdwg.mxu0
    %5934 = vmatpush.bf16.msra.mxu0 %v3624
    %5935 = vmatpush.bf16.msra.mxu0 %v3608
    %5936 = vmatpush.bf16.msra.mxu0 %v3592
    %5937 = vmatpush.bf16.msra.mxu0 %v3576
    %5938 = vmatpush.bf16.msra.mxu0 %v3560
    %5939 = vmatpush.bf16.msra.mxu0 %v3544
    %5940 = vmatpush.bf16.msra.mxu0 %v3528
    %5941 = vmatpush.bf16.msra.mxu0 %v3512
    %5942 = vmatmul.bf16.gmra.mxu0 %v881
    %v5943 = vpop.f32.mrf.mxu0
    %v5944 = vadd.f32 %v5931, %v5943
    %v5945 = vpop.f32.mrf.mxu0
    %5946 = vdwg.mxu0
    %5947 = vmatpush.bf16.msra.mxu0 %v3752
    %5948 = vmatpush.bf16.msra.mxu0 %v3736
    %5949 = vmatpush.bf16.msra.mxu0 %v3720
    %5950 = vmatpush.bf16.msra.mxu0 %v3704
    %5951 = vmatpush.bf16.msra.mxu0 %v3688
    %5952 = vmatpush.bf16.msra.mxu0 %v3672
    %5953 = vmatpush.bf16.msra.mxu0 %v3656
    %5954 = vmatpush.bf16.msra.mxu0 %v3640
    %5955 = vmatmul.bf16.gmra.mxu0 %v882
    %v5956 = vpop.f32.mrf.mxu0
    %v5957 = vadd.f32 %v5944, %v5956
    %v5958 = vpop.f32.mrf.mxu0
    %5959 = vdwg.mxu0
    %5960 = vmatpush.bf16.msra.mxu0 %v3880
    %5961 = vmatpush.bf16.msra.mxu0 %v3864
    %5962 = vmatpush.bf16.msra.mxu0 %v3848
    %5963 = vmatpush.bf16.msra.mxu0 %v3832
    %5964 = vmatpush.bf16.msra.mxu0 %v3816
    %5965 = vmatpush.bf16.msra.mxu0 %v3800
    %5966 = vmatpush.bf16.msra.mxu0 %v3784
    %5967 = vmatpush.bf16.msra.mxu0 %v3768
    %5968 = vmatmul.bf16.gmra.mxu0 %v883
    %v5969 = vpop.f32.mrf.mxu0
    %v5970 = vadd.f32 %v5957, %v5969
    %v5971 = vpop.f32.mrf.mxu0
    %5972 = vdwg.mxu0
    %5973 = vmatpush.bf16.msra.mxu0 %v4008
    %5974 = vmatpush.bf16.msra.mxu0 %v3992
    %5975 = vmatpush.bf16.msra.mxu0 %v3976
    %5976 = vmatpush.bf16.msra.mxu0 %v3960
    %5977 = vmatpush.bf16.msra.mxu0 %v3944
    %5978 = vmatpush.bf16.msra.mxu0 %v3928
    %5979 = vmatpush.bf16.msra.mxu0 %v3912
    %5980 = vmatpush.bf16.msra.mxu0 %v3896
    %5981 = vmatmul.bf16.gmra.mxu0 %v884
    %v5982 = vpop.f32.mrf.mxu0
    %v5983 = vadd.f32 %v5970, %v5982
    %v5984 = vpop.f32.mrf.mxu0
    %5985 = vdwg.mxu0
    %5986 = vmatpush.bf16.msra.mxu0 0
    %5987 = vmatpush.bf16.msra.mxu0 0
    %5988 = vmatpush.bf16.msra.mxu0 0
    %5989 = vmatpush.bf16.msra.mxu0 0
    %5990 = vmatpush.bf16.msra.mxu0 0
    %5991 = vmatpush.bf16.msra.mxu0 0
    %5992 = vmatpush.bf16.msra.mxu0 0
    %5993 = vmatpush.bf16.msra.mxu0 %v4024
    %5994 = vmatmul.bf16.gmra.mxu0 %v4814
    %v5995 = vpop.f32.mrf.mxu0
    %v5996 = vadd.f32 %v5983, %v5995
    %v5997 = vpop.f32.mrf.mxu0
    %5998 = vdwg.mxu0
    %5999 = vmatpush.bf16.msra.mxu0 %v3369
    %6000 = vmatpush.bf16.msra.mxu0 %v3353
    %6001 = vmatpush.bf16.msra.mxu0 %v3337
    %6002 = vmatpush.bf16.msra.mxu0 %v3321
    %6003 = vmatpush.bf16.msra.mxu0 %v3305
    %6004 = vmatpush.bf16.msra.mxu0 %v3289
    %6005 = vmatpush.bf16.msra.mxu0 %v3273
    %6006 = vmatpush.bf16.msra.mxu0 %v3257
    %6007 = vmatmul.bf16.gmra.mxu0 %v879
    %v6008 = vpop.f32.mrf.mxu0
    %v6009 = vadd.f32 0.0, %v6008
    %v6010 = vpop.f32.mrf.mxu0
    %6011 = vdwg.mxu0
    %6012 = vmatpush.bf16.msra.mxu0 %v3497
    %6013 = vmatpush.bf16.msra.mxu0 %v3481
    %6014 = vmatpush.bf16.msra.mxu0 %v3465
    %6015 = vmatpush.bf16.msra.mxu0 %v3449
    %6016 = vmatpush.bf16.msra.mxu0 %v3433
    %6017 = vmatpush.bf16.msra.mxu0 %v3417
    %6018 = vmatpush.bf16.msra.mxu0 %v3401
    %6019 = vmatpush.bf16.msra.mxu0 %v3385
    %6020 = vmatmul.bf16.gmra.mxu0 %v880
    %v6021 = vpop.f32.mrf.mxu0
    %v6022 = vadd.f32 %v6009, %v6021
    %v6023 = vpop.f32.mrf.mxu0
    %6024 = vdwg.mxu0
    %6025 = vmatpush.bf16.msra.mxu0 %v3625
    %6026 = vmatpush.bf16.msra.mxu0 %v3609
    %6027 = vmatpush.bf16.msra.mxu0 %v3593
    %6028 = vmatpush.bf16.msra.mxu0 %v3577
    %6029 = vmatpush.bf16.msra.mxu0 %v3561
    %6030 = vmatpush.bf16.msra.mxu0 %v3545
    %6031 = vmatpush.bf16.msra.mxu0 %v3529
    %6032 = vmatpush.bf16.msra.mxu0 %v3513
    %6033 = vmatmul.bf16.gmra.mxu0 %v881
    %v6034 = vpop.f32.mrf.mxu0
    %v6035 = vadd.f32 %v6022, %v6034
    %v6036 = vpop.f32.mrf.mxu0
    %6037 = vdwg.mxu0
    %6038 = vmatpush.bf16.msra.mxu0 %v3753
    %6039 = vmatpush.bf16.msra.mxu0 %v3737
    %6040 = vmatpush.bf16.msra.mxu0 %v3721
    %6041 = vmatpush.bf16.msra.mxu0 %v3705
    %6042 = vmatpush.bf16.msra.mxu0 %v3689
    %6043 = vmatpush.bf16.msra.mxu0 %v3673
    %6044 = vmatpush.bf16.msra.mxu0 %v3657
    %6045 = vmatpush.bf16.msra.mxu0 %v3641
    %6046 = vmatmul.bf16.gmra.mxu0 %v882
    %v6047 = vpop.f32.mrf.mxu0
    %v6048 = vadd.f32 %v6035, %v6047
    %v6049 = vpop.f32.mrf.mxu0
    %6050 = vdwg.mxu0
    %6051 = vmatpush.bf16.msra.mxu0 %v3881
    %6052 = vmatpush.bf16.msra.mxu0 %v3865
    %6053 = vmatpush.bf16.msra.mxu0 %v3849
    %6054 = vmatpush.bf16.msra.mxu0 %v3833
    %6055 = vmatpush.bf16.msra.mxu0 %v3817
    %6056 = vmatpush.bf16.msra.mxu0 %v3801
    %6057 = vmatpush.bf16.msra.mxu0 %v3785
    %6058 = vmatpush.bf16.msra.mxu0 %v3769
    %6059 = vmatmul.bf16.gmra.mxu0 %v883
    %v6060 = vpop.f32.mrf.mxu0
    %v6061 = vadd.f32 %v6048, %v6060
    %v6062 = vpop.f32.mrf.mxu0
    %6063 = vdwg.mxu0
    %6064 = vmatpush.bf16.msra.mxu0 %v4009
    %6065 = vmatpush.bf16.msra.mxu0 %v3993
    %6066 = vmatpush.bf16.msra.mxu0 %v3977
    %6067 = vmatpush.bf16.msra.mxu0 %v3961
    %6068 = vmatpush.bf16.msra.mxu0 %v3945
    %6069 = vmatpush.bf16.msra.mxu0 %v3929
    %6070 = vmatpush.bf16.msra.mxu0 %v3913
    %6071 = vmatpush.bf16.msra.mxu0 %v3897
    %6072 = vmatmul.bf16.gmra.mxu0 %v884
    %v6073 = vpop.f32.mrf.mxu0
    %v6074 = vadd.f32 %v6061, %v6073
    %v6075 = vpop.f32.mrf.mxu0
    %6076 = vdwg.mxu0
    %6077 = vmatpush.bf16.msra.mxu0 0
    %6078 = vmatpush.bf16.msra.mxu0 0
    %6079 = vmatpush.bf16.msra.mxu0 0
    %6080 = vmatpush.bf16.msra.mxu0 0
    %6081 = vmatpush.bf16.msra.mxu0 0
    %6082 = vmatpush.bf16.msra.mxu0 0
    %6083 = vmatpush.bf16.msra.mxu0 0
    %6084 = vmatpush.bf16.msra.mxu0 %v4025
    %6085 = vmatmul.bf16.gmra.mxu0 %v4814
    %v6086 = vpop.f32.mrf.mxu0
    %v6087 = vadd.f32 %v6074, %v6086
    %v6088 = vpop.f32.mrf.mxu0
    %6089 = vdwg.mxu0
    %6090 = vmatpush.bf16.msra.mxu0 %v3370
    %6091 = vmatpush.bf16.msra.mxu0 %v3354
    %6092 = vmatpush.bf16.msra.mxu0 %v3338
    %6093 = vmatpush.bf16.msra.mxu0 %v3322
    %6094 = vmatpush.bf16.msra.mxu0 %v3306
    %6095 = vmatpush.bf16.msra.mxu0 %v3290
    %6096 = vmatpush.bf16.msra.mxu0 %v3274
    %6097 = vmatpush.bf16.msra.mxu0 %v3258
    %6098 = vmatmul.bf16.gmra.mxu0 %v879
    %v6099 = vpop.f32.mrf.mxu0
    %v6100 = vadd.f32 0.0, %v6099
    %v6101 = vpop.f32.mrf.mxu0
    %6102 = vdwg.mxu0
    %6103 = vmatpush.bf16.msra.mxu0 %v3498
    %6104 = vmatpush.bf16.msra.mxu0 %v3482
    %6105 = vmatpush.bf16.msra.mxu0 %v3466
    %6106 = vmatpush.bf16.msra.mxu0 %v3450
    %6107 = vmatpush.bf16.msra.mxu0 %v3434
    %6108 = vmatpush.bf16.msra.mxu0 %v3418
    %6109 = vmatpush.bf16.msra.mxu0 %v3402
    %6110 = vmatpush.bf16.msra.mxu0 %v3386
    %6111 = vmatmul.bf16.gmra.mxu0 %v880
    %v6112 = vpop.f32.mrf.mxu0
    %v6113 = vadd.f32 %v6100, %v6112
    %v6114 = vpop.f32.mrf.mxu0
    %6115 = vdwg.mxu0
    %6116 = vmatpush.bf16.msra.mxu0 %v3626
    %6117 = vmatpush.bf16.msra.mxu0 %v3610
    %6118 = vmatpush.bf16.msra.mxu0 %v3594
    %6119 = vmatpush.bf16.msra.mxu0 %v3578
    %6120 = vmatpush.bf16.msra.mxu0 %v3562
    %6121 = vmatpush.bf16.msra.mxu0 %v3546
    %6122 = vmatpush.bf16.msra.mxu0 %v3530
    %6123 = vmatpush.bf16.msra.mxu0 %v3514
    %6124 = vmatmul.bf16.gmra.mxu0 %v881
    %v6125 = vpop.f32.mrf.mxu0
    %v6126 = vadd.f32 %v6113, %v6125
    %v6127 = vpop.f32.mrf.mxu0
    %6128 = vdwg.mxu0
    %6129 = vmatpush.bf16.msra.mxu0 %v3754
    %6130 = vmatpush.bf16.msra.mxu0 %v3738
    %6131 = vmatpush.bf16.msra.mxu0 %v3722
    %6132 = vmatpush.bf16.msra.mxu0 %v3706
    %6133 = vmatpush.bf16.msra.mxu0 %v3690
    %6134 = vmatpush.bf16.msra.mxu0 %v3674
    %6135 = vmatpush.bf16.msra.mxu0 %v3658
    %6136 = vmatpush.bf16.msra.mxu0 %v3642
    %6137 = vmatmul.bf16.gmra.mxu0 %v882
    %v6138 = vpop.f32.mrf.mxu0
    %v6139 = vadd.f32 %v6126, %v6138
    %v6140 = vpop.f32.mrf.mxu0
    %6141 = vdwg.mxu0
    %6142 = vmatpush.bf16.msra.mxu0 %v3882
    %6143 = vmatpush.bf16.msra.mxu0 %v3866
    %6144 = vmatpush.bf16.msra.mxu0 %v3850
    %6145 = vmatpush.bf16.msra.mxu0 %v3834
    %6146 = vmatpush.bf16.msra.mxu0 %v3818
    %6147 = vmatpush.bf16.msra.mxu0 %v3802
    %6148 = vmatpush.bf16.msra.mxu0 %v3786
    %6149 = vmatpush.bf16.msra.mxu0 %v3770
    %6150 = vmatmul.bf16.gmra.mxu0 %v883
    %v6151 = vpop.f32.mrf.mxu0
    %v6152 = vadd.f32 %v6139, %v6151
    %v6153 = vpop.f32.mrf.mxu0
    %6154 = vdwg.mxu0
    %6155 = vmatpush.bf16.msra.mxu0 %v4010
    %6156 = vmatpush.bf16.msra.mxu0 %v3994
    %6157 = vmatpush.bf16.msra.mxu0 %v3978
    %6158 = vmatpush.bf16.msra.mxu0 %v3962
    %6159 = vmatpush.bf16.msra.mxu0 %v3946
    %6160 = vmatpush.bf16.msra.mxu0 %v3930
    %6161 = vmatpush.bf16.msra.mxu0 %v3914
    %6162 = vmatpush.bf16.msra.mxu0 %v3898
    %6163 = vmatmul.bf16.gmra.mxu0 %v884
    %v6164 = vpop.f32.mrf.mxu0
    %v6165 = vadd.f32 %v6152, %v6164
    %v6166 = vpop.f32.mrf.mxu0
    %6167 = vdwg.mxu0
    %6168 = vmatpush.bf16.msra.mxu0 0
    %6169 = vmatpush.bf16.msra.mxu0 0
    %6170 = vmatpush.bf16.msra.mxu0 0
    %6171 = vmatpush.bf16.msra.mxu0 0
    %6172 = vmatpush.bf16.msra.mxu0 0
    %6173 = vmatpush.bf16.msra.mxu0 0
    %6174 = vmatpush.bf16.msra.mxu0 0
    %6175 = vmatpush.bf16.msra.mxu0 %v4026
    %6176 = vmatmul.bf16.gmra.mxu0 %v4814
    %v6177 = vpop.f32.mrf.mxu0
    %v6178 = vadd.f32 %v6165, %v6177
    %v6179 = vpop.f32.mrf.mxu0
    %6180 = vdwg.mxu0
    %6181 = vmatpush.bf16.msra.mxu0 %v3371
    %6182 = vmatpush.bf16.msra.mxu0 %v3355
    %6183 = vmatpush.bf16.msra.mxu0 %v3339
    %6184 = vmatpush.bf16.msra.mxu0 %v3323
    %6185 = vmatpush.bf16.msra.mxu0 %v3307
    %6186 = vmatpush.bf16.msra.mxu0 %v3291
    %6187 = vmatpush.bf16.msra.mxu0 %v3275
    %6188 = vmatpush.bf16.msra.mxu0 %v3259
    %6189 = vmatmul.bf16.gmra.mxu0 %v879
    %v6190 = vpop.f32.mrf.mxu0
    %v6191 = vadd.f32 0.0, %v6190
    %v6192 = vpop.f32.mrf.mxu0
    %6193 = vdwg.mxu0
    %6194 = vmatpush.bf16.msra.mxu0 %v3499
    %6195 = vmatpush.bf16.msra.mxu0 %v3483
    %6196 = vmatpush.bf16.msra.mxu0 %v3467
    %6197 = vmatpush.bf16.msra.mxu0 %v3451
    %6198 = vmatpush.bf16.msra.mxu0 %v3435
    %6199 = vmatpush.bf16.msra.mxu0 %v3419
    %6200 = vmatpush.bf16.msra.mxu0 %v3403
    %6201 = vmatpush.bf16.msra.mxu0 %v3387
    %6202 = vmatmul.bf16.gmra.mxu0 %v880
    %v6203 = vpop.f32.mrf.mxu0
    %v6204 = vadd.f32 %v6191, %v6203
    %v6205 = vpop.f32.mrf.mxu0
    %6206 = vdwg.mxu0
    %6207 = vmatpush.bf16.msra.mxu0 %v3627
    %6208 = vmatpush.bf16.msra.mxu0 %v3611
    %6209 = vmatpush.bf16.msra.mxu0 %v3595
    %6210 = vmatpush.bf16.msra.mxu0 %v3579
    %6211 = vmatpush.bf16.msra.mxu0 %v3563
    %6212 = vmatpush.bf16.msra.mxu0 %v3547
    %6213 = vmatpush.bf16.msra.mxu0 %v3531
    %6214 = vmatpush.bf16.msra.mxu0 %v3515
    %6215 = vmatmul.bf16.gmra.mxu0 %v881
    %v6216 = vpop.f32.mrf.mxu0
    %v6217 = vadd.f32 %v6204, %v6216
    %v6218 = vpop.f32.mrf.mxu0
    %6219 = vdwg.mxu0
    %6220 = vmatpush.bf16.msra.mxu0 %v3755
    %6221 = vmatpush.bf16.msra.mxu0 %v3739
    %6222 = vmatpush.bf16.msra.mxu0 %v3723
    %6223 = vmatpush.bf16.msra.mxu0 %v3707
    %6224 = vmatpush.bf16.msra.mxu0 %v3691
    %6225 = vmatpush.bf16.msra.mxu0 %v3675
    %6226 = vmatpush.bf16.msra.mxu0 %v3659
    %6227 = vmatpush.bf16.msra.mxu0 %v3643
    %6228 = vmatmul.bf16.gmra.mxu0 %v882
    %v6229 = vpop.f32.mrf.mxu0
    %v6230 = vadd.f32 %v6217, %v6229
    %v6231 = vpop.f32.mrf.mxu0
    %6232 = vdwg.mxu0
    %6233 = vmatpush.bf16.msra.mxu0 %v3883
    %6234 = vmatpush.bf16.msra.mxu0 %v3867
    %6235 = vmatpush.bf16.msra.mxu0 %v3851
    %6236 = vmatpush.bf16.msra.mxu0 %v3835
    %6237 = vmatpush.bf16.msra.mxu0 %v3819
    %6238 = vmatpush.bf16.msra.mxu0 %v3803
    %6239 = vmatpush.bf16.msra.mxu0 %v3787
    %6240 = vmatpush.bf16.msra.mxu0 %v3771
    %6241 = vmatmul.bf16.gmra.mxu0 %v883
    %v6242 = vpop.f32.mrf.mxu0
    %v6243 = vadd.f32 %v6230, %v6242
    %v6244 = vpop.f32.mrf.mxu0
    %6245 = vdwg.mxu0
    %6246 = vmatpush.bf16.msra.mxu0 %v4011
    %6247 = vmatpush.bf16.msra.mxu0 %v3995
    %6248 = vmatpush.bf16.msra.mxu0 %v3979
    %6249 = vmatpush.bf16.msra.mxu0 %v3963
    %6250 = vmatpush.bf16.msra.mxu0 %v3947
    %6251 = vmatpush.bf16.msra.mxu0 %v3931
    %6252 = vmatpush.bf16.msra.mxu0 %v3915
    %6253 = vmatpush.bf16.msra.mxu0 %v3899
    %6254 = vmatmul.bf16.gmra.mxu0 %v884
    %v6255 = vpop.f32.mrf.mxu0
    %v6256 = vadd.f32 %v6243, %v6255
    %v6257 = vpop.f32.mrf.mxu0
    %6258 = vdwg.mxu0
    %6259 = vmatpush.bf16.msra.mxu0 0
    %6260 = vmatpush.bf16.msra.mxu0 0
    %6261 = vmatpush.bf16.msra.mxu0 0
    %6262 = vmatpush.bf16.msra.mxu0 0
    %6263 = vmatpush.bf16.msra.mxu0 0
    %6264 = vmatpush.bf16.msra.mxu0 0
    %6265 = vmatpush.bf16.msra.mxu0 0
    %6266 = vmatpush.bf16.msra.mxu0 %v4027
    %6267 = vmatmul.bf16.gmra.mxu0 %v4814
    %v6268 = vpop.f32.mrf.mxu0
    %v6269 = vadd.f32 %v6256, %v6268
    %v6270 = vpop.f32.mrf.mxu0
    %6271 = vdwg.mxu0
    %v6272 = vmax.f32 %v4904, %v5268
    %v6273 = vmax.f32 %v4995, %v5359
    %v6274 = vmax.f32 %v5086, %v5450
    %v6275 = vmax.f32 %v5177, %v5541
    %v6276 = vmax.f32 %v5632, %v5996
    %v6277 = vmax.f32 %v5723, %v6087
    %v6278 = vmax.f32 %v5814, %v6178
    %v6279 = vmax.f32 %v5905, %v6269
    %v6280 = vmax.f32 %v6272, %v6276
    %v6281 = vmax.f32 %v6273, %v6277
    %v6282 = vmax.f32 %v6274, %v6278
    %v6283 = vmax.f32 %v6275, %v6279
    %v6284 = vld [vmem:[#allocation4] sm:$0xf]
    %v6286 = vperm.slane %v6284, 0
    %v6287 = vperm.slane %v6284, 1
    %v6288 = vperm.slane %v6284, 2
    %v6289 = vperm.slane %v6284, 3
    %v6294 = vadd.f32 %v6280, %v6286
    %v6295 = vadd.f32 %v6281, %v6287
    %v6296 = vadd.f32 %v6282, %v6288
    %v6297 = vadd.f32 %v6283, %v6289
    %v6298 = vmax.f32 %v6294, 0.0
    %v6299 = vmax.f32 %v6295, 0.0
    %v6300 = vmax.f32 %v6296, 0.0
    %v6301 = vmax.f32 %v6297, 0.0
    %v6302 = vpack.c.bf16 %v6298, %v6298
    %v6303 = vpack.c.bf16 %v6299, %v6299
    %v6304 = vpack.c.bf16 %v6300, %v6300
    %v6305 = vpack.c.bf16 %v6301, %v6301
    %v6306 = vld [vmem:[#allocation6] sm:$0xf]
    %v6307 = vld [vmem:[#allocation6 + $0x4] sm:$0xf]
    %v6308 = vld [vmem:[#allocation6 + $0x8] sm:$0xf]
    %v6309 = vld [vmem:[#allocation6 + $0xc] sm:$0xf]
    %v6310 = vld [vmem:[#allocation6 + $0x10] sm:$0xf]
    %v6311 = vld [vmem:[#allocation6 + $0x14] sm:$0xf]
    %v6312 = vld [vmem:[#allocation6 + $0x18] sm:$0xf]
    %v6313 = vld [vmem:[#allocation6 + $0x1c] sm:$0xf]
    %v6314 = vld [vmem:[#allocation6 + $0x20] sm:$0xf]
    %v6315 = vld [vmem:[#allocation6 + $0x24] sm:$0xf]
    %v6316 = vld [vmem:[#allocation6 + $0x28] sm:$0xf]
    %v6317 = vld [vmem:[#allocation6 + $0x2c] sm:$0xf]
    %v6318 = vld [vmem:[#allocation6 + $0x30] sm:$0xf]
    %v6319 = vld [vmem:[#allocation6 + $0x34] sm:$0xf]
    %v6320 = vld [vmem:[#allocation6 + $0x38] sm:$0xf]
    %v6321 = vld [vmem:[#allocation6 + $0x3c] sm:$0xf]
    %v6322 = vld [vmem:[#allocation6 + $0x40] sm:$0xf]
    %v6323 = vld [vmem:[#allocation6 + $0x44] sm:$0xf]
    %v6324 = vld [vmem:[#allocation6 + $0x48] sm:$0xf]
    %v6325 = vld [vmem:[#allocation6 + $0x4c] sm:$0xf]
    %v6326 = vld [vmem:[#allocation6 + $0x50] sm:$0xf]
    %v6327 = vld [vmem:[#allocation6 + $0x54] sm:$0xf]
    %v6328 = vld [vmem:[#allocation6 + $0x58] sm:$0xf]
    %v6329 = vld [vmem:[#allocation6 + $0x5c] sm:$0xf]
    %v6330 = vld [vmem:[#allocation6 + $0x60] sm:$0xf]
    %v6331 = vld [vmem:[#allocation6 + $0x64] sm:$0xf]
    %v6332 = vld [vmem:[#allocation6 + $0x68] sm:$0xf]
    %v6333 = vld [vmem:[#allocation6 + $0x6c] sm:$0xf]
    %v6334 = vld [vmem:[#allocation6 + $0x70] sm:$0xf]
    %v6335 = vld [vmem:[#allocation6 + $0x74] sm:$0xf]
    %v6336 = vld [vmem:[#allocation6 + $0x78] sm:$0xf]
    %v6337 = vld [vmem:[#allocation6 + $0x7c] sm:$0xf]
    %v6338 = vld [vmem:[#allocation6 + $0x80] sm:$0xf]
    %v6339 = vld [vmem:[#allocation6 + $0x84] sm:$0xf]
    %v6340 = vld [vmem:[#allocation6 + $0x88] sm:$0xf]
    %v6341 = vld [vmem:[#allocation6 + $0x8c] sm:$0xf]
    %v6342 = vld [vmem:[#allocation6 + $0x90] sm:$0xf]
    %v6343 = vld [vmem:[#allocation6 + $0x94] sm:$0xf]
    %v6344 = vld [vmem:[#allocation6 + $0x98] sm:$0xf]
    %v6345 = vld [vmem:[#allocation6 + $0x9c] sm:$0xf]
    %v6346 = vld [vmem:[#allocation6 + $0xa0] sm:$0xf]
    %v6347 = vld [vmem:[#allocation6 + $0xa4] sm:$0xf]
    %v6348 = vld [vmem:[#allocation6 + $0xa8] sm:$0xf]
    %v6349 = vld [vmem:[#allocation6 + $0xac] sm:$0xf]
    %v6350 = vld [vmem:[#allocation6 + $0xb0] sm:$0xf]
    %v6351 = vld [vmem:[#allocation6 + $0xb4] sm:$0xf]
    %v6352 = vld [vmem:[#allocation6 + $0xb8] sm:$0xf]
    %v6353 = vld [vmem:[#allocation6 + $0xbc] sm:$0xf]
    %v6354 = vld [vmem:[#allocation6 + $0xc0] sm:$0xf]
    %v6355 = vld [vmem:[#allocation6 + $0xc4] sm:$0xf]
    %v6356 = vld [vmem:[#allocation6 + $0xc8] sm:$0xf]
    %v6357 = vld [vmem:[#allocation6 + $0xcc] sm:$0xf]
    %v6358 = vld [vmem:[#allocation6 + $0xd0] sm:$0xf]
    %v6359 = vld [vmem:[#allocation6 + $0xd4] sm:$0xf]
    %v6360 = vld [vmem:[#allocation6 + $0xd8] sm:$0xf]
    %v6361 = vld [vmem:[#allocation6 + $0xdc] sm:$0xf]
    %v6362 = vld [vmem:[#allocation6 + $0xe0] sm:$0xf]
    %v6363 = vld [vmem:[#allocation6 + $0xe4] sm:$0xf]
    %v6364 = vld [vmem:[#allocation6 + $0xe8] sm:$0xf]
    %v6365 = vld [vmem:[#allocation6 + $0xec] sm:$0xf]
    %v6366 = vld [vmem:[#allocation6 + $0xf0] sm:$0xf]
    %v6367 = vld [vmem:[#allocation6 + $0xf4] sm:$0xf]
    %v6368 = vld [vmem:[#allocation6 + $0xf8] sm:$0xf]
    %v6369 = vld [vmem:[#allocation6 + $0xfc] sm:$0xf]
    %v6370 = vld [vmem:[#allocation7] sm:$0x1]
    %v6372 = vperm.slane %v6370, 0
    %v6438 = vunpack.c.l.b16 %v6306
    %v6439 = vunpack.c.l.b16 %v6307
    %v6440 = vunpack.c.l.b16 %v6308
    %v6441 = vunpack.c.l.b16 %v6309
    %v6442 = vunpack.c.l.b16 %v6310
    %v6443 = vunpack.c.l.b16 %v6311
    %v6444 = vunpack.c.l.b16 %v6312
    %v6445 = vunpack.c.l.b16 %v6313
    %v6446 = vunpack.c.l.b16 %v6314
    %v6447 = vunpack.c.l.b16 %v6315
    %v6448 = vunpack.c.l.b16 %v6316
    %v6449 = vunpack.c.l.b16 %v6317
    %v6450 = vunpack.c.l.b16 %v6318
    %v6451 = vunpack.c.l.b16 %v6319
    %v6452 = vunpack.c.l.b16 %v6320
    %v6453 = vunpack.c.l.b16 %v6321
    %v6454 = vunpack.c.l.b16 %v6322
    %v6455 = vunpack.c.l.b16 %v6323
    %v6456 = vunpack.c.l.b16 %v6324
    %v6457 = vunpack.c.l.b16 %v6325
    %v6458 = vunpack.c.l.b16 %v6326
    %v6459 = vunpack.c.l.b16 %v6327
    %v6460 = vunpack.c.l.b16 %v6328
    %v6461 = vunpack.c.l.b16 %v6329
    %v6462 = vunpack.c.l.b16 %v6330
    %v6463 = vunpack.c.l.b16 %v6331
    %v6464 = vunpack.c.l.b16 %v6332
    %v6465 = vunpack.c.l.b16 %v6333
    %v6466 = vunpack.c.l.b16 %v6334
    %v6467 = vunpack.c.l.b16 %v6335
    %v6468 = vunpack.c.l.b16 %v6336
    %v6469 = vunpack.c.l.b16 %v6337
    %v6470 = vunpack.c.l.b16 %v6338
    %v6471 = vunpack.c.l.b16 %v6339
    %v6472 = vunpack.c.l.b16 %v6340
    %v6473 = vunpack.c.l.b16 %v6341
    %v6474 = vunpack.c.l.b16 %v6342
    %v6475 = vunpack.c.l.b16 %v6343
    %v6476 = vunpack.c.l.b16 %v6344
    %v6477 = vunpack.c.l.b16 %v6345
    %v6478 = vunpack.c.l.b16 %v6346
    %v6479 = vunpack.c.l.b16 %v6347
    %v6480 = vunpack.c.l.b16 %v6348
    %v6481 = vunpack.c.l.b16 %v6349
    %v6482 = vunpack.c.l.b16 %v6350
    %v6483 = vunpack.c.l.b16 %v6351
    %v6484 = vunpack.c.l.b16 %v6352
    %v6485 = vunpack.c.l.b16 %v6353
    %v6486 = vunpack.c.l.b16 %v6354
    %v6487 = vunpack.c.l.b16 %v6355
    %v6488 = vunpack.c.l.b16 %v6356
    %v6489 = vunpack.c.l.b16 %v6357
    %v6490 = vunpack.c.l.b16 %v6358
    %v6491 = vunpack.c.l.b16 %v6359
    %v6492 = vunpack.c.l.b16 %v6360
    %v6493 = vunpack.c.l.b16 %v6361
    %v6494 = vunpack.c.l.b16 %v6362
    %v6495 = vunpack.c.l.b16 %v6363
    %v6496 = vunpack.c.l.b16 %v6364
    %v6497 = vunpack.c.l.b16 %v6365
    %v6498 = vunpack.c.l.b16 %v6366
    %v6499 = vunpack.c.l.b16 %v6367
    %v6500 = vunpack.c.l.b16 %v6368
    %v6501 = vunpack.c.l.b16 %v6369
    %v6502 = vpack.c.b16 %v6439, %v6438
    %v6503 = vpack.c.b16 %v6441, %v6440
    %v6504 = vpack.c.b16 %v6443, %v6442
    %v6505 = vpack.c.b16 %v6445, %v6444
    %v6506 = vpack.c.b16 %v6447, %v6446
    %v6507 = vpack.c.b16 %v6449, %v6448
    %v6508 = vpack.c.b16 %v6451, %v6450
    %v6509 = vpack.c.b16 %v6453, %v6452
    %v6510 = vpack.c.b16 %v6455, %v6454
    %v6511 = vpack.c.b16 %v6457, %v6456
    %v6512 = vpack.c.b16 %v6459, %v6458
    %v6513 = vpack.c.b16 %v6461, %v6460
    %v6514 = vpack.c.b16 %v6463, %v6462
    %v6515 = vpack.c.b16 %v6465, %v6464
    %v6516 = vpack.c.b16 %v6467, %v6466
    %v6517 = vpack.c.b16 %v6469, %v6468
    %v6518 = vpack.c.b16 %v6471, %v6470
    %v6519 = vpack.c.b16 %v6473, %v6472
    %v6520 = vpack.c.b16 %v6475, %v6474
    %v6521 = vpack.c.b16 %v6477, %v6476
    %v6522 = vpack.c.b16 %v6479, %v6478
    %v6523 = vpack.c.b16 %v6481, %v6480
    %v6524 = vpack.c.b16 %v6483, %v6482
    %v6525 = vpack.c.b16 %v6485, %v6484
    %v6526 = vpack.c.b16 %v6487, %v6486
    %v6527 = vpack.c.b16 %v6489, %v6488
    %v6528 = vpack.c.b16 %v6491, %v6490
    %v6529 = vpack.c.b16 %v6493, %v6492
    %v6530 = vpack.c.b16 %v6495, %v6494
    %v6531 = vpack.c.b16 %v6497, %v6496
    %v6532 = vpack.c.b16 %v6499, %v6498
    %v6533 = vpack.c.b16 %v6501, %v6500
    %6566 = vmatpush.bf16.msra.mxu0 %v6509
    %6567 = vmatpush.bf16.msra.mxu0 %v6508
    %6568 = vmatpush.bf16.msra.mxu0 %v6507
    %6569 = vmatpush.bf16.msra.mxu0 %v6506
    %6570 = vmatpush.bf16.msra.mxu0 %v6505
    %6571 = vmatpush.bf16.msra.mxu0 %v6504
    %6572 = vmatpush.bf16.msra.mxu0 %v6503
    %6573 = vmatpush.bf16.msra.mxu0 %v6502
    %6574 = vmatmul.bf16.gmra.mxu0 %v6302
    %v6575 = vpop.f32.mrf.mxu0
    %v6576 = vadd.f32 %v6372, %v6575
    %v6577 = vpop.f32.mrf.mxu0
    %6578 = vdwg.mxu0
    %6579 = vmatpush.bf16.msra.mxu0 %v6517
    %6580 = vmatpush.bf16.msra.mxu0 %v6516
    %6581 = vmatpush.bf16.msra.mxu0 %v6515
    %6582 = vmatpush.bf16.msra.mxu0 %v6514
    %6583 = vmatpush.bf16.msra.mxu0 %v6513
    %6584 = vmatpush.bf16.msra.mxu0 %v6512
    %6585 = vmatpush.bf16.msra.mxu0 %v6511
    %6586 = vmatpush.bf16.msra.mxu0 %v6510
    %6587 = vmatmul.bf16.gmra.mxu0 %v6303
    %v6588 = vpop.f32.mrf.mxu0
    %v6589 = vadd.f32 %v6576, %v6588
    %v6590 = vpop.f32.mrf.mxu0
    %6591 = vdwg.mxu0
    %6592 = vmatpush.bf16.msra.mxu0 %v6525
    %6593 = vmatpush.bf16.msra.mxu0 %v6524
    %6594 = vmatpush.bf16.msra.mxu0 %v6523
    %6595 = vmatpush.bf16.msra.mxu0 %v6522
    %6596 = vmatpush.bf16.msra.mxu0 %v6521
    %6597 = vmatpush.bf16.msra.mxu0 %v6520
    %6598 = vmatpush.bf16.msra.mxu0 %v6519
    %6599 = vmatpush.bf16.msra.mxu0 %v6518
    %6600 = vmatmul.bf16.gmra.mxu0 %v6304
    %v6601 = vpop.f32.mrf.mxu0
    %v6602 = vadd.f32 %v6589, %v6601
    %v6603 = vpop.f32.mrf.mxu0
    %6604 = vdwg.mxu0
    %6605 = vmatpush.bf16.msra.mxu0 %v6533
    %6606 = vmatpush.bf16.msra.mxu0 %v6532
    %6607 = vmatpush.bf16.msra.mxu0 %v6531
    %6608 = vmatpush.bf16.msra.mxu0 %v6530
    %6609 = vmatpush.bf16.msra.mxu0 %v6529
    %6610 = vmatpush.bf16.msra.mxu0 %v6528
    %6611 = vmatpush.bf16.msra.mxu0 %v6527
    %6612 = vmatpush.bf16.msra.mxu0 %v6526
    %6613 = vmatmul.bf16.gmra.mxu0 %v6305
    %v6614 = vpop.f32.mrf.mxu0
    %v6615 = vadd.f32 %v6602, %v6614
    %v6616 = vpop.f32.mrf.mxu0
    %6617 = vdwg.mxu0
    %v6618 = vmax.f32 %v6615, 0.0
    %v6619 = vlaneseq
    %v6620 = vand.u32 %v6619, 127
    %vm6621 = vcmp.lt.s32.totalorder %v6620, 10
    %v6622 = vsel %vm6621, %v6618, -inf
    %6623 = vmax.xlane.f32.xlu0 %v6622
    %v6624 = vpop.xlane.xlu0 %6623
    %v6625 = vsub.f32 %v6622, %v6624
    %v6626 = vmul.f32 %v6625, 1.442695
    %v6627 = vpow.pop %v6626
    %6628 = vadd.xlane.f32.xlu0 %v6627
    %v6629 = vpop.xlane.xlu0 %6628
    %v6630 = vlog2.pop %v6629
    %v6631 = vmul.f32 %v6630, 0.6931472
    %v6632 = vadd.f32 %v6631, %v6624
    %v6633 = vsub.f32 %v6622, %v6632
    %v6634 = vsel %vm6621, %v6633, 0.0
    %6635 = vst [vmem:[%s5] sm:$0xff] %v6634
    // Predicated region
    $region38: #{our_cnn_forward.1} parent=1 // pred_check
      _
    $region39: #{our_cnn_forward.1} parent=1 // pred_check_branch
      %6637 = sbr.rel (0) target = $region41
    $region40: #{our_cnn_forward.1} parent=1 // pred_region
      _
    $region41: #{our_cnn_forward.1} parent=1 // pred_fallthru
      _
    // Predicated region
    $region42: #{our_cnn_forward.1} parent=1 // pred_check
      _
    $region43: #{our_cnn_forward.1} parent=1 // pred_check_branch
      %6639 = sbr.rel (0) target = $region45
    $region44: #{our_cnn_forward.1} parent=1 // pred_region
      _
    $region45: #{our_cnn_forward.1} parent=1 // pred_fallthru
      _
    %6640 = vsyncpa [#allocation3], 1
    %6641 = vsyncpa [#allocation5], 1
    %6642 = vsyncpa [#allocation8], 1

</llo_original>
